<compile_context>
chip_gen: v7x
topology: tpu7x:2x2x1
jax: 0.10.0
libtpu: 0.0.40
codegen_flags: <defaults>
</compile_context>

<pallas_src>
import math

import jax
import jax.numpy as jnp
from jax import lax
from jax.experimental import pallas as pl

# ----------------------------- model config ----------------------------------
D = 32            # hid_dim
H = 4             # n_heads
DH = D // H       # head_dim
FF = 64           # pf_dim (== 2*D, exploited by the slab packing)
DKV = 32          # kdim == vdim (enc_src feature dim); == D required by the blob packing
B = 2             # batch
ST = 8            # target sequence length
SS = 8            # source sequence length
LN_EPS = 1e-5
NEG_SELF = -1e10  # masked_fill value used by MultiHeadAttentionLayer
NEG_PAD = -1e9    # finite stand-in for the -inf key_padding_mask bias
SLAB_W = D        # lane width of the packed parameter slab
OUT_W = 128       # lane width of the packed (lane-dense) output slab

assert FF == 2 * D and DKV == D and DH * H == D
assert ST == 8 and SS == 8 and D >= ST and D >= SS   # pre-broadcast/packing assumptions

# --------------------- packed parameter slab layout (rows, width D) ----------
_SLAB_LAYOUT = [
    ("wq_s", D), ("wk_s", D), ("m_s", H * D),        # self-attn : Q, K, per-head Wv_h@Wo_h
    ("wq_c", D), ("wk_c", DKV), ("m_c", H * DKV),    # cross-attn: Q, K, per-head Wv_h@Wo_h
    ("w1a", D), ("w1b", D), ("w2a", D), ("w2b", D),  # FFN halves (FF == 2*D)
    # 8-row pre-broadcast bias / LayerNorm vectors (aligned, zero-cost [8,32] loads)
    ("bq_s", 8), ("bk_s", 8), ("batt_s", 8),
    ("bq_c", 8), ("bk_c", 8), ("batt_c", 8),
    ("b1a", 8), ("b1b", 8), ("b2", 8),
    ("lng0", 8), ("lnb0", 8), ("lng1", 8), ("lnb1", 8), ("lng2", 8), ("lnb2", 8),
]
SLAB_OFF = {}
SLAB_ROWS = 0
for _name, _rows in _SLAB_LAYOUT:
    SLAB_OFF[_name] = SLAB_ROWS
    SLAB_ROWS += _rows
SLAB_NROWS = dict(_SLAB_LAYOUT)


# -------------------- shared math (in-kernel and reference) ------------------
def _layernorm(x, g, b):
    mu = jnp.mean(x, axis=-1, keepdims=True)
    var = jnp.mean((x - mu) * (x - mu), axis=-1, keepdims=True)
    return (x - mu) * lax.rsqrt(var + LN_EPS) * g + b


def _attention(x_q, x_kv, bias, wq, bq, wk, bk, m_heads, b_att, want_probs):
    """Fused multi-head attention used inside the kernel.
    x_q:[Sq,D], x_kv:[Sk,D]; bias:[Sq,Sk] additive mask; wq/bq pre-scaled by 1/sqrt(DH);
    m_heads: list of per-head (Wv_h @ Wo_h) [D,D]; b_att:[Sq,D] = bv@Wo + bo pre-broadcast.
    Returns (out [Sq,D], head-summed probabilities [Sq,Sk] or None)."""
    q = jnp.dot(x_q, wq, preferred_element_type=jnp.float32) + bq           # [Sq, D]
    kT = (jnp.dot(x_kv, wk, preferred_element_type=jnp.float32) + bk).T     # [D, Sk]
    acc = b_att
    p_sum = None
    for h in range(H):
        q_h = q[:, h * DH:(h + 1) * DH]                                     # 8-lane slice
        kT_h = kT[h * DH:(h + 1) * DH, :]                                   # free sublane slice
        s = jnp.dot(q_h, kT_h, preferred_element_type=jnp.float32) + bias   # [Sq, Sk]
        m = jnp.max(s, axis=-1, keepdims=True)
        e = jnp.exp(s - m)
        p = e * pl.reciprocal(jnp.sum(e, axis=-1, keepdims=True), approx=True)
        g_h = jnp.dot(x_kv, m_heads[h], preferred_element_type=jnp.float32)  # [Sk, D]
        acc = acc + jnp.dot(p, g_h, preferred_element_type=jnp.float32)
        if want_probs:
            p_sum = p if p_sum is None else p_sum + p
    return acc, p_sum


# ----------------------------- fused kernel ----------------------------------
def decoder_layer_kernel(blob_ref, slab_ref, out_ref):
    """blob_ref: [B, 4*ST, D] rows = [ trg | enc_src | self-attn bias | cross-attn bias ]
       slab_ref: [SLAB_ROWS, D] packed/folded parameters (see pack_params)
       out_ref : [ST, 128] lanes = [ out(b=0) | out(b=1) | attn(b=0) | attn(b=1) | pad ]"""

    def wt(name):
        o = SLAB_OFF[name]
        return slab_ref[o:o + SLAB_NROWS[name], :]

    def m_list(name):
        o = SLAB_OFF[name]
        step = SLAB_NROWS[name] // H
        return [slab_ref[o + h * step:o + (h + 1) * step, :] for h in range(H)]

    # hoist all parameter loads (slab lives in VMEM; static 8-aligned slices)
    wq_s, bq_s, wk_s, bk_s, batt_s = wt("wq_s"), wt("bq_s"), wt("wk_s"), wt("bk_s"), wt("batt_s")
    wq_c, bq_c, wk_c, bk_c, batt_c = wt("wq_c"), wt("bq_c"), wt("wk_c"), wt("bk_c"), wt("batt_c")
    m_s, m_c = m_list("m_s"), m_list("m_c")
    w1a, w1b, w2a, w2b = wt("w1a"), wt("w1b"), wt("w2a"), wt("w2b")
    b1a, b1b, b2 = wt("b1a"), wt("b1b"), wt("b2")
    lng = [wt("lng0"), wt("lng1"), wt("lng2")]
    lnb = [wt("lnb0"), wt("lnb1"), wt("lnb2")]

    r_enc = ST
    r_sb = ST + SS
    r_cb = ST + SS + ST

    outs, attns = [], []
    for b in range(B):                               # statically unrolled (grid collapsed)
        blk = blob_ref[b]                            # [4*ST, D]
        x0 = blk[0:ST, :]                            # [ST, D]   target activations
        enc = blk[r_enc:r_enc + SS, :]               # [SS, DKV] encoder activations
        sbias = blk[r_sb:r_sb + ST, 0:ST]            # [ST, ST]  additive (-1e10 on masked)
        cbias = blk[r_cb:r_cb + ST, 0:SS]            # [ST, SS]  additive (-1e9 on padded keys)

        # ---- self attention + residual + LN1 --------------------------------
        sa, _ = _attention(x0, x0, sbias, wq_s, bq_s, wk_s, bk_s, m_s, batt_s, False)
        x1 = _layernorm(x0 + sa, lng[0], lnb[0])

        # ---- cross attention (key_padding_mask) + residual + LN2 ------------
        ca, p_sum = _attention(x1, enc, cbias, wq_c, bq_c, wk_c, bk_c, m_c, batt_c, True)
        x2 = _layernorm(x1 + ca, lng[1], lnb[1])

        # ---- positionwise feed-forward + residual + LN3 ----------------------
        ha = jnp.maximum(jnp.dot(x2, w1a, preferred_element_type=jnp.float32) + b1a, 0.0)
        hb = jnp.maximum(jnp.dot(x2, w1b, preferred_element_type=jnp.float32) + b1b, 0.0)
        ff = (jnp.dot(ha, w2a, preferred_element_type=jnp.float32)
              + jnp.dot(hb, w2b, preferred_element_type=jnp.float32) + b2)
        x3 = _layernorm(x2 + ff, lng[2], lnb[2])

        outs.append(x3)                              # [ST, D]
        attns.append(p_sum * (1.0 / H))              # [ST, SS] head-averaged

    # single lane-dense full-width store -> one output DMA
    pad = jnp.zeros((ST, OUT_W - B * D - B * SS), jnp.float32)
    out_ref[...] = jnp.concatenate(outs + attns + [pad], axis=1).astype(out_ref.dtype)


# --------------------- host-side parameter folding / packing -----------------
def pack_params(p):
    """Fold + pack all DecoderLayer parameters into one [SLAB_ROWS, D] f32 slab."""
    scale = 1.0 / math.sqrt(DH)

    def per_head_vo(wv, wo):
        # M_h = Wv[:, head h] @ Wo[head h, :]  stacked along rows -> [H*in_dim, D]
        return jnp.concatenate(
            [wv[:, h * DH:(h + 1) * DH] @ wo[h * DH:(h + 1) * DH, :] for h in range(H)],
            axis=0)

    def bro(v):  # [1, n] -> [8, n] pre-broadcast bias rows (free [8,n] loads in-kernel)
        return jnp.broadcast_to(jnp.reshape(v, (1, -1)), (8, v.size))

    blocks = {
        "wq_s": p["w_q_s"] * scale, "wk_s": p["w_k_s"],
        "m_s": per_head_vo(p["w_v_s"], p["w_o_s"]),
        "wq_c": p["w_q_c"] * scale, "wk_c": p["w_k_c"],
        "m_c": per_head_vo(p["w_v_c"], p["w_o_c"]),
        "w1a": p["w_ff1"][:, :D], "w1b": p["w_ff1"][:, D:],
        "w2a": p["w_ff2"][:D, :], "w2b": p["w_ff2"][D:, :],
        "bq_s": bro(p["b_q_s"] * scale), "bk_s": bro(p["b_k_s"]),
        "batt_s": bro(p["b_v_s"] @ p["w_o_s"] + p["b_o_s"]),
        "bq_c": bro(p["b_q_c"] * scale), "bk_c": bro(p["b_k_c"]),
        "batt_c": bro(p["b_v_c"] @ p["w_o_c"] + p["b_o_c"]),
        "b1a": bro(p["b_ff1"][:, :D]), "b1b": bro(p["b_ff1"][:, D:]),
        "b2": bro(p["b_ff2"]),
        "lng0": bro(p["ln_g"][0:1]), "lnb0": bro(p["ln_b"][0:1]),
        "lng1": bro(p["ln_g"][1:2]), "lnb1": bro(p["ln_b"][1:2]),
        "lng2": bro(p["ln_g"][2:3]), "lnb2": bro(p["ln_b"][2:3]),
    }
    rows = []
    for name, n in _SLAB_LAYOUT:
        blk = blocks[name].astype(jnp.float32)
        assert blk.shape == (n, SLAB_W), (name, blk.shape)
        rows.append(blk)
    return jnp.concatenate(rows, axis=0)             # [SLAB_ROWS, D]


# ----------------------------- wrapper ----------------------------------------
def decoder_layer_forward(params, trg, enc_src, trg_mask, src_mask):
    """trg: [B,St,D]; enc_src: [B,Ss,DKV];
    trg_mask broadcastable to [B,1,St,St] (nonzero => attend, PyTorch mask==0 -> -1e10);
    src_mask broadcastable to [B,1,1,Ss] (nonzero/True => padded source key, ignored)."""
    assert trg.shape == (B, ST, D) and enc_src.shape == (B, SS, DKV)

    tmask = trg_mask.reshape(B, ST, ST).astype(jnp.float32)
    kpad = src_mask.reshape(B, SS).astype(jnp.float32)
    self_bias = jnp.where(tmask > 0.0, 0.0, NEG_SELF).astype(jnp.float32)          # [B,ST,ST]
    cross_bias = jnp.broadcast_to(
        jnp.where(kpad > 0.0, NEG_PAD, 0.0)[:, None, :].astype(jnp.float32),
        (B, ST, SS))                                                               # [B,ST,SS]

    # one activation/mask blob: rows = [trg | enc_src | self bias | cross bias]
    blob = jnp.concatenate(
        [trg.astype(jnp.float32),
         enc_src.astype(jnp.float32),
         jnp.pad(self_bias, ((0, 0), (0, 0), (0, D - ST))),
         jnp.pad(cross_bias, ((0, 0), (0, 0), (0, D - SS)))],
        axis=1)                                                                    # [B, 4*ST, D]
    slab = pack_params(params)                                                     # [SLAB_ROWS, D]

    packed = pl.pallas_call(
        decoder_layer_kernel,
        out_shape=jax.ShapeDtypeStruct((ST, OUT_W), jnp.float32),
    )(blob, slab)                                                                  # [ST, 128]

    out = jnp.stack([packed[:, i * D:(i + 1) * D] for i in range(B)], axis=0)      # [B,ST,D]
    attn = jnp.stack([packed[:, B * D + i * SS:B * D + (i + 1) * SS]
                      for i in range(B)], axis=0)                                  # [B,ST,SS]
    return out, attn


# ----------------------------- pure-JAX reference ----------------------------
def _softmax(s):
    m = jnp.max(s, axis=-1, keepdims=True)
    e = jnp.exp(s - m)
    return e / jnp.sum(e, axis=-1, keepdims=True)


def _ref_mha(x_q, x_kv, wq, bq, wk, bk, wv, bv, wo, bo, bias):
    scale = 1.0 / math.sqrt(DH)
    q = x_q @ wq + bq
    k = x_kv @ wk + bk
    v = x_kv @ wv + bv
    heads, probs = [], []
    for h in range(H):
        sl = slice(h * DH, (h + 1) * DH)
        s = (q[:, sl] @ k[:, sl].T) * scale + bias
        p = _softmax(s)
        heads.append(p @ v[:, sl])
        probs.append(p)
    out = jnp.concatenate(heads, axis=-1) @ wo + bo
    return out, sum(probs) / H


def decoder_layer_reference(p, trg, enc_src, trg_mask, src_mask):
    tmask = trg_mask.reshape(B, ST, ST).astype(jnp.float32)
    kpad = src_mask.reshape(B, SS).astype(jnp.float32)
    outs, attns = [], []
    for b in range(B):
        x0, enc = trg[b], enc_src[b]
        sbias = jnp.where(tmask[b] > 0.0, 0.0, NEG_SELF)
        cbias = jnp.broadcast_to(jnp.where(kpad[b][None, :] > 0.0, NEG_PAD, 0.0), (ST, SS))

        sa, _ = _ref_mha(x0, x0, p["w_q_s"], p["b_q_s"], p["w_k_s"], p["b_k_s"],
                         p["w_v_s"], p["b_v_s"], p["w_o_s"], p["b_o_s"], sbias)
        x1 = _layernorm(x0 + sa, p["ln_g"][0:1], p["ln_b"][0:1])

        ca, p_avg = _ref_mha(x1, enc, p["w_q_c"], p["b_q_c"], p["w_k_c"], p["b_k_c"],
                             p["w_v_c"], p["b_v_c"], p["w_o_c"], p["b_o_c"], cbias)
        x2 = _layernorm(x1 + ca, p["ln_g"][1:2], p["ln_b"][1:2])

        hid = jnp.maximum(x2 @ p["w_ff1"] + p["b_ff1"], 0.0)
        ff = hid @ p["w_ff2"] + p["b_ff2"]
        x3 = _layernorm(x2 + ff, p["ln_g"][2:3], p["ln_b"][2:3])

        outs.append(x3)
        attns.append(p_avg)
    return jnp.stack(outs), jnp.stack(attns)


# ----------------------------- deterministic params --------------------------
def init_params(key):
    ks = jax.random.split(key, 20)
    dense = lambda k, i, o: jax.random.normal(k, (i, o), jnp.float32) / math.sqrt(i)
    bias = lambda k, n: 0.02 * jax.random.normal(k, (1, n), jnp.float32)
    return {
        # self attention (MultiHeadAttentionLayer: fc_q / fc_k / fc_v / fc_o)
        "w_q_s": dense(ks[0], D, D), "b_q_s": bias(ks[1], D),
        "w_k_s": dense(ks[2], D, D), "b_k_s": bias(ks[3], D),
        "w_v_s": dense(ks[4], D, D), "b_v_s": bias(ks[5], D),
        "w_o_s": dense(ks[6], D, D), "b_o_s": bias(ks[7], D),
        # cross attention (nn.MultiheadAttention, kdim=vdim=DKV)
        # TODO(synk): freshly initialized in "x @ W" orientation; loading real PyTorch
        # in_proj_weight/out_proj weights would require transposing/splitting accordingly.
        "w_q_c": dense(ks[8], D, D), "b_q_c": bias(ks[9], D),
        "w_k_c": dense(ks[10], DKV, D), "b_k_c": bias(ks[11], D),
        "w_v_c": dense(ks[12], DKV, D), "b_v_c": bias(ks[13], D),
        "w_o_c": dense(ks[14], D, D), "b_o_c": bias(ks[15], D),
        # positionwise feed-forward
        "w_ff1": dense(ks[16], D, FF), "b_ff1": bias(ks[17], FF),
        "w_ff2": dense(ks[18], FF, D), "b_ff2": bias(ks[19], D),
        # the three LayerNorms [self_attn, enc_attn, ff]
        "ln_g": jnp.ones((3, D), jnp.float32),
        "ln_b": jnp.zeros((3, D), jnp.float32),
    }


# ----------------------------- main -------------------------------------------
if __name__ == "__main__":
    key = jax.random.PRNGKey(0)
    k_p, k_trg, k_enc = jax.random.split(key, 3)

    params = init_params(k_p)
    trg = jax.random.normal(k_trg, (B, ST, D), jnp.float32)
    enc_src = jax.random.normal(k_enc, (B, SS, DKV), jnp.float32)

    # causal target mask: nonzero => attend (matches masked_fill(mask == 0, -1e10))
    trg_mask = jnp.broadcast_to(jnp.tril(jnp.ones((ST, ST), jnp.float32)), (B, 1, ST, ST))
    # key padding mask: True => padded source position (ignored by cross attention)
    src_pad = jnp.zeros((B, SS), bool).at[1, SS - 2:].set(True)
    src_mask = src_pad[:, None, None, :]                       # [B,1,1,Ss]

    fwd = jax.jit(decoder_layer_forward)
    out, attention = fwd(params, trg, enc_src, trg_mask, src_mask)
    jax.block_until_ready((out, attention))

    ref_out, ref_attn = decoder_layer_reference(params, trg, enc_src, trg_mask, src_mask)

    assert out.shape == (B, ST, D) and attention.shape == (B, ST, SS)
    assert bool(jnp.all(jnp.isfinite(out))) and bool(jnp.all(jnp.isfinite(attention)))
    assert bool(jnp.allclose(out, ref_out, rtol=5e-2, atol=5e-2)), \
        float(jnp.max(jnp.abs(out - ref_out)))
    assert bool(jnp.allclose(attention, ref_attn, rtol=5e-2, atol=5e-2)), \
        float(jnp.max(jnp.abs(attention - ref_attn)))
    # head-averaged attention rows are (approximately) proper distributions over keys
    assert bool(jnp.allclose(jnp.sum(attention, axis=-1), 1.0, atol=2e-2))
    # padded keys of batch 1 receive (numerically) zero attention
    assert bool(jnp.max(attention[1, :, SS - 2:]) < 1e-6)
    print("KERNEL_OK")
</pallas_src>

<mosaic_0001>
module attributes {stable_mosaic.version = 11 : i64} {
  func.func @decoder_layer_kernel(%arg0: memref<2x32x32xf32, #tpu.memory_space<vmem>>, %arg1: memref<632x32xf32, #tpu.memory_space<vmem>>, %arg2: memref<8x128xf32, #tpu.memory_space<vmem>>) attributes {dimension_semantics = [], scalar_prefetch = 0 : i64, scratch_operands = 0 : i64, tpu.core_type = #tpu.core_type<tc>} {
    %c0 = arith.constant 0 : index
    %c0_0 = arith.constant 0 : index
    %0 = vector.load %arg1[%c0, %c0_0] : memref<632x32xf32, #tpu.memory_space<vmem>>, vector<32x32xf32>
    %c512 = arith.constant 512 : index
    %c0_1 = arith.constant 0 : index
    %1 = vector.load %arg1[%c512, %c0_1] : memref<632x32xf32, #tpu.memory_space<vmem>>, vector<8x32xf32>
    %c32 = arith.constant 32 : index
    %c0_2 = arith.constant 0 : index
    %2 = vector.load %arg1[%c32, %c0_2] : memref<632x32xf32, #tpu.memory_space<vmem>>, vector<32x32xf32>
    %c520 = arith.constant 520 : index
    %c0_3 = arith.constant 0 : index
    %3 = vector.load %arg1[%c520, %c0_3] : memref<632x32xf32, #tpu.memory_space<vmem>>, vector<8x32xf32>
    %c528 = arith.constant 528 : index
    %c0_4 = arith.constant 0 : index
    %4 = vector.load %arg1[%c528, %c0_4] : memref<632x32xf32, #tpu.memory_space<vmem>>, vector<8x32xf32>
    %c192 = arith.constant 192 : index
    %c0_5 = arith.constant 0 : index
    %5 = vector.load %arg1[%c192, %c0_5] : memref<632x32xf32, #tpu.memory_space<vmem>>, vector<32x32xf32>
    %c536 = arith.constant 536 : index
    %c0_6 = arith.constant 0 : index
    %6 = vector.load %arg1[%c536, %c0_6] : memref<632x32xf32, #tpu.memory_space<vmem>>, vector<8x32xf32>
    %c224 = arith.constant 224 : index
    %c0_7 = arith.constant 0 : index
    %7 = vector.load %arg1[%c224, %c0_7] : memref<632x32xf32, #tpu.memory_space<vmem>>, vector<32x32xf32>
    %c544 = arith.constant 544 : index
    %c0_8 = arith.constant 0 : index
    %8 = vector.load %arg1[%c544, %c0_8] : memref<632x32xf32, #tpu.memory_space<vmem>>, vector<8x32xf32>
    %c552 = arith.constant 552 : index
    %c0_9 = arith.constant 0 : index
    %9 = vector.load %arg1[%c552, %c0_9] : memref<632x32xf32, #tpu.memory_space<vmem>>, vector<8x32xf32>
    %c64 = arith.constant 64 : index
    %c0_10 = arith.constant 0 : index
    %10 = vector.load %arg1[%c64, %c0_10] : memref<632x32xf32, #tpu.memory_space<vmem>>, vector<32x32xf32>
    %c96 = arith.constant 96 : index
    %c0_11 = arith.constant 0 : index
    %11 = vector.load %arg1[%c96, %c0_11] : memref<632x32xf32, #tpu.memory_space<vmem>>, vector<32x32xf32>
    %c128 = arith.constant 128 : index
    %c0_12 = arith.constant 0 : index
    %12 = vector.load %arg1[%c128, %c0_12] : memref<632x32xf32, #tpu.memory_space<vmem>>, vector<32x32xf32>
    %c160 = arith.constant 160 : index
    %c0_13 = arith.constant 0 : index
    %13 = vector.load %arg1[%c160, %c0_13] : memref<632x32xf32, #tpu.memory_space<vmem>>, vector<32x32xf32>
    %c256 = arith.constant 256 : index
    %c0_14 = arith.constant 0 : index
    %14 = vector.load %arg1[%c256, %c0_14] : memref<632x32xf32, #tpu.memory_space<vmem>>, vector<32x32xf32>
    %c288 = arith.constant 288 : index
    %c0_15 = arith.constant 0 : index
    %15 = vector.load %arg1[%c288, %c0_15] : memref<632x32xf32, #tpu.memory_space<vmem>>, vector<32x32xf32>
    %c320 = arith.constant 320 : index
    %c0_16 = arith.constant 0 : index
    %16 = vector.load %arg1[%c320, %c0_16] : memref<632x32xf32, #tpu.memory_space<vmem>>, vector<32x32xf32>
    %c352 = arith.constant 352 : index
    %c0_17 = arith.constant 0 : index
    %17 = vector.load %arg1[%c352, %c0_17] : memref<632x32xf32, #tpu.memory_space<vmem>>, vector<32x32xf32>
    %c384 = arith.constant 384 : index
    %c0_18 = arith.constant 0 : index
    %18 = vector.load %arg1[%c384, %c0_18] : memref<632x32xf32, #tpu.memory_space<vmem>>, vector<32x32xf32>
    %c416 = arith.constant 416 : index
    %c0_19 = arith.constant 0 : index
    %19 = vector.load %arg1[%c416, %c0_19] : memref<632x32xf32, #tpu.memory_space<vmem>>, vector<32x32xf32>
    %c448 = arith.constant 448 : index
    %c0_20 = arith.constant 0 : index
    %20 = vector.load %arg1[%c448, %c0_20] : memref<632x32xf32, #tpu.memory_space<vmem>>, vector<32x32xf32>
    %c480 = arith.constant 480 : index
    %c0_21 = arith.constant 0 : index
    %21 = vector.load %arg1[%c480, %c0_21] : memref<632x32xf32, #tpu.memory_space<vmem>>, vector<32x32xf32>
    %c560 = arith.constant 560 : index
    %c0_22 = arith.constant 0 : index
    %22 = vector.load %arg1[%c560, %c0_22] : memref<632x32xf32, #tpu.memory_space<vmem>>, vector<8x32xf32>
    %c568 = arith.constant 568 : index
    %c0_23 = arith.constant 0 : index
    %23 = vector.load %arg1[%c568, %c0_23] : memref<632x32xf32, #tpu.memory_space<vmem>>, vector<8x32xf32>
    %c576 = arith.constant 576 : index
    %c0_24 = arith.constant 0 : index
    %24 = vector.load %arg1[%c576, %c0_24] : memref<632x32xf32, #tpu.memory_space<vmem>>, vector<8x32xf32>
    %c584 = arith.constant 584 : index
    %c0_25 = arith.constant 0 : index
    %25 = vector.load %arg1[%c584, %c0_25] : memref<632x32xf32, #tpu.memory_space<vmem>>, vector<8x32xf32>
    %c600 = arith.constant 600 : index
    %c0_26 = arith.constant 0 : index
    %26 = vector.load %arg1[%c600, %c0_26] : memref<632x32xf32, #tpu.memory_space<vmem>>, vector<8x32xf32>
    %c616 = arith.constant 616 : index
    %c0_27 = arith.constant 0 : index
    %27 = vector.load %arg1[%c616, %c0_27] : memref<632x32xf32, #tpu.memory_space<vmem>>, vector<8x32xf32>
    %c592 = arith.constant 592 : index
    %c0_28 = arith.constant 0 : index
    %28 = vector.load %arg1[%c592, %c0_28] : memref<632x32xf32, #tpu.memory_space<vmem>>, vector<8x32xf32>
    %c608 = arith.constant 608 : index
    %c0_29 = arith.constant 0 : index
    %29 = vector.load %arg1[%c608, %c0_29] : memref<632x32xf32, #tpu.memory_space<vmem>>, vector<8x32xf32>
    %c624 = arith.constant 624 : index
    %c0_30 = arith.constant 0 : index
    %30 = vector.load %arg1[%c624, %c0_30] : memref<632x32xf32, #tpu.memory_space<vmem>>, vector<8x32xf32>
    %c0_31 = arith.constant 0 : index
    %c0_32 = arith.constant 0 : index
    %c0_33 = arith.constant 0 : index
    %31 = vector.load %arg0[%c0_31, %c0_32, %c0_33] : memref<2x32x32xf32, #tpu.memory_space<vmem>>, vector<1x32x32xf32>
    %32 = vector.shape_cast %31 : vector<1x32x32xf32> to vector<32x32xf32>
    %33 = vector.extract_strided_slice %32 {offsets = [0, 0], sizes = [8, 32], strides = [1, 1]} : vector<32x32xf32> to vector<8x32xf32>
    %34 = vector.extract_strided_slice %32 {offsets = [8, 0], sizes = [8, 32], strides = [1, 1]} : vector<32x32xf32> to vector<8x32xf32>
    %35 = vector.extract_strided_slice %32 {offsets = [16, 0], sizes = [8, 8], strides = [1, 1]} : vector<32x32xf32> to vector<8x8xf32>
    %36 = vector.extract_strided_slice %32 {offsets = [24, 0], sizes = [8, 8], strides = [1, 1]} : vector<32x32xf32> to vector<8x8xf32>
    %cst = arith.constant dense<0.000000e+00> : vector<8x32xf32>
    %37 = tpu.matmul %33, %0, %cst {dimension_numbers = #tpu.dot_dimension_numbers<[1], [0], [0], [1], [0, 0, 1, 1], [], []>} : vector<8x32xf32>, vector<32x32xf32>, vector<8x32xf32> -> vector<8x32xf32>
    %38 = arith.addf %37, %1 : vector<8x32xf32>
    %cst_34 = arith.constant dense<0.000000e+00> : vector<8x32xf32>
    %39 = tpu.matmul %33, %2, %cst_34 {dimension_numbers = #tpu.dot_dimension_numbers<[1], [0], [0], [1], [0, 0, 1, 1], [], []>} : vector<8x32xf32>, vector<32x32xf32>, vector<8x32xf32> -> vector<8x32xf32>
    %40 = arith.addf %39, %3 : vector<8x32xf32>
    %41 = tpu.transpose %40, [1, 0] : vector<8x32xf32> -> vector<32x8xf32>
    %42 = vector.extract_strided_slice %38 {offsets = [0, 0], sizes = [8, 8], strides = [1, 1]} : vector<8x32xf32> to vector<8x8xf32>
    %43 = vector.extract_strided_slice %41 {offsets = [0, 0], sizes = [8, 8], strides = [1, 1]} : vector<32x8xf32> to vector<8x8xf32>
    %cst_35 = arith.constant dense<0.000000e+00> : vector<8x8xf32>
    %44 = tpu.matmul %42, %43, %cst_35 {dimension_numbers = #tpu.dot_dimension_numbers<[1], [0], [0], [1], [0, 0, 1, 1], [], []>} : vector<8x8xf32>, vector<8x8xf32>, vector<8x8xf32> -> vector<8x8xf32>
    %45 = arith.addf %44, %35 : vector<8x8xf32>
    %cst_36 = arith.constant dense<0xFF800000> : vector<8xf32>
    %46 = vector.multi_reduction <maximumf>, %45, %cst_36 [1] : vector<8x8xf32> to vector<8xf32>
    %47 = vector.shape_cast %46 : vector<8xf32> to vector<8x1xf32>
    %48 = vector.broadcast %47 : vector<8x1xf32> to vector<8x8xf32>
    %49 = arith.subf %45, %48 : vector<8x8xf32>
    %50 = math.exp %49 : vector<8x8xf32>
    %cst_37 = arith.constant dense<0.000000e+00> : vector<8xf32>
    %51 = vector.multi_reduction <add>, %50, %cst_37 [1] : vector<8x8xf32> to vector<8xf32>
    %52 = vector.shape_cast %51 : vector<8xf32> to vector<8x1xf32>
    %53 = tpu.reciprocal %52 {approx = true} : vector<8x1xf32> -> vector<8x1xf32>
    %54 = vector.broadcast %53 : vector<8x1xf32> to vector<8x8xf32>
    %55 = arith.mulf %50, %54 : vector<8x8xf32>
    %cst_38 = arith.constant dense<0.000000e+00> : vector<8x32xf32>
    %56 = tpu.matmul %33, %10, %cst_38 {dimension_numbers = #tpu.dot_dimension_numbers<[1], [0], [0], [1], [0, 0, 1, 1], [], []>} : vector<8x32xf32>, vector<32x32xf32>, vector<8x32xf32> -> vector<8x32xf32>
    %cst_39 = arith.constant dense<0.000000e+00> : vector<8x32xf32>
    %57 = tpu.matmul %55, %56, %cst_39 {dimension_numbers = #tpu.dot_dimension_numbers<[1], [0], [0], [1], [0, 0, 1, 1], [], []>} : vector<8x8xf32>, vector<8x32xf32>, vector<8x32xf32> -> vector<8x32xf32>
    %58 = arith.addf %4, %57 : vector<8x32xf32>
    %59 = vector.extract_strided_slice %38 {offsets = [0, 8], sizes = [8, 8], strides = [1, 1]} : vector<8x32xf32> to vector<8x8xf32>
    %60 = vector.extract_strided_slice %41 {offsets = [8, 0], sizes = [8, 8], strides = [1, 1]} : vector<32x8xf32> to vector<8x8xf32>
    %cst_40 = arith.constant dense<0.000000e+00> : vector<8x8xf32>
    %61 = tpu.matmul %59, %60, %cst_40 {dimension_numbers = #tpu.dot_dimension_numbers<[1], [0], [0], [1], [0, 0, 1, 1], [], []>} : vector<8x8xf32>, vector<8x8xf32>, vector<8x8xf32> -> vector<8x8xf32>
    %62 = arith.addf %61, %35 : vector<8x8xf32>
    %cst_41 = arith.constant dense<0xFF800000> : vector<8xf32>
    %63 = vector.multi_reduction <maximumf>, %62, %cst_41 [1] : vector<8x8xf32> to vector<8xf32>
    %64 = vector.shape_cast %63 : vector<8xf32> to vector<8x1xf32>
    %65 = vector.broadcast %64 : vector<8x1xf32> to vector<8x8xf32>
    %66 = arith.subf %62, %65 : vector<8x8xf32>
    %67 = math.exp %66 : vector<8x8xf32>
    %cst_42 = arith.constant dense<0.000000e+00> : vector<8xf32>
    %68 = vector.multi_reduction <add>, %67, %cst_42 [1] : vector<8x8xf32> to vector<8xf32>
    %69 = vector.shape_cast %68 : vector<8xf32> to vector<8x1xf32>
    %70 = tpu.reciprocal %69 {approx = true} : vector<8x1xf32> -> vector<8x1xf32>
    %71 = vector.broadcast %70 : vector<8x1xf32> to vector<8x8xf32>
    %72 = arith.mulf %67, %71 : vector<8x8xf32>
    %cst_43 = arith.constant dense<0.000000e+00> : vector<8x32xf32>
    %73 = tpu.matmul %33, %11, %cst_43 {dimension_numbers = #tpu.dot_dimension_numbers<[1], [0], [0], [1], [0, 0, 1, 1], [], []>} : vector<8x32xf32>, vector<32x32xf32>, vector<8x32xf32> -> vector<8x32xf32>
    %cst_44 = arith.constant dense<0.000000e+00> : vector<8x32xf32>
    %74 = tpu.matmul %72, %73, %cst_44 {dimension_numbers = #tpu.dot_dimension_numbers<[1], [0], [0], [1], [0, 0, 1, 1], [], []>} : vector<8x8xf32>, vector<8x32xf32>, vector<8x32xf32> -> vector<8x32xf32>
    %75 = arith.addf %58, %74 : vector<8x32xf32>
    %76 = vector.extract_strided_slice %38 {offsets = [0, 16], sizes = [8, 8], strides = [1, 1]} : vector<8x32xf32> to vector<8x8xf32>
    %77 = vector.extract_strided_slice %41 {offsets = [16, 0], sizes = [8, 8], strides = [1, 1]} : vector<32x8xf32> to vector<8x8xf32>
    %cst_45 = arith.constant dense<0.000000e+00> : vector<8x8xf32>
    %78 = tpu.matmul %76, %77, %cst_45 {dimension_numbers = #tpu.dot_dimension_numbers<[1], [0], [0], [1], [0, 0, 1, 1], [], []>} : vector<8x8xf32>, vector<8x8xf32>, vector<8x8xf32> -> vector<8x8xf32>
    %79 = arith.addf %78, %35 : vector<8x8xf32>
    %cst_46 = arith.constant dense<0xFF800000> : vector<8xf32>
    %80 = vector.multi_reduction <maximumf>, %79, %cst_46 [1] : vector<8x8xf32> to vector<8xf32>
    %81 = vector.shape_cast %80 : vector<8xf32> to vector<8x1xf32>
    %82 = vector.broadcast %81 : vector<8x1xf32> to vector<8x8xf32>
    %83 = arith.subf %79, %82 : vector<8x8xf32>
    %84 = math.exp %83 : vector<8x8xf32>
    %cst_47 = arith.constant dense<0.000000e+00> : vector<8xf32>
    %85 = vector.multi_reduction <add>, %84, %cst_47 [1] : vector<8x8xf32> to vector<8xf32>
    %86 = vector.shape_cast %85 : vector<8xf32> to vector<8x1xf32>
    %87 = tpu.reciprocal %86 {approx = true} : vector<8x1xf32> -> vector<8x1xf32>
    %88 = vector.broadcast %87 : vector<8x1xf32> to vector<8x8xf32>
    %89 = arith.mulf %84, %88 : vector<8x8xf32>
    %cst_48 = arith.constant dense<0.000000e+00> : vector<8x32xf32>
    %90 = tpu.matmul %33, %12, %cst_48 {dimension_numbers = #tpu.dot_dimension_numbers<[1], [0], [0], [1], [0, 0, 1, 1], [], []>} : vector<8x32xf32>, vector<32x32xf32>, vector<8x32xf32> -> vector<8x32xf32>
    %cst_49 = arith.constant dense<0.000000e+00> : vector<8x32xf32>
    %91 = tpu.matmul %89, %90, %cst_49 {dimension_numbers = #tpu.dot_dimension_numbers<[1], [0], [0], [1], [0, 0, 1, 1], [], []>} : vector<8x8xf32>, vector<8x32xf32>, vector<8x32xf32> -> vector<8x32xf32>
    %92 = arith.addf %75, %91 : vector<8x32xf32>
    %93 = vector.extract_strided_slice %38 {offsets = [0, 24], sizes = [8, 8], strides = [1, 1]} : vector<8x32xf32> to vector<8x8xf32>
    %94 = vector.extract_strided_slice %41 {offsets = [24, 0], sizes = [8, 8], strides = [1, 1]} : vector<32x8xf32> to vector<8x8xf32>
    %cst_50 = arith.constant dense<0.000000e+00> : vector<8x8xf32>
    %95 = tpu.matmul %93, %94, %cst_50 {dimension_numbers = #tpu.dot_dimension_numbers<[1], [0], [0], [1], [0, 0, 1, 1], [], []>} : vector<8x8xf32>, vector<8x8xf32>, vector<8x8xf32> -> vector<8x8xf32>
    %96 = arith.addf %95, %35 : vector<8x8xf32>
    %cst_51 = arith.constant dense<0xFF800000> : vector<8xf32>
    %97 = vector.multi_reduction <maximumf>, %96, %cst_51 [1] : vector<8x8xf32> to vector<8xf32>
    %98 = vector.shape_cast %97 : vector<8xf32> to vector<8x1xf32>
    %99 = vector.broadcast %98 : vector<8x1xf32> to vector<8x8xf32>
    %100 = arith.subf %96, %99 : vector<8x8xf32>
    %101 = math.exp %100 : vector<8x8xf32>
    %cst_52 = arith.constant dense<0.000000e+00> : vector<8xf32>
    %102 = vector.multi_reduction <add>, %101, %cst_52 [1] : vector<8x8xf32> to vector<8xf32>
    %103 = vector.shape_cast %102 : vector<8xf32> to vector<8x1xf32>
    %104 = tpu.reciprocal %103 {approx = true} : vector<8x1xf32> -> vector<8x1xf32>
    %105 = vector.broadcast %104 : vector<8x1xf32> to vector<8x8xf32>
    %106 = arith.mulf %101, %105 : vector<8x8xf32>
    %cst_53 = arith.constant dense<0.000000e+00> : vector<8x32xf32>
    %107 = tpu.matmul %33, %13, %cst_53 {dimension_numbers = #tpu.dot_dimension_numbers<[1], [0], [0], [1], [0, 0, 1, 1], [], []>} : vector<8x32xf32>, vector<32x32xf32>, vector<8x32xf32> -> vector<8x32xf32>
    %cst_54 = arith.constant dense<0.000000e+00> : vector<8x32xf32>
    %108 = tpu.matmul %106, %107, %cst_54 {dimension_numbers = #tpu.dot_dimension_numbers<[1], [0], [0], [1], [0, 0, 1, 1], [], []>} : vector<8x8xf32>, vector<8x32xf32>, vector<8x32xf32> -> vector<8x32xf32>
    %109 = arith.addf %92, %108 : vector<8x32xf32>
    %110 = arith.addf %33, %109 : vector<8x32xf32>
    %cst_55 = arith.constant dense<0.000000e+00> : vector<8xf32>
    %111 = vector.multi_reduction <add>, %110, %cst_55 [1] : vector<8x32xf32> to vector<8xf32>
    %112 = vector.shape_cast %111 : vector<8xf32> to vector<8x1xf32>
    %cst_56 = arith.constant 3.200000e+01 : f32
    %113 = vector.broadcast %cst_56 : f32 to vector<8x1xf32>
    %114 = arith.divf %112, %113 : vector<8x1xf32>
    %115 = vector.broadcast %114 : vector<8x1xf32> to vector<8x32xf32>
    %116 = arith.subf %110, %115 : vector<8x32xf32>
    %117 = vector.broadcast %114 : vector<8x1xf32> to vector<8x32xf32>
    %118 = arith.subf %110, %117 : vector<8x32xf32>
    %119 = arith.mulf %116, %118 : vector<8x32xf32>
    %cst_57 = arith.constant dense<0.000000e+00> : vector<8xf32>
    %120 = vector.multi_reduction <add>, %119, %cst_57 [1] : vector<8x32xf32> to vector<8xf32>
    %121 = vector.shape_cast %120 : vector<8xf32> to vector<8x1xf32>
    %cst_58 = arith.constant 3.200000e+01 : f32
    %122 = vector.broadcast %cst_58 : f32 to vector<8x1xf32>
    %123 = arith.divf %121, %122 : vector<8x1xf32>
    %124 = vector.broadcast %114 : vector<8x1xf32> to vector<8x32xf32>
    %125 = arith.subf %110, %124 : vector<8x32xf32>
    %cst_59 = arith.constant 9.99999974E-6 : f32
    %126 = vector.broadcast %cst_59 : f32 to vector<8x1xf32>
    %127 = arith.addf %123, %126 : vector<8x1xf32>
    %128 = math.rsqrt %127 : vector<8x1xf32>
    %129 = vector.broadcast %128 : vector<8x1xf32> to vector<8x32xf32>
    %130 = arith.mulf %125, %129 : vector<8x32xf32>
    %131 = arith.mulf %130, %25 : vector<8x32xf32>
    %132 = arith.addf %131, %28 : vector<8x32xf32>
    %cst_60 = arith.constant dense<0.000000e+00> : vector<8x32xf32>
    %133 = tpu.matmul %132, %5, %cst_60 {dimension_numbers = #tpu.dot_dimension_numbers<[1], [0], [0], [1], [0, 0, 1, 1], [], []>} : vector<8x32xf32>, vector<32x32xf32>, vector<8x32xf32> -> vector<8x32xf32>
    %134 = arith.addf %133, %6 : vector<8x32xf32>
    %cst_61 = arith.constant dense<0.000000e+00> : vector<8x32xf32>
    %135 = tpu.matmul %34, %7, %cst_61 {dimension_numbers = #tpu.dot_dimension_numbers<[1], [0], [0], [1], [0, 0, 1, 1], [], []>} : vector<8x32xf32>, vector<32x32xf32>, vector<8x32xf32> -> vector<8x32xf32>
    %136 = arith.addf %135, %8 : vector<8x32xf32>
    %137 = tpu.transpose %136, [1, 0] : vector<8x32xf32> -> vector<32x8xf32>
    %138 = vector.extract_strided_slice %134 {offsets = [0, 0], sizes = [8, 8], strides = [1, 1]} : vector<8x32xf32> to vector<8x8xf32>
    %139 = vector.extract_strided_slice %137 {offsets = [0, 0], sizes = [8, 8], strides = [1, 1]} : vector<32x8xf32> to vector<8x8xf32>
    %cst_62 = arith.constant dense<0.000000e+00> : vector<8x8xf32>
    %140 = tpu.matmul %138, %139, %cst_62 {dimension_numbers = #tpu.dot_dimension_numbers<[1], [0], [0], [1], [0, 0, 1, 1], [], []>} : vector<8x8xf32>, vector<8x8xf32>, vector<8x8xf32> -> vector<8x8xf32>
    %141 = arith.addf %140, %36 : vector<8x8xf32>
    %cst_63 = arith.constant dense<0xFF800000> : vector<8xf32>
    %142 = vector.multi_reduction <maximumf>, %141, %cst_63 [1] : vector<8x8xf32> to vector<8xf32>
    %143 = vector.shape_cast %142 : vector<8xf32> to vector<8x1xf32>
    %144 = vector.broadcast %143 : vector<8x1xf32> to vector<8x8xf32>
    %145 = arith.subf %141, %144 : vector<8x8xf32>
    %146 = math.exp %145 : vector<8x8xf32>
    %cst_64 = arith.constant dense<0.000000e+00> : vector<8xf32>
    %147 = vector.multi_reduction <add>, %146, %cst_64 [1] : vector<8x8xf32> to vector<8xf32>
    %148 = vector.shape_cast %147 : vector<8xf32> to vector<8x1xf32>
    %149 = tpu.reciprocal %148 {approx = true} : vector<8x1xf32> -> vector<8x1xf32>
    %150 = vector.broadcast %149 : vector<8x1xf32> to vector<8x8xf32>
    %151 = arith.mulf %146, %150 : vector<8x8xf32>
    %cst_65 = arith.constant dense<0.000000e+00> : vector<8x32xf32>
    %152 = tpu.matmul %34, %14, %cst_65 {dimension_numbers = #tpu.dot_dimension_numbers<[1], [0], [0], [1], [0, 0, 1, 1], [], []>} : vector<8x32xf32>, vector<32x32xf32>, vector<8x32xf32> -> vector<8x32xf32>
    %cst_66 = arith.constant dense<0.000000e+00> : vector<8x32xf32>
    %153 = tpu.matmul %151, %152, %cst_66 {dimension_numbers = #tpu.dot_dimension_numbers<[1], [0], [0], [1], [0, 0, 1, 1], [], []>} : vector<8x8xf32>, vector<8x32xf32>, vector<8x32xf32> -> vector<8x32xf32>
    %154 = arith.addf %9, %153 : vector<8x32xf32>
    %155 = vector.extract_strided_slice %134 {offsets = [0, 8], sizes = [8, 8], strides = [1, 1]} : vector<8x32xf32> to vector<8x8xf32>
    %156 = vector.extract_strided_slice %137 {offsets = [8, 0], sizes = [8, 8], strides = [1, 1]} : vector<32x8xf32> to vector<8x8xf32>
    %cst_67 = arith.constant dense<0.000000e+00> : vector<8x8xf32>
    %157 = tpu.matmul %155, %156, %cst_67 {dimension_numbers = #tpu.dot_dimension_numbers<[1], [0], [0], [1], [0, 0, 1, 1], [], []>} : vector<8x8xf32>, vector<8x8xf32>, vector<8x8xf32> -> vector<8x8xf32>
    %158 = arith.addf %157, %36 : vector<8x8xf32>
    %cst_68 = arith.constant dense<0xFF800000> : vector<8xf32>
    %159 = vector.multi_reduction <maximumf>, %158, %cst_68 [1] : vector<8x8xf32> to vector<8xf32>
    %160 = vector.shape_cast %159 : vector<8xf32> to vector<8x1xf32>
    %161 = vector.broadcast %160 : vector<8x1xf32> to vector<8x8xf32>
    %162 = arith.subf %158, %161 : vector<8x8xf32>
    %163 = math.exp %162 : vector<8x8xf32>
    %cst_69 = arith.constant dense<0.000000e+00> : vector<8xf32>
    %164 = vector.multi_reduction <add>, %163, %cst_69 [1] : vector<8x8xf32> to vector<8xf32>
    %165 = vector.shape_cast %164 : vector<8xf32> to vector<8x1xf32>
    %166 = tpu.reciprocal %165 {approx = true} : vector<8x1xf32> -> vector<8x1xf32>
    %167 = vector.broadcast %166 : vector<8x1xf32> to vector<8x8xf32>
    %168 = arith.mulf %163, %167 : vector<8x8xf32>
    %cst_70 = arith.constant dense<0.000000e+00> : vector<8x32xf32>
    %169 = tpu.matmul %34, %15, %cst_70 {dimension_numbers = #tpu.dot_dimension_numbers<[1], [0], [0], [1], [0, 0, 1, 1], [], []>} : vector<8x32xf32>, vector<32x32xf32>, vector<8x32xf32> -> vector<8x32xf32>
    %cst_71 = arith.constant dense<0.000000e+00> : vector<8x32xf32>
    %170 = tpu.matmul %168, %169, %cst_71 {dimension_numbers = #tpu.dot_dimension_numbers<[1], [0], [0], [1], [0, 0, 1, 1], [], []>} : vector<8x8xf32>, vector<8x32xf32>, vector<8x32xf32> -> vector<8x32xf32>
    %171 = arith.addf %154, %170 : vector<8x32xf32>
    %172 = arith.addf %151, %168 : vector<8x8xf32>
    %173 = vector.extract_strided_slice %134 {offsets = [0, 16], sizes = [8, 8], strides = [1, 1]} : vector<8x32xf32> to vector<8x8xf32>
    %174 = vector.extract_strided_slice %137 {offsets = [16, 0], sizes = [8, 8], strides = [1, 1]} : vector<32x8xf32> to vector<8x8xf32>
    %cst_72 = arith.constant dense<0.000000e+00> : vector<8x8xf32>
    %175 = tpu.matmul %173, %174, %cst_72 {dimension_numbers = #tpu.dot_dimension_numbers<[1], [0], [0], [1], [0, 0, 1, 1], [], []>} : vector<8x8xf32>, vector<8x8xf32>, vector<8x8xf32> -> vector<8x8xf32>
    %176 = arith.addf %175, %36 : vector<8x8xf32>
    %cst_73 = arith.constant dense<0xFF800000> : vector<8xf32>
    %177 = vector.multi_reduction <maximumf>, %176, %cst_73 [1] : vector<8x8xf32> to vector<8xf32>
    %178 = vector.shape_cast %177 : vector<8xf32> to vector<8x1xf32>
    %179 = vector.broadcast %178 : vector<8x1xf32> to vector<8x8xf32>
    %180 = arith.subf %176, %179 : vector<8x8xf32>
    %181 = math.exp %180 : vector<8x8xf32>
    %cst_74 = arith.constant dense<0.000000e+00> : vector<8xf32>
    %182 = vector.multi_reduction <add>, %181, %cst_74 [1] : vector<8x8xf32> to vector<8xf32>
    %183 = vector.shape_cast %182 : vector<8xf32> to vector<8x1xf32>
    %184 = tpu.reciprocal %183 {approx = true} : vector<8x1xf32> -> vector<8x1xf32>
    %185 = vector.broadcast %184 : vector<8x1xf32> to vector<8x8xf32>
    %186 = arith.mulf %181, %185 : vector<8x8xf32>
    %cst_75 = arith.constant dense<0.000000e+00> : vector<8x32xf32>
    %187 = tpu.matmul %34, %16, %cst_75 {dimension_numbers = #tpu.dot_dimension_numbers<[1], [0], [0], [1], [0, 0, 1, 1], [], []>} : vector<8x32xf32>, vector<32x32xf32>, vector<8x32xf32> -> vector<8x32xf32>
    %cst_76 = arith.constant dense<0.000000e+00> : vector<8x32xf32>
    %188 = tpu.matmul %186, %187, %cst_76 {dimension_numbers = #tpu.dot_dimension_numbers<[1], [0], [0], [1], [0, 0, 1, 1], [], []>} : vector<8x8xf32>, vector<8x32xf32>, vector<8x32xf32> -> vector<8x32xf32>
    %189 = arith.addf %171, %188 : vector<8x32xf32>
    %190 = arith.addf %172, %186 : vector<8x8xf32>
    %191 = vector.extract_strided_slice %134 {offsets = [0, 24], sizes = [8, 8], strides = [1, 1]} : vector<8x32xf32> to vector<8x8xf32>
    %192 = vector.extract_strided_slice %137 {offsets = [24, 0], sizes = [8, 8], strides = [1, 1]} : vector<32x8xf32> to vector<8x8xf32>
    %cst_77 = arith.constant dense<0.000000e+00> : vector<8x8xf32>
    %193 = tpu.matmul %191, %192, %cst_77 {dimension_numbers = #tpu.dot_dimension_numbers<[1], [0], [0], [1], [0, 0, 1, 1], [], []>} : vector<8x8xf32>, vector<8x8xf32>, vector<8x8xf32> -> vector<8x8xf32>
    %194 = arith.addf %193, %36 : vector<8x8xf32>
    %cst_78 = arith.constant dense<0xFF800000> : vector<8xf32>
    %195 = vector.multi_reduction <maximumf>, %194, %cst_78 [1] : vector<8x8xf32> to vector<8xf32>
    %196 = vector.shape_cast %195 : vector<8xf32> to vector<8x1xf32>
    %197 = vector.broadcast %196 : vector<8x1xf32> to vector<8x8xf32>
    %198 = arith.subf %194, %197 : vector<8x8xf32>
    %199 = math.exp %198 : vector<8x8xf32>
    %cst_79 = arith.constant dense<0.000000e+00> : vector<8xf32>
    %200 = vector.multi_reduction <add>, %199, %cst_79 [1] : vector<8x8xf32> to vector<8xf32>
    %201 = vector.shape_cast %200 : vector<8xf32> to vector<8x1xf32>
    %202 = tpu.reciprocal %201 {approx = true} : vector<8x1xf32> -> vector<8x1xf32>
    %203 = vector.broadcast %202 : vector<8x1xf32> to vector<8x8xf32>
    %204 = arith.mulf %199, %203 : vector<8x8xf32>
    %cst_80 = arith.constant dense<0.000000e+00> : vector<8x32xf32>
    %205 = tpu.matmul %34, %17, %cst_80 {dimension_numbers = #tpu.dot_dimension_numbers<[1], [0], [0], [1], [0, 0, 1, 1], [], []>} : vector<8x32xf32>, vector<32x32xf32>, vector<8x32xf32> -> vector<8x32xf32>
    %cst_81 = arith.constant dense<0.000000e+00> : vector<8x32xf32>
    %206 = tpu.matmul %204, %205, %cst_81 {dimension_numbers = #tpu.dot_dimension_numbers<[1], [0], [0], [1], [0, 0, 1, 1], [], []>} : vector<8x8xf32>, vector<8x32xf32>, vector<8x32xf32> -> vector<8x32xf32>
    %207 = arith.addf %189, %206 : vector<8x32xf32>
    %208 = arith.addf %190, %204 : vector<8x8xf32>
    %209 = arith.addf %132, %207 : vector<8x32xf32>
    %cst_82 = arith.constant dense<0.000000e+00> : vector<8xf32>
    %210 = vector.multi_reduction <add>, %209, %cst_82 [1] : vector<8x32xf32> to vector<8xf32>
    %211 = vector.shape_cast %210 : vector<8xf32> to vector<8x1xf32>
    %cst_83 = arith.constant 3.200000e+01 : f32
    %212 = vector.broadcast %cst_83 : f32 to vector<8x1xf32>
    %213 = arith.divf %211, %212 : vector<8x1xf32>
    %214 = vector.broadcast %213 : vector<8x1xf32> to vector<8x32xf32>
    %215 = arith.subf %209, %214 : vector<8x32xf32>
    %216 = vector.broadcast %213 : vector<8x1xf32> to vector<8x32xf32>
    %217 = arith.subf %209, %216 : vector<8x32xf32>
    %218 = arith.mulf %215, %217 : vector<8x32xf32>
    %cst_84 = arith.constant dense<0.000000e+00> : vector<8xf32>
    %219 = vector.multi_reduction <add>, %218, %cst_84 [1] : vector<8x32xf32> to vector<8xf32>
    %220 = vector.shape_cast %219 : vector<8xf32> to vector<8x1xf32>
    %cst_85 = arith.constant 3.200000e+01 : f32
    %221 = vector.broadcast %cst_85 : f32 to vector<8x1xf32>
    %222 = arith.divf %220, %221 : vector<8x1xf32>
    %223 = vector.broadcast %213 : vector<8x1xf32> to vector<8x32xf32>
    %224 = arith.subf %209, %223 : vector<8x32xf32>
    %cst_86 = arith.constant 9.99999974E-6 : f32
    %225 = vector.broadcast %cst_86 : f32 to vector<8x1xf32>
    %226 = arith.addf %222, %225 : vector<8x1xf32>
    %227 = math.rsqrt %226 : vector<8x1xf32>
    %228 = vector.broadcast %227 : vector<8x1xf32> to vector<8x32xf32>
    %229 = arith.mulf %224, %228 : vector<8x32xf32>
    %230 = arith.mulf %229, %26 : vector<8x32xf32>
    %231 = arith.addf %230, %29 : vector<8x32xf32>
    %cst_87 = arith.constant dense<0.000000e+00> : vector<8x32xf32>
    %232 = tpu.matmul %231, %18, %cst_87 {dimension_numbers = #tpu.dot_dimension_numbers<[1], [0], [0], [1], [0, 0, 1, 1], [], []>} : vector<8x32xf32>, vector<32x32xf32>, vector<8x32xf32> -> vector<8x32xf32>
    %233 = arith.addf %232, %22 : vector<8x32xf32>
    %cst_88 = arith.constant 0.000000e+00 : f32
    %234 = vector.broadcast %cst_88 : f32 to vector<8x32xf32>
    %235 = arith.maximumf %233, %234 : vector<8x32xf32>
    %cst_89 = arith.constant dense<0.000000e+00> : vector<8x32xf32>
    %236 = tpu.matmul %231, %19, %cst_89 {dimension_numbers = #tpu.dot_dimension_numbers<[1], [0], [0], [1], [0, 0, 1, 1], [], []>} : vector<8x32xf32>, vector<32x32xf32>, vector<8x32xf32> -> vector<8x32xf32>
    %237 = arith.addf %236, %23 : vector<8x32xf32>
    %cst_90 = arith.constant 0.000000e+00 : f32
    %238 = vector.broadcast %cst_90 : f32 to vector<8x32xf32>
    %239 = arith.maximumf %237, %238 : vector<8x32xf32>
    %cst_91 = arith.constant dense<0.000000e+00> : vector<8x32xf32>
    %240 = tpu.matmul %235, %20, %cst_91 {dimension_numbers = #tpu.dot_dimension_numbers<[1], [0], [0], [1], [0, 0, 1, 1], [], []>} : vector<8x32xf32>, vector<32x32xf32>, vector<8x32xf32> -> vector<8x32xf32>
    %cst_92 = arith.constant dense<0.000000e+00> : vector<8x32xf32>
    %241 = tpu.matmul %239, %21, %cst_92 {dimension_numbers = #tpu.dot_dimension_numbers<[1], [0], [0], [1], [0, 0, 1, 1], [], []>} : vector<8x32xf32>, vector<32x32xf32>, vector<8x32xf32> -> vector<8x32xf32>
    %242 = arith.addf %240, %241 : vector<8x32xf32>
    %243 = arith.addf %242, %24 : vector<8x32xf32>
    %244 = arith.addf %231, %243 : vector<8x32xf32>
    %cst_93 = arith.constant dense<0.000000e+00> : vector<8xf32>
    %245 = vector.multi_reduction <add>, %244, %cst_93 [1] : vector<8x32xf32> to vector<8xf32>
    %246 = vector.shape_cast %245 : vector<8xf32> to vector<8x1xf32>
    %cst_94 = arith.constant 3.200000e+01 : f32
    %247 = vector.broadcast %cst_94 : f32 to vector<8x1xf32>
    %248 = arith.divf %246, %247 : vector<8x1xf32>
    %249 = vector.broadcast %248 : vector<8x1xf32> to vector<8x32xf32>
    %250 = arith.subf %244, %249 : vector<8x32xf32>
    %251 = vector.broadcast %248 : vector<8x1xf32> to vector<8x32xf32>
    %252 = arith.subf %244, %251 : vector<8x32xf32>
    %253 = arith.mulf %250, %252 : vector<8x32xf32>
    %cst_95 = arith.constant dense<0.000000e+00> : vector<8xf32>
    %254 = vector.multi_reduction <add>, %253, %cst_95 [1] : vector<8x32xf32> to vector<8xf32>
    %255 = vector.shape_cast %254 : vector<8xf32> to vector<8x1xf32>
    %cst_96 = arith.constant 3.200000e+01 : f32
    %256 = vector.broadcast %cst_96 : f32 to vector<8x1xf32>
    %257 = arith.divf %255, %256 : vector<8x1xf32>
    %258 = vector.broadcast %248 : vector<8x1xf32> to vector<8x32xf32>
    %259 = arith.subf %244, %258 : vector<8x32xf32>
    %cst_97 = arith.constant 9.99999974E-6 : f32
    %260 = vector.broadcast %cst_97 : f32 to vector<8x1xf32>
    %261 = arith.addf %257, %260 : vector<8x1xf32>
    %262 = math.rsqrt %261 : vector<8x1xf32>
    %263 = vector.broadcast %262 : vector<8x1xf32> to vector<8x32xf32>
    %264 = arith.mulf %259, %263 : vector<8x32xf32>
    %265 = arith.mulf %264, %27 : vector<8x32xf32>
    %266 = arith.addf %265, %30 : vector<8x32xf32>
    %cst_98 = arith.constant 2.500000e-01 : f32
    %267 = vector.broadcast %cst_98 : f32 to vector<8x8xf32>
    %268 = arith.mulf %208, %267 : vector<8x8xf32>
    %c1 = arith.constant 1 : index
    %c0_99 = arith.constant 0 : index
    %c0_100 = arith.constant 0 : index
    %269 = vector.load %arg0[%c1, %c0_99, %c0_100] : memref<2x32x32xf32, #tpu.memory_space<vmem>>, vector<1x32x32xf32>
    %270 = vector.shape_cast %269 : vector<1x32x32xf32> to vector<32x32xf32>
    %271 = vector.extract_strided_slice %270 {offsets = [0, 0], sizes = [8, 32], strides = [1, 1]} : vector<32x32xf32> to vector<8x32xf32>
    %272 = vector.extract_strided_slice %270 {offsets = [8, 0], sizes = [8, 32], strides = [1, 1]} : vector<32x32xf32> to vector<8x32xf32>
    %273 = vector.extract_strided_slice %270 {offsets = [16, 0], sizes = [8, 8], strides = [1, 1]} : vector<32x32xf32> to vector<8x8xf32>
    %274 = vector.extract_strided_slice %270 {offsets = [24, 0], sizes = [8, 8], strides = [1, 1]} : vector<32x32xf32> to vector<8x8xf32>
    %cst_101 = arith.constant dense<0.000000e+00> : vector<8x32xf32>
    %275 = tpu.matmul %271, %0, %cst_101 {dimension_numbers = #tpu.dot_dimension_numbers<[1], [0], [0], [1], [0, 0, 1, 1], [], []>} : vector<8x32xf32>, vector<32x32xf32>, vector<8x32xf32> -> vector<8x32xf32>
    %276 = arith.addf %275, %1 : vector<8x32xf32>
    %cst_102 = arith.constant dense<0.000000e+00> : vector<8x32xf32>
    %277 = tpu.matmul %271, %2, %cst_102 {dimension_numbers = #tpu.dot_dimension_numbers<[1], [0], [0], [1], [0, 0, 1, 1], [], []>} : vector<8x32xf32>, vector<32x32xf32>, vector<8x32xf32> -> vector<8x32xf32>
    %278 = arith.addf %277, %3 : vector<8x32xf32>
    %279 = tpu.transpose %278, [1, 0] : vector<8x32xf32> -> vector<32x8xf32>
    %280 = vector.extract_strided_slice %276 {offsets = [0, 0], sizes = [8, 8], strides = [1, 1]} : vector<8x32xf32> to vector<8x8xf32>
    %281 = vector.extract_strided_slice %279 {offsets = [0, 0], sizes = [8, 8], strides = [1, 1]} : vector<32x8xf32> to vector<8x8xf32>
    %cst_103 = arith.constant dense<0.000000e+00> : vector<8x8xf32>
    %282 = tpu.matmul %280, %281, %cst_103 {dimension_numbers = #tpu.dot_dimension_numbers<[1], [0], [0], [1], [0, 0, 1, 1], [], []>} : vector<8x8xf32>, vector<8x8xf32>, vector<8x8xf32> -> vector<8x8xf32>
    %283 = arith.addf %282, %273 : vector<8x8xf32>
    %cst_104 = arith.constant dense<0xFF800000> : vector<8xf32>
    %284 = vector.multi_reduction <maximumf>, %283, %cst_104 [1] : vector<8x8xf32> to vector<8xf32>
    %285 = vector.shape_cast %284 : vector<8xf32> to vector<8x1xf32>
    %286 = vector.broadcast %285 : vector<8x1xf32> to vector<8x8xf32>
    %287 = arith.subf %283, %286 : vector<8x8xf32>
    %288 = math.exp %287 : vector<8x8xf32>
    %cst_105 = arith.constant dense<0.000000e+00> : vector<8xf32>
    %289 = vector.multi_reduction <add>, %288, %cst_105 [1] : vector<8x8xf32> to vector<8xf32>
    %290 = vector.shape_cast %289 : vector<8xf32> to vector<8x1xf32>
    %291 = tpu.reciprocal %290 {approx = true} : vector<8x1xf32> -> vector<8x1xf32>
    %292 = vector.broadcast %291 : vector<8x1xf32> to vector<8x8xf32>
    %293 = arith.mulf %288, %292 : vector<8x8xf32>
    %cst_106 = arith.constant dense<0.000000e+00> : vector<8x32xf32>
    %294 = tpu.matmul %271, %10, %cst_106 {dimension_numbers = #tpu.dot_dimension_numbers<[1], [0], [0], [1], [0, 0, 1, 1], [], []>} : vector<8x32xf32>, vector<32x32xf32>, vector<8x32xf32> -> vector<8x32xf32>
    %cst_107 = arith.constant dense<0.000000e+00> : vector<8x32xf32>
    %295 = tpu.matmul %293, %294, %cst_107 {dimension_numbers = #tpu.dot_dimension_numbers<[1], [0], [0], [1], [0, 0, 1, 1], [], []>} : vector<8x8xf32>, vector<8x32xf32>, vector<8x32xf32> -> vector<8x32xf32>
    %296 = arith.addf %4, %295 : vector<8x32xf32>
    %297 = vector.extract_strided_slice %276 {offsets = [0, 8], sizes = [8, 8], strides = [1, 1]} : vector<8x32xf32> to vector<8x8xf32>
    %298 = vector.extract_strided_slice %279 {offsets = [8, 0], sizes = [8, 8], strides = [1, 1]} : vector<32x8xf32> to vector<8x8xf32>
    %cst_108 = arith.constant dense<0.000000e+00> : vector<8x8xf32>
    %299 = tpu.matmul %297, %298, %cst_108 {dimension_numbers = #tpu.dot_dimension_numbers<[1], [0], [0], [1], [0, 0, 1, 1], [], []>} : vector<8x8xf32>, vector<8x8xf32>, vector<8x8xf32> -> vector<8x8xf32>
    %300 = arith.addf %299, %273 : vector<8x8xf32>
    %cst_109 = arith.constant dense<0xFF800000> : vector<8xf32>
    %301 = vector.multi_reduction <maximumf>, %300, %cst_109 [1] : vector<8x8xf32> to vector<8xf32>
    %302 = vector.shape_cast %301 : vector<8xf32> to vector<8x1xf32>
    %303 = vector.broadcast %302 : vector<8x1xf32> to vector<8x8xf32>
    %304 = arith.subf %300, %303 : vector<8x8xf32>
    %305 = math.exp %304 : vector<8x8xf32>
    %cst_110 = arith.constant dense<0.000000e+00> : vector<8xf32>
    %306 = vector.multi_reduction <add>, %305, %cst_110 [1] : vector<8x8xf32> to vector<8xf32>
    %307 = vector.shape_cast %306 : vector<8xf32> to vector<8x1xf32>
    %308 = tpu.reciprocal %307 {approx = true} : vector<8x1xf32> -> vector<8x1xf32>
    %309 = vector.broadcast %308 : vector<8x1xf32> to vector<8x8xf32>
    %310 = arith.mulf %305, %309 : vector<8x8xf32>
    %cst_111 = arith.constant dense<0.000000e+00> : vector<8x32xf32>
    %311 = tpu.matmul %271, %11, %cst_111 {dimension_numbers = #tpu.dot_dimension_numbers<[1], [0], [0], [1], [0, 0, 1, 1], [], []>} : vector<8x32xf32>, vector<32x32xf32>, vector<8x32xf32> -> vector<8x32xf32>
    %cst_112 = arith.constant dense<0.000000e+00> : vector<8x32xf32>
    %312 = tpu.matmul %310, %311, %cst_112 {dimension_numbers = #tpu.dot_dimension_numbers<[1], [0], [0], [1], [0, 0, 1, 1], [], []>} : vector<8x8xf32>, vector<8x32xf32>, vector<8x32xf32> -> vector<8x32xf32>
    %313 = arith.addf %296, %312 : vector<8x32xf32>
    %314 = vector.extract_strided_slice %276 {offsets = [0, 16], sizes = [8, 8], strides = [1, 1]} : vector<8x32xf32> to vector<8x8xf32>
    %315 = vector.extract_strided_slice %279 {offsets = [16, 0], sizes = [8, 8], strides = [1, 1]} : vector<32x8xf32> to vector<8x8xf32>
    %cst_113 = arith.constant dense<0.000000e+00> : vector<8x8xf32>
    %316 = tpu.matmul %314, %315, %cst_113 {dimension_numbers = #tpu.dot_dimension_numbers<[1], [0], [0], [1], [0, 0, 1, 1], [], []>} : vector<8x8xf32>, vector<8x8xf32>, vector<8x8xf32> -> vector<8x8xf32>
    %317 = arith.addf %316, %273 : vector<8x8xf32>
    %cst_114 = arith.constant dense<0xFF800000> : vector<8xf32>
    %318 = vector.multi_reduction <maximumf>, %317, %cst_114 [1] : vector<8x8xf32> to vector<8xf32>
    %319 = vector.shape_cast %318 : vector<8xf32> to vector<8x1xf32>
    %320 = vector.broadcast %319 : vector<8x1xf32> to vector<8x8xf32>
    %321 = arith.subf %317, %320 : vector<8x8xf32>
    %322 = math.exp %321 : vector<8x8xf32>
    %cst_115 = arith.constant dense<0.000000e+00> : vector<8xf32>
    %323 = vector.multi_reduction <add>, %322, %cst_115 [1] : vector<8x8xf32> to vector<8xf32>
    %324 = vector.shape_cast %323 : vector<8xf32> to vector<8x1xf32>
    %325 = tpu.reciprocal %324 {approx = true} : vector<8x1xf32> -> vector<8x1xf32>
    %326 = vector.broadcast %325 : vector<8x1xf32> to vector<8x8xf32>
    %327 = arith.mulf %322, %326 : vector<8x8xf32>
    %cst_116 = arith.constant dense<0.000000e+00> : vector<8x32xf32>
    %328 = tpu.matmul %271, %12, %cst_116 {dimension_numbers = #tpu.dot_dimension_numbers<[1], [0], [0], [1], [0, 0, 1, 1], [], []>} : vector<8x32xf32>, vector<32x32xf32>, vector<8x32xf32> -> vector<8x32xf32>
    %cst_117 = arith.constant dense<0.000000e+00> : vector<8x32xf32>
    %329 = tpu.matmul %327, %328, %cst_117 {dimension_numbers = #tpu.dot_dimension_numbers<[1], [0], [0], [1], [0, 0, 1, 1], [], []>} : vector<8x8xf32>, vector<8x32xf32>, vector<8x32xf32> -> vector<8x32xf32>
    %330 = arith.addf %313, %329 : vector<8x32xf32>
    %331 = vector.extract_strided_slice %276 {offsets = [0, 24], sizes = [8, 8], strides = [1, 1]} : vector<8x32xf32> to vector<8x8xf32>
    %332 = vector.extract_strided_slice %279 {offsets = [24, 0], sizes = [8, 8], strides = [1, 1]} : vector<32x8xf32> to vector<8x8xf32>
    %cst_118 = arith.constant dense<0.000000e+00> : vector<8x8xf32>
    %333 = tpu.matmul %331, %332, %cst_118 {dimension_numbers = #tpu.dot_dimension_numbers<[1], [0], [0], [1], [0, 0, 1, 1], [], []>} : vector<8x8xf32>, vector<8x8xf32>, vector<8x8xf32> -> vector<8x8xf32>
    %334 = arith.addf %333, %273 : vector<8x8xf32>
    %cst_119 = arith.constant dense<0xFF800000> : vector<8xf32>
    %335 = vector.multi_reduction <maximumf>, %334, %cst_119 [1] : vector<8x8xf32> to vector<8xf32>
    %336 = vector.shape_cast %335 : vector<8xf32> to vector<8x1xf32>
    %337 = vector.broadcast %336 : vector<8x1xf32> to vector<8x8xf32>
    %338 = arith.subf %334, %337 : vector<8x8xf32>
    %339 = math.exp %338 : vector<8x8xf32>
    %cst_120 = arith.constant dense<0.000000e+00> : vector<8xf32>
    %340 = vector.multi_reduction <add>, %339, %cst_120 [1] : vector<8x8xf32> to vector<8xf32>
    %341 = vector.shape_cast %340 : vector<8xf32> to vector<8x1xf32>
    %342 = tpu.reciprocal %341 {approx = true} : vector<8x1xf32> -> vector<8x1xf32>
    %343 = vector.broadcast %342 : vector<8x1xf32> to vector<8x8xf32>
    %344 = arith.mulf %339, %343 : vector<8x8xf32>
    %cst_121 = arith.constant dense<0.000000e+00> : vector<8x32xf32>
    %345 = tpu.matmul %271, %13, %cst_121 {dimension_numbers = #tpu.dot_dimension_numbers<[1], [0], [0], [1], [0, 0, 1, 1], [], []>} : vector<8x32xf32>, vector<32x32xf32>, vector<8x32xf32> -> vector<8x32xf32>
    %cst_122 = arith.constant dense<0.000000e+00> : vector<8x32xf32>
    %346 = tpu.matmul %344, %345, %cst_122 {dimension_numbers = #tpu.dot_dimension_numbers<[1], [0], [0], [1], [0, 0, 1, 1], [], []>} : vector<8x8xf32>, vector<8x32xf32>, vector<8x32xf32> -> vector<8x32xf32>
    %347 = arith.addf %330, %346 : vector<8x32xf32>
    %348 = arith.addf %271, %347 : vector<8x32xf32>
    %cst_123 = arith.constant dense<0.000000e+00> : vector<8xf32>
    %349 = vector.multi_reduction <add>, %348, %cst_123 [1] : vector<8x32xf32> to vector<8xf32>
    %350 = vector.shape_cast %349 : vector<8xf32> to vector<8x1xf32>
    %cst_124 = arith.constant 3.200000e+01 : f32
    %351 = vector.broadcast %cst_124 : f32 to vector<8x1xf32>
    %352 = arith.divf %350, %351 : vector<8x1xf32>
    %353 = vector.broadcast %352 : vector<8x1xf32> to vector<8x32xf32>
    %354 = arith.subf %348, %353 : vector<8x32xf32>
    %355 = vector.broadcast %352 : vector<8x1xf32> to vector<8x32xf32>
    %356 = arith.subf %348, %355 : vector<8x32xf32>
    %357 = arith.mulf %354, %356 : vector<8x32xf32>
    %cst_125 = arith.constant dense<0.000000e+00> : vector<8xf32>
    %358 = vector.multi_reduction <add>, %357, %cst_125 [1] : vector<8x32xf32> to vector<8xf32>
    %359 = vector.shape_cast %358 : vector<8xf32> to vector<8x1xf32>
    %cst_126 = arith.constant 3.200000e+01 : f32
    %360 = vector.broadcast %cst_126 : f32 to vector<8x1xf32>
    %361 = arith.divf %359, %360 : vector<8x1xf32>
    %362 = vector.broadcast %352 : vector<8x1xf32> to vector<8x32xf32>
    %363 = arith.subf %348, %362 : vector<8x32xf32>
    %cst_127 = arith.constant 9.99999974E-6 : f32
    %364 = vector.broadcast %cst_127 : f32 to vector<8x1xf32>
    %365 = arith.addf %361, %364 : vector<8x1xf32>
    %366 = math.rsqrt %365 : vector<8x1xf32>
    %367 = vector.broadcast %366 : vector<8x1xf32> to vector<8x32xf32>
    %368 = arith.mulf %363, %367 : vector<8x32xf32>
    %369 = arith.mulf %368, %25 : vector<8x32xf32>
    %370 = arith.addf %369, %28 : vector<8x32xf32>
    %cst_128 = arith.constant dense<0.000000e+00> : vector<8x32xf32>
    %371 = tpu.matmul %370, %5, %cst_128 {dimension_numbers = #tpu.dot_dimension_numbers<[1], [0], [0], [1], [0, 0, 1, 1], [], []>} : vector<8x32xf32>, vector<32x32xf32>, vector<8x32xf32> -> vector<8x32xf32>
    %372 = arith.addf %371, %6 : vector<8x32xf32>
    %cst_129 = arith.constant dense<0.000000e+00> : vector<8x32xf32>
    %373 = tpu.matmul %272, %7, %cst_129 {dimension_numbers = #tpu.dot_dimension_numbers<[1], [0], [0], [1], [0, 0, 1, 1], [], []>} : vector<8x32xf32>, vector<32x32xf32>, vector<8x32xf32> -> vector<8x32xf32>
    %374 = arith.addf %373, %8 : vector<8x32xf32>
    %375 = tpu.transpose %374, [1, 0] : vector<8x32xf32> -> vector<32x8xf32>
    %376 = vector.extract_strided_slice %372 {offsets = [0, 0], sizes = [8, 8], strides = [1, 1]} : vector<8x32xf32> to vector<8x8xf32>
    %377 = vector.extract_strided_slice %375 {offsets = [0, 0], sizes = [8, 8], strides = [1, 1]} : vector<32x8xf32> to vector<8x8xf32>
    %cst_130 = arith.constant dense<0.000000e+00> : vector<8x8xf32>
    %378 = tpu.matmul %376, %377, %cst_130 {dimension_numbers = #tpu.dot_dimension_numbers<[1], [0], [0], [1], [0, 0, 1, 1], [], []>} : vector<8x8xf32>, vector<8x8xf32>, vector<8x8xf32> -> vector<8x8xf32>
    %379 = arith.addf %378, %274 : vector<8x8xf32>
    %cst_131 = arith.constant dense<0xFF800000> : vector<8xf32>
    %380 = vector.multi_reduction <maximumf>, %379, %cst_131 [1] : vector<8x8xf32> to vector<8xf32>
    %381 = vector.shape_cast %380 : vector<8xf32> to vector<8x1xf32>
    %382 = vector.broadcast %381 : vector<8x1xf32> to vector<8x8xf32>
    %383 = arith.subf %379, %382 : vector<8x8xf32>
    %384 = math.exp %383 : vector<8x8xf32>
    %cst_132 = arith.constant dense<0.000000e+00> : vector<8xf32>
    %385 = vector.multi_reduction <add>, %384, %cst_132 [1] : vector<8x8xf32> to vector<8xf32>
    %386 = vector.shape_cast %385 : vector<8xf32> to vector<8x1xf32>
    %387 = tpu.reciprocal %386 {approx = true} : vector<8x1xf32> -> vector<8x1xf32>
    %388 = vector.broadcast %387 : vector<8x1xf32> to vector<8x8xf32>
    %389 = arith.mulf %384, %388 : vector<8x8xf32>
    %cst_133 = arith.constant dense<0.000000e+00> : vector<8x32xf32>
    %390 = tpu.matmul %272, %14, %cst_133 {dimension_numbers = #tpu.dot_dimension_numbers<[1], [0], [0], [1], [0, 0, 1, 1], [], []>} : vector<8x32xf32>, vector<32x32xf32>, vector<8x32xf32> -> vector<8x32xf32>
    %cst_134 = arith.constant dense<0.000000e+00> : vector<8x32xf32>
    %391 = tpu.matmul %389, %390, %cst_134 {dimension_numbers = #tpu.dot_dimension_numbers<[1], [0], [0], [1], [0, 0, 1, 1], [], []>} : vector<8x8xf32>, vector<8x32xf32>, vector<8x32xf32> -> vector<8x32xf32>
    %392 = arith.addf %9, %391 : vector<8x32xf32>
    %393 = vector.extract_strided_slice %372 {offsets = [0, 8], sizes = [8, 8], strides = [1, 1]} : vector<8x32xf32> to vector<8x8xf32>
    %394 = vector.extract_strided_slice %375 {offsets = [8, 0], sizes = [8, 8], strides = [1, 1]} : vector<32x8xf32> to vector<8x8xf32>
    %cst_135 = arith.constant dense<0.000000e+00> : vector<8x8xf32>
    %395 = tpu.matmul %393, %394, %cst_135 {dimension_numbers = #tpu.dot_dimension_numbers<[1], [0], [0], [1], [0, 0, 1, 1], [], []>} : vector<8x8xf32>, vector<8x8xf32>, vector<8x8xf32> -> vector<8x8xf32>
    %396 = arith.addf %395, %274 : vector<8x8xf32>
    %cst_136 = arith.constant dense<0xFF800000> : vector<8xf32>
    %397 = vector.multi_reduction <maximumf>, %396, %cst_136 [1] : vector<8x8xf32> to vector<8xf32>
    %398 = vector.shape_cast %397 : vector<8xf32> to vector<8x1xf32>
    %399 = vector.broadcast %398 : vector<8x1xf32> to vector<8x8xf32>
    %400 = arith.subf %396, %399 : vector<8x8xf32>
    %401 = math.exp %400 : vector<8x8xf32>
    %cst_137 = arith.constant dense<0.000000e+00> : vector<8xf32>
    %402 = vector.multi_reduction <add>, %401, %cst_137 [1] : vector<8x8xf32> to vector<8xf32>
    %403 = vector.shape_cast %402 : vector<8xf32> to vector<8x1xf32>
    %404 = tpu.reciprocal %403 {approx = true} : vector<8x1xf32> -> vector<8x1xf32>
    %405 = vector.broadcast %404 : vector<8x1xf32> to vector<8x8xf32>
    %406 = arith.mulf %401, %405 : vector<8x8xf32>
    %cst_138 = arith.constant dense<0.000000e+00> : vector<8x32xf32>
    %407 = tpu.matmul %272, %15, %cst_138 {dimension_numbers = #tpu.dot_dimension_numbers<[1], [0], [0], [1], [0, 0, 1, 1], [], []>} : vector<8x32xf32>, vector<32x32xf32>, vector<8x32xf32> -> vector<8x32xf32>
    %cst_139 = arith.constant dense<0.000000e+00> : vector<8x32xf32>
    %408 = tpu.matmul %406, %407, %cst_139 {dimension_numbers = #tpu.dot_dimension_numbers<[1], [0], [0], [1], [0, 0, 1, 1], [], []>} : vector<8x8xf32>, vector<8x32xf32>, vector<8x32xf32> -> vector<8x32xf32>
    %409 = arith.addf %392, %408 : vector<8x32xf32>
    %410 = arith.addf %389, %406 : vector<8x8xf32>
    %411 = vector.extract_strided_slice %372 {offsets = [0, 16], sizes = [8, 8], strides = [1, 1]} : vector<8x32xf32> to vector<8x8xf32>
    %412 = vector.extract_strided_slice %375 {offsets = [16, 0], sizes = [8, 8], strides = [1, 1]} : vector<32x8xf32> to vector<8x8xf32>
    %cst_140 = arith.constant dense<0.000000e+00> : vector<8x8xf32>
    %413 = tpu.matmul %411, %412, %cst_140 {dimension_numbers = #tpu.dot_dimension_numbers<[1], [0], [0], [1], [0, 0, 1, 1], [], []>} : vector<8x8xf32>, vector<8x8xf32>, vector<8x8xf32> -> vector<8x8xf32>
    %414 = arith.addf %413, %274 : vector<8x8xf32>
    %cst_141 = arith.constant dense<0xFF800000> : vector<8xf32>
    %415 = vector.multi_reduction <maximumf>, %414, %cst_141 [1] : vector<8x8xf32> to vector<8xf32>
    %416 = vector.shape_cast %415 : vector<8xf32> to vector<8x1xf32>
    %417 = vector.broadcast %416 : vector<8x1xf32> to vector<8x8xf32>
    %418 = arith.subf %414, %417 : vector<8x8xf32>
    %419 = math.exp %418 : vector<8x8xf32>
    %cst_142 = arith.constant dense<0.000000e+00> : vector<8xf32>
    %420 = vector.multi_reduction <add>, %419, %cst_142 [1] : vector<8x8xf32> to vector<8xf32>
    %421 = vector.shape_cast %420 : vector<8xf32> to vector<8x1xf32>
    %422 = tpu.reciprocal %421 {approx = true} : vector<8x1xf32> -> vector<8x1xf32>
    %423 = vector.broadcast %422 : vector<8x1xf32> to vector<8x8xf32>
    %424 = arith.mulf %419, %423 : vector<8x8xf32>
    %cst_143 = arith.constant dense<0.000000e+00> : vector<8x32xf32>
    %425 = tpu.matmul %272, %16, %cst_143 {dimension_numbers = #tpu.dot_dimension_numbers<[1], [0], [0], [1], [0, 0, 1, 1], [], []>} : vector<8x32xf32>, vector<32x32xf32>, vector<8x32xf32> -> vector<8x32xf32>
    %cst_144 = arith.constant dense<0.000000e+00> : vector<8x32xf32>
    %426 = tpu.matmul %424, %425, %cst_144 {dimension_numbers = #tpu.dot_dimension_numbers<[1], [0], [0], [1], [0, 0, 1, 1], [], []>} : vector<8x8xf32>, vector<8x32xf32>, vector<8x32xf32> -> vector<8x32xf32>
    %427 = arith.addf %409, %426 : vector<8x32xf32>
    %428 = arith.addf %410, %424 : vector<8x8xf32>
    %429 = vector.extract_strided_slice %372 {offsets = [0, 24], sizes = [8, 8], strides = [1, 1]} : vector<8x32xf32> to vector<8x8xf32>
    %430 = vector.extract_strided_slice %375 {offsets = [24, 0], sizes = [8, 8], strides = [1, 1]} : vector<32x8xf32> to vector<8x8xf32>
    %cst_145 = arith.constant dense<0.000000e+00> : vector<8x8xf32>
    %431 = tpu.matmul %429, %430, %cst_145 {dimension_numbers = #tpu.dot_dimension_numbers<[1], [0], [0], [1], [0, 0, 1, 1], [], []>} : vector<8x8xf32>, vector<8x8xf32>, vector<8x8xf32> -> vector<8x8xf32>
    %432 = arith.addf %431, %274 : vector<8x8xf32>
    %cst_146 = arith.constant dense<0xFF800000> : vector<8xf32>
    %433 = vector.multi_reduction <maximumf>, %432, %cst_146 [1] : vector<8x8xf32> to vector<8xf32>
    %434 = vector.shape_cast %433 : vector<8xf32> to vector<8x1xf32>
    %435 = vector.broadcast %434 : vector<8x1xf32> to vector<8x8xf32>
    %436 = arith.subf %432, %435 : vector<8x8xf32>
    %437 = math.exp %436 : vector<8x8xf32>
    %cst_147 = arith.constant dense<0.000000e+00> : vector<8xf32>
    %438 = vector.multi_reduction <add>, %437, %cst_147 [1] : vector<8x8xf32> to vector<8xf32>
    %439 = vector.shape_cast %438 : vector<8xf32> to vector<8x1xf32>
    %440 = tpu.reciprocal %439 {approx = true} : vector<8x1xf32> -> vector<8x1xf32>
    %441 = vector.broadcast %440 : vector<8x1xf32> to vector<8x8xf32>
    %442 = arith.mulf %437, %441 : vector<8x8xf32>
    %cst_148 = arith.constant dense<0.000000e+00> : vector<8x32xf32>
    %443 = tpu.matmul %272, %17, %cst_148 {dimension_numbers = #tpu.dot_dimension_numbers<[1], [0], [0], [1], [0, 0, 1, 1], [], []>} : vector<8x32xf32>, vector<32x32xf32>, vector<8x32xf32> -> vector<8x32xf32>
    %cst_149 = arith.constant dense<0.000000e+00> : vector<8x32xf32>
    %444 = tpu.matmul %442, %443, %cst_149 {dimension_numbers = #tpu.dot_dimension_numbers<[1], [0], [0], [1], [0, 0, 1, 1], [], []>} : vector<8x8xf32>, vector<8x32xf32>, vector<8x32xf32> -> vector<8x32xf32>
    %445 = arith.addf %427, %444 : vector<8x32xf32>
    %446 = arith.addf %428, %442 : vector<8x8xf32>
    %447 = arith.addf %370, %445 : vector<8x32xf32>
    %cst_150 = arith.constant dense<0.000000e+00> : vector<8xf32>
    %448 = vector.multi_reduction <add>, %447, %cst_150 [1] : vector<8x32xf32> to vector<8xf32>
    %449 = vector.shape_cast %448 : vector<8xf32> to vector<8x1xf32>
    %cst_151 = arith.constant 3.200000e+01 : f32
    %450 = vector.broadcast %cst_151 : f32 to vector<8x1xf32>
    %451 = arith.divf %449, %450 : vector<8x1xf32>
    %452 = vector.broadcast %451 : vector<8x1xf32> to vector<8x32xf32>
    %453 = arith.subf %447, %452 : vector<8x32xf32>
    %454 = vector.broadcast %451 : vector<8x1xf32> to vector<8x32xf32>
    %455 = arith.subf %447, %454 : vector<8x32xf32>
    %456 = arith.mulf %453, %455 : vector<8x32xf32>
    %cst_152 = arith.constant dense<0.000000e+00> : vector<8xf32>
    %457 = vector.multi_reduction <add>, %456, %cst_152 [1] : vector<8x32xf32> to vector<8xf32>
    %458 = vector.shape_cast %457 : vector<8xf32> to vector<8x1xf32>
    %cst_153 = arith.constant 3.200000e+01 : f32
    %459 = vector.broadcast %cst_153 : f32 to vector<8x1xf32>
    %460 = arith.divf %458, %459 : vector<8x1xf32>
    %461 = vector.broadcast %451 : vector<8x1xf32> to vector<8x32xf32>
    %462 = arith.subf %447, %461 : vector<8x32xf32>
    %cst_154 = arith.constant 9.99999974E-6 : f32
    %463 = vector.broadcast %cst_154 : f32 to vector<8x1xf32>
    %464 = arith.addf %460, %463 : vector<8x1xf32>
    %465 = math.rsqrt %464 : vector<8x1xf32>
    %466 = vector.broadcast %465 : vector<8x1xf32> to vector<8x32xf32>
    %467 = arith.mulf %462, %466 : vector<8x32xf32>
    %468 = arith.mulf %467, %26 : vector<8x32xf32>
    %469 = arith.addf %468, %29 : vector<8x32xf32>
    %cst_155 = arith.constant dense<0.000000e+00> : vector<8x32xf32>
    %470 = tpu.matmul %469, %18, %cst_155 {dimension_numbers = #tpu.dot_dimension_numbers<[1], [0], [0], [1], [0, 0, 1, 1], [], []>} : vector<8x32xf32>, vector<32x32xf32>, vector<8x32xf32> -> vector<8x32xf32>
    %471 = arith.addf %470, %22 : vector<8x32xf32>
    %cst_156 = arith.constant 0.000000e+00 : f32
    %472 = vector.broadcast %cst_156 : f32 to vector<8x32xf32>
    %473 = arith.maximumf %471, %472 : vector<8x32xf32>
    %cst_157 = arith.constant dense<0.000000e+00> : vector<8x32xf32>
    %474 = tpu.matmul %469, %19, %cst_157 {dimension_numbers = #tpu.dot_dimension_numbers<[1], [0], [0], [1], [0, 0, 1, 1], [], []>} : vector<8x32xf32>, vector<32x32xf32>, vector<8x32xf32> -> vector<8x32xf32>
    %475 = arith.addf %474, %23 : vector<8x32xf32>
    %cst_158 = arith.constant 0.000000e+00 : f32
    %476 = vector.broadcast %cst_158 : f32 to vector<8x32xf32>
    %477 = arith.maximumf %475, %476 : vector<8x32xf32>
    %cst_159 = arith.constant dense<0.000000e+00> : vector<8x32xf32>
    %478 = tpu.matmul %473, %20, %cst_159 {dimension_numbers = #tpu.dot_dimension_numbers<[1], [0], [0], [1], [0, 0, 1, 1], [], []>} : vector<8x32xf32>, vector<32x32xf32>, vector<8x32xf32> -> vector<8x32xf32>
    %cst_160 = arith.constant dense<0.000000e+00> : vector<8x32xf32>
    %479 = tpu.matmul %477, %21, %cst_160 {dimension_numbers = #tpu.dot_dimension_numbers<[1], [0], [0], [1], [0, 0, 1, 1], [], []>} : vector<8x32xf32>, vector<32x32xf32>, vector<8x32xf32> -> vector<8x32xf32>
    %480 = arith.addf %478, %479 : vector<8x32xf32>
    %481 = arith.addf %480, %24 : vector<8x32xf32>
    %482 = arith.addf %469, %481 : vector<8x32xf32>
    %cst_161 = arith.constant dense<0.000000e+00> : vector<8xf32>
    %483 = vector.multi_reduction <add>, %482, %cst_161 [1] : vector<8x32xf32> to vector<8xf32>
    %484 = vector.shape_cast %483 : vector<8xf32> to vector<8x1xf32>
    %cst_162 = arith.constant 3.200000e+01 : f32
    %485 = vector.broadcast %cst_162 : f32 to vector<8x1xf32>
    %486 = arith.divf %484, %485 : vector<8x1xf32>
    %487 = vector.broadcast %486 : vector<8x1xf32> to vector<8x32xf32>
    %488 = arith.subf %482, %487 : vector<8x32xf32>
    %489 = vector.broadcast %486 : vector<8x1xf32> to vector<8x32xf32>
    %490 = arith.subf %482, %489 : vector<8x32xf32>
    %491 = arith.mulf %488, %490 : vector<8x32xf32>
    %cst_163 = arith.constant dense<0.000000e+00> : vector<8xf32>
    %492 = vector.multi_reduction <add>, %491, %cst_163 [1] : vector<8x32xf32> to vector<8xf32>
    %493 = vector.shape_cast %492 : vector<8xf32> to vector<8x1xf32>
    %cst_164 = arith.constant 3.200000e+01 : f32
    %494 = vector.broadcast %cst_164 : f32 to vector<8x1xf32>
    %495 = arith.divf %493, %494 : vector<8x1xf32>
    %496 = vector.broadcast %486 : vector<8x1xf32> to vector<8x32xf32>
    %497 = arith.subf %482, %496 : vector<8x32xf32>
    %cst_165 = arith.constant 9.99999974E-6 : f32
    %498 = vector.broadcast %cst_165 : f32 to vector<8x1xf32>
    %499 = arith.addf %495, %498 : vector<8x1xf32>
    %500 = math.rsqrt %499 : vector<8x1xf32>
    %501 = vector.broadcast %500 : vector<8x1xf32> to vector<8x32xf32>
    %502 = arith.mulf %497, %501 : vector<8x32xf32>
    %503 = arith.mulf %502, %27 : vector<8x32xf32>
    %504 = arith.addf %503, %30 : vector<8x32xf32>
    %cst_166 = arith.constant 2.500000e-01 : f32
    %505 = vector.broadcast %cst_166 : f32 to vector<8x8xf32>
    %506 = arith.mulf %446, %505 : vector<8x8xf32>
    %cst_167 = arith.constant 0.000000e+00 : f32
    %507 = vector.broadcast %cst_167 : f32 to vector<8x48xf32>
    %508 = tpu.concatenate %266, %504, %268, %506, %507 in 1 : vector<8x32xf32>, vector<8x32xf32>, vector<8x8xf32>, vector<8x8xf32>, vector<8x48xf32> -> vector<8x128xf32>
    %c0_168 = arith.constant 0 : index
    %c0_169 = arith.constant 0 : index
    %509 = vector.load %arg2[%c0_168, %c0_169] : memref<8x128xf32, #tpu.memory_space<vmem>>, vector<8x128xf32>
    tpu.vector_store %arg2[%c0_168, %c0_169], %508 {strides = array<i32>} : memref<8x128xf32, #tpu.memory_space<vmem>>, vector<8x128xf32>,
    return
  }
}

</mosaic_0001>

<llo_original>
// kernel: decoder_layer_forward.1
$region0: #{decoder_layer_forward.1}
  #allocation0 [shape = 'u32[]', space=smem, size = 0x4, offset = 0x4, fixed_abs, tag = 'smem constant byte address 0x4 - core index']
  #allocation1 [shape = 'u32[144,128]{1,0:T(1,128)}', space=vmem, size = 0x12000, scoped, tag = 'internal scratch']
  %s0 = inlined_call_operand.vmem [shape: f32[2,32,32], index: 0, kind: input, shape index: {}]
  %s1 = inlined_call_operand.vmem [shape: f32[632,32], index: 1, kind: input, shape index: {}]
  %s2 = inlined_call_operand.vmem [shape: f32[8,128], index: 2, kind: output, shape index: {}]
  %s3 = sld [smem:[#allocation0]]
  $region18: #{decoder_layer_forward.1} parent=0
    _
  %s5 = ssub.s32 1, %s3
  %s6 = scalar_select 0, %s5, %s3
  // Predicated region
  $region2: #{decoder_layer_forward.1} parent=0 // pred_check
    _
  $region3: #{decoder_layer_forward.1} parent=0 // pred_check_branch
    %8 = sbr.rel (0) target = $region5
  $region4: #{decoder_layer_forward.1} parent=0 // pred_region
    _
  $region5: #{decoder_layer_forward.1} parent=0 // pred_fallthru
    _
  // Predicated region
  $region6: #{decoder_layer_forward.1} parent=0 // pred_check
    _
  $region7: #{decoder_layer_forward.1} parent=0 // pred_check_branch
    %10 = sbr.rel (0) target = $region9
  $region8: #{decoder_layer_forward.1} parent=0 // pred_region
    _
  $region9: #{decoder_layer_forward.1} parent=0 // pred_fallthru
    _
  %v11 = vld [vmem:[%s1] sm:$0xff]
  %v12 = vld [vmem:[%s1 + $0x8] sm:$0xff]
  %v13 = vld [vmem:[%s1 + $0x10] sm:$0xff]
  %v14 = vld [vmem:[%s1 + $0x18] sm:$0xff]
  %v15 = vld [vmem:[%s1 + $0x200] sm:$0xff]
  %v16 = vld [vmem:[%s1 + $0x20] sm:$0xff]
  %v17 = vld [vmem:[%s1 + $0x28] sm:$0xff]
  %v18 = vld [vmem:[%s1 + $0x30] sm:$0xff]
  %v19 = vld [vmem:[%s1 + $0x38] sm:$0xff]
  %v20 = vld [vmem:[%s1 + $0x208] sm:$0xff]
  %v21 = vld [vmem:[%s1 + $0x210] sm:$0xff]
  %v22 = vld [vmem:[%s1 + $0xc0] sm:$0xff]
  %v23 = vld [vmem:[%s1 + $0xc8] sm:$0xff]
  %v24 = vld [vmem:[%s1 + $0xd0] sm:$0xff]
  %v25 = vld [vmem:[%s1 + $0xd8] sm:$0xff]
  %v26 = vld [vmem:[%s1 + $0x218] sm:$0xff]
  %v27 = vld [vmem:[%s1 + $0xe0] sm:$0xff]
  %v28 = vld [vmem:[%s1 + $0xe8] sm:$0xff]
  %v29 = vld [vmem:[%s1 + $0xf0] sm:$0xff]
  %v30 = vld [vmem:[%s1 + $0xf8] sm:$0xff]
  %v31 = vld [vmem:[%s1 + $0x220] sm:$0xff]
  %v32 = vld [vmem:[%s1 + $0x228] sm:$0xff]
  %v33 = vld [vmem:[%s1 + $0x40] sm:$0xff]
  %v34 = vld [vmem:[%s1 + $0x48] sm:$0xff]
  %v35 = vld [vmem:[%s1 + $0x50] sm:$0xff]
  %v36 = vld [vmem:[%s1 + $0x58] sm:$0xff]
  %v37 = vld [vmem:[%s1 + $0x60] sm:$0xff]
  %v38 = vld [vmem:[%s1 + $0x68] sm:$0xff]
  %v39 = vld [vmem:[%s1 + $0x70] sm:$0xff]
  %v40 = vld [vmem:[%s1 + $0x78] sm:$0xff]
  %v41 = vld [vmem:[%s1 + $0x80] sm:$0xff]
  %v42 = vld [vmem:[%s1 + $0x88] sm:$0xff]
  %v43 = vld [vmem:[%s1 + $0x90] sm:$0xff]
  %v44 = vld [vmem:[%s1 + $0x98] sm:$0xff]
  %v45 = vld [vmem:[%s1 + $0xa0] sm:$0xff]
  %v46 = vld [vmem:[%s1 + $0xa8] sm:$0xff]
  %v47 = vld [vmem:[%s1 + $0xb0] sm:$0xff]
  %v48 = vld [vmem:[%s1 + $0xb8] sm:$0xff]
  %v49 = vld [vmem:[%s1 + $0x100] sm:$0xff]
  %v50 = vld [vmem:[%s1 + $0x108] sm:$0xff]
  %v51 = vld [vmem:[%s1 + $0x110] sm:$0xff]
  %v52 = vld [vmem:[%s1 + $0x118] sm:$0xff]
  %v53 = vld [vmem:[%s1 + $0x120] sm:$0xff]
  %v54 = vld [vmem:[%s1 + $0x128] sm:$0xff]
  %v55 = vld [vmem:[%s1 + $0x130] sm:$0xff]
  %v56 = vld [vmem:[%s1 + $0x138] sm:$0xff]
  %v57 = vld [vmem:[%s1 + $0x140] sm:$0xff]
  %v58 = vld [vmem:[%s1 + $0x148] sm:$0xff]
  %v59 = vld [vmem:[%s1 + $0x150] sm:$0xff]
  %v60 = vld [vmem:[%s1 + $0x158] sm:$0xff]
  %v61 = vld [vmem:[%s1 + $0x160] sm:$0xff]
  %v62 = vld [vmem:[%s1 + $0x168] sm:$0xff]
  %v63 = vld [vmem:[%s1 + $0x170] sm:$0xff]
  %v64 = vld [vmem:[%s1 + $0x178] sm:$0xff]
  %v65 = vld [vmem:[%s1 + $0x180] sm:$0xff]
  %v66 = vld [vmem:[%s1 + $0x188] sm:$0xff]
  %v67 = vld [vmem:[%s1 + $0x190] sm:$0xff]
  %v68 = vld [vmem:[%s1 + $0x198] sm:$0xff]
  %v69 = vld [vmem:[%s1 + $0x1a0] sm:$0xff]
  %v70 = vld [vmem:[%s1 + $0x1a8] sm:$0xff]
  %v71 = vld [vmem:[%s1 + $0x1b0] sm:$0xff]
  %v72 = vld [vmem:[%s1 + $0x1b8] sm:$0xff]
  %v73 = vld [vmem:[%s1 + $0x1c0] sm:$0xff]
  %v74 = vld [vmem:[%s1 + $0x1c8] sm:$0xff]
  %v75 = vld [vmem:[%s1 + $0x1d0] sm:$0xff]
  %v76 = vld [vmem:[%s1 + $0x1d8] sm:$0xff]
  %v77 = vld [vmem:[%s1 + $0x1e0] sm:$0xff]
  %v78 = vld [vmem:[%s1 + $0x1e8] sm:$0xff]
  %v79 = vld [vmem:[%s1 + $0x1f0] sm:$0xff]
  %v80 = vld [vmem:[%s1 + $0x1f8] sm:$0xff]
  %v81 = vld [vmem:[%s1 + $0x230] sm:$0xff]
  %v82 = vld [vmem:[%s1 + $0x238] sm:$0xff]
  %v83 = vld [vmem:[%s1 + $0x240] sm:$0xff]
  %v84 = vld [vmem:[%s1 + $0x248] sm:$0xff]
  %v85 = vld [vmem:[%s1 + $0x258] sm:$0xff]
  %v86 = vld [vmem:[%s1 + $0x268] sm:$0xff]
  %v87 = vld [vmem:[%s1 + $0x250] sm:$0xff]
  %v88 = vld [vmem:[%s1 + $0x260] sm:$0xff]
  %v89 = vld [vmem:[%s1 + $0x270] sm:$0xff]
  %v90 = vld [vmem:[%s0] sm:$0xff]
  %v91 = vld [vmem:[%s0 + $0x8] sm:$0xff]
  %v92 = vld [vmem:[%s0 + $0x10] sm:$0xff]
  %v93 = vld [vmem:[%s0 + $0x18] sm:$0xff]
  %vm94 = vcmask 261120
  %v96 = vsel %vm94, %v90, 0
  %98 = vmatprep.subr.mxu0 0.0
  %99 = vmatpush1.msra.mxu0 %v11
  %100 = vmatprep.subr.mxu0 0.0
  %101 = vmatpush1.msra.mxu0 %v12
  %102 = vmatprep.subr.mxu0 0.0
  %103 = vmatpush1.msra.mxu0 %v13
  %104 = vmatprep.subr.mxu0 0.0
  %105 = vmatpush1.msra.mxu0 %v14
  %106 = vmatprep.subr.mxu0 0.0
  %107 = vmatpush1.msra.mxu0 0.0
  %108 = vmatprep.subr.mxu0 0.0
  %109 = vmatpush1.msra.mxu0 0.0
  %110 = vmatprep.subr.mxu0 0.0
  %111 = vmatpush1.msra.mxu0 0.0
  %112 = vmatprep.subr.mxu0 0.0
  %113 = vmatpush1.msra.mxu0 0.0
  %114 = vmatprep.subr.mxu0 0.0
  %115 = vmatpush1.msra.mxu0 0.0
  %116 = vmatprep.subr.mxu0 0.0
  %117 = vmatpush1.msra.mxu0 0.0
  %118 = vmatprep.subr.mxu0 0.0
  %119 = vmatpush1.msra.mxu0 0.0
  %120 = vmatprep.subr.mxu0 0.0
  %121 = vmatpush1.msra.mxu0 0.0
  %122 = vmatprep.subr.mxu0 0.0
  %123 = vmatpush1.msra.mxu0 0.0
  %124 = vmatprep.subr.mxu0 0.0
  %125 = vmatpush1.msra.mxu0 0.0
  %126 = vmatprep.subr.mxu0 0.0
  %127 = vmatpush1.msra.mxu0 0.0
  %128 = vmatprep.subr.mxu0 0.0
  %129 = vmatpush1.msra.mxu0 0.0
  %130 = vmatprep.subr.mxu0 0.0
  %131 = vmatpush1.msra.mxu0 0.0
  %132 = vmatprep.subr.mxu0 0.0
  %133 = vmatpush1.msra.mxu0 0.0
  %134 = vmatprep.subr.mxu0 0.0
  %135 = vmatpush1.msra.mxu0 0.0
  %136 = vmatprep.subr.mxu0 0.0
  %137 = vmatpush1.msra.mxu0 0.0
  %138 = vmatprep.subr.mxu0 0.0
  %139 = vmatpush1.msra.mxu0 0.0
  %140 = vmatprep.subr.mxu0 0.0
  %141 = vmatpush1.msra.mxu0 0.0
  %142 = vmatprep.subr.mxu0 0.0
  %143 = vmatpush1.msra.mxu0 0.0
  %144 = vmatprep.subr.mxu0 0.0
  %145 = vmatpush1.msra.mxu0 0.0
  %146 = vmatprep.subr.mxu0 0.0
  %147 = vmatpush1.msra.mxu0 0.0
  %148 = vmatprep.subr.mxu0 0.0
  %149 = vmatpush1.msra.mxu0 0.0
  %150 = vmatprep.subr.mxu0 0.0
  %151 = vmatpush1.msra.mxu0 0.0
  %152 = vmatprep.subr.mxu0 0.0
  %153 = vmatpush1.msra.mxu0 0.0
  %154 = vmatprep.subr.mxu0 0.0
  %155 = vmatpush1.msra.mxu0 0.0
  %156 = vmatprep.subr.mxu0 0.0
  %157 = vmatpush1.msra.mxu0 0.0
  %158 = vmatprep.subr.mxu0 0.0
  %159 = vmatpush1.msra.mxu0 0.0
  %160 = vmatprep.subr.mxu0 0.0
  %161 = vmatpush1.msra.mxu0 0.0
  %162 = vmatprep.mubr.f32.mxu0 0.0
  %163 = vmatmul.mubr.f32.gmra.mrb[0].mxu0 %v96
  %v164 = vpop.f32.mrb[0].mxu0
  %v165 = vadd.f32 %v15, %v164
  %v166 = vpop.f32.mrb[0].mxu0
  %167 = vdwg.mxu0
  %168 = vmatprep.subr.mxu0 0.0
  %169 = vmatpush1.msra.mxu0 %v16
  %170 = vmatprep.subr.mxu0 0.0
  %171 = vmatpush1.msra.mxu0 %v17
  %172 = vmatprep.subr.mxu0 0.0
  %173 = vmatpush1.msra.mxu0 %v18
  %174 = vmatprep.subr.mxu0 0.0
  %175 = vmatpush1.msra.mxu0 %v19
  %176 = vmatprep.subr.mxu0 0.0
  %177 = vmatpush1.msra.mxu0 0.0
  %178 = vmatprep.subr.mxu0 0.0
  %179 = vmatpush1.msra.mxu0 0.0
  %180 = vmatprep.subr.mxu0 0.0
  %181 = vmatpush1.msra.mxu0 0.0
  %182 = vmatprep.subr.mxu0 0.0
  %183 = vmatpush1.msra.mxu0 0.0
  %184 = vmatprep.subr.mxu0 0.0
  %185 = vmatpush1.msra.mxu0 0.0
  %186 = vmatprep.subr.mxu0 0.0
  %187 = vmatpush1.msra.mxu0 0.0
  %188 = vmatprep.subr.mxu0 0.0
  %189 = vmatpush1.msra.mxu0 0.0
  %190 = vmatprep.subr.mxu0 0.0
  %191 = vmatpush1.msra.mxu0 0.0
  %192 = vmatprep.subr.mxu0 0.0
  %193 = vmatpush1.msra.mxu0 0.0
  %194 = vmatprep.subr.mxu0 0.0
  %195 = vmatpush1.msra.mxu0 0.0
  %196 = vmatprep.subr.mxu0 0.0
  %197 = vmatpush1.msra.mxu0 0.0
  %198 = vmatprep.subr.mxu0 0.0
  %199 = vmatpush1.msra.mxu0 0.0
  %200 = vmatprep.subr.mxu0 0.0
  %201 = vmatpush1.msra.mxu0 0.0
  %202 = vmatprep.subr.mxu0 0.0
  %203 = vmatpush1.msra.mxu0 0.0
  %204 = vmatprep.subr.mxu0 0.0
  %205 = vmatpush1.msra.mxu0 0.0
  %206 = vmatprep.subr.mxu0 0.0
  %207 = vmatpush1.msra.mxu0 0.0
  %208 = vmatprep.subr.mxu0 0.0
  %209 = vmatpush1.msra.mxu0 0.0
  %210 = vmatprep.subr.mxu0 0.0
  %211 = vmatpush1.msra.mxu0 0.0
  %212 = vmatprep.subr.mxu0 0.0
  %213 = vmatpush1.msra.mxu0 0.0
  %214 = vmatprep.subr.mxu0 0.0
  %215 = vmatpush1.msra.mxu0 0.0
  %216 = vmatprep.subr.mxu0 0.0
  %217 = vmatpush1.msra.mxu0 0.0
  %218 = vmatprep.subr.mxu0 0.0
  %219 = vmatpush1.msra.mxu0 0.0
  %220 = vmatprep.subr.mxu0 0.0
  %221 = vmatpush1.msra.mxu0 0.0
  %222 = vmatprep.subr.mxu0 0.0
  %223 = vmatpush1.msra.mxu0 0.0
  %224 = vmatprep.subr.mxu0 0.0
  %225 = vmatpush1.msra.mxu0 0.0
  %226 = vmatprep.subr.mxu0 0.0
  %227 = vmatpush1.msra.mxu0 0.0
  %228 = vmatprep.subr.mxu0 0.0
  %229 = vmatpush1.msra.mxu0 0.0
  %230 = vmatprep.subr.mxu0 0.0
  %231 = vmatpush1.msra.mxu0 0.0
  %232 = vmatprep.mubr.f32.mxu0 0.0
  %233 = vmatmul.mubr.f32.gmra.mrb[0].mxu0 %v96
  %v234 = vpop.f32.mrb[0].mxu0
  %v235 = vadd.f32 %v20, %v234
  %v236 = vpop.f32.mrb[0].mxu0
  %237 = vdwg.mxu0
  %vm238 = vcmask 64512
  %v240 = vsel %vm238, %v165, 0
  %v243 = vsel %vm238, %v235, 0
  %245 = vmatprep.subr.mxu0 0.0
  %246 = vmatpush1.xpose.msra.mxu0 %v243
  %247 = vmatprep.subr.mxu0 0.0
  %248 = vmatpush1.xpose.msra.mxu0 0.0
  %249 = vmatprep.subr.mxu0 0.0
  %250 = vmatpush1.xpose.msra.mxu0 0.0
  %251 = vmatprep.subr.mxu0 0.0
  %252 = vmatpush1.xpose.msra.mxu0 0.0
  %253 = vmatprep.subr.mxu0 0.0
  %254 = vmatpush1.xpose.msra.mxu0 0.0
  %255 = vmatprep.subr.mxu0 0.0
  %256 = vmatpush1.xpose.msra.mxu0 0.0
  %257 = vmatprep.subr.mxu0 0.0
  %258 = vmatpush1.xpose.msra.mxu0 0.0
  %259 = vmatprep.subr.mxu0 0.0
  %260 = vmatpush1.xpose.msra.mxu0 0.0
  %261 = vmatprep.subr.mxu0 0.0
  %262 = vmatpush1.xpose.msra.mxu0 0.0
  %263 = vmatprep.subr.mxu0 0.0
  %264 = vmatpush1.xpose.msra.mxu0 0.0
  %265 = vmatprep.subr.mxu0 0.0
  %266 = vmatpush1.xpose.msra.mxu0 0.0
  %267 = vmatprep.subr.mxu0 0.0
  %268 = vmatpush1.xpose.msra.mxu0 0.0
  %269 = vmatprep.subr.mxu0 0.0
  %270 = vmatpush1.xpose.msra.mxu0 0.0
  %271 = vmatprep.subr.mxu0 0.0
  %272 = vmatpush1.xpose.msra.mxu0 0.0
  %273 = vmatprep.subr.mxu0 0.0
  %274 = vmatpush1.xpose.msra.mxu0 0.0
  %275 = vmatprep.subr.mxu0 0.0
  %276 = vmatpush1.xpose.msra.mxu0 0.0
  %277 = vmatprep.subr.mxu0 0.0
  %278 = vmatpush1.xpose.msra.mxu0 0.0
  %279 = vmatprep.subr.mxu0 0.0
  %280 = vmatpush1.xpose.msra.mxu0 0.0
  %281 = vmatprep.subr.mxu0 0.0
  %282 = vmatpush1.xpose.msra.mxu0 0.0
  %283 = vmatprep.subr.mxu0 0.0
  %284 = vmatpush1.xpose.msra.mxu0 0.0
  %285 = vmatprep.subr.mxu0 0.0
  %286 = vmatpush1.xpose.msra.mxu0 0.0
  %287 = vmatprep.subr.mxu0 0.0
  %288 = vmatpush1.xpose.msra.mxu0 0.0
  %289 = vmatprep.subr.mxu0 0.0
  %290 = vmatpush1.xpose.msra.mxu0 0.0
  %291 = vmatprep.subr.mxu0 0.0
  %292 = vmatpush1.xpose.msra.mxu0 0.0
  %293 = vmatprep.subr.mxu0 0.0
  %294 = vmatpush1.xpose.msra.mxu0 0.0
  %295 = vmatprep.subr.mxu0 0.0
  %296 = vmatpush1.xpose.msra.mxu0 0.0
  %297 = vmatprep.subr.mxu0 0.0
  %298 = vmatpush1.xpose.msra.mxu0 0.0
  %299 = vmatprep.subr.mxu0 0.0
  %300 = vmatpush1.xpose.msra.mxu0 0.0
  %301 = vmatprep.subr.mxu0 0.0
  %302 = vmatpush1.xpose.msra.mxu0 0.0
  %303 = vmatprep.subr.mxu0 0.0
  %304 = vmatpush1.xpose.msra.mxu0 0.0
  %305 = vmatprep.subr.mxu0 0.0
  %306 = vmatpush1.xpose.msra.mxu0 0.0
  %307 = vmatprep.subr.mxu0 0.0
  %308 = vmatpush1.xpose.msra.mxu0 0.0
  %309 = vmatprep.mubr.f32.mxu0 0.0
  %310 = vmatmul.mubr.f32.gmra.mrb[0].mxu0 %v240
  %v311 = vpop.f32.mrb[0].mxu0
  %v312 = vadd.f32 %v92, %v311
  %v313 = vpop.f32.mrb[0].mxu0
  %314 = vdwg.mxu0
  %v315 = vsel %vm238, %v312, -inf
  %316 = vmax.xlane.f32.xlu0 %v315
  %v317 = vpop.xlane.xlu0 %316
  %v318 = vsub.f32 %v312, %v317
  %v319 = vmul.f32 %v318, 1.442695
  %v320 = vpow.pop %v319
  %v321 = vsel %vm238, %v320, 0.0
  %322 = vadd.xlane.f32.xlu0 %v321
  %v323 = vpop.xlane.xlu0 %322
  %v324 = vrcp.pop %v323
  %v325 = vmul.f32 %v320, %v324
  %326 = vmatprep.subr.mxu0 0.0
  %327 = vmatpush1.msra.mxu0 %v33
  %328 = vmatprep.subr.mxu0 0.0
  %329 = vmatpush1.msra.mxu0 %v34
  %330 = vmatprep.subr.mxu0 0.0
  %331 = vmatpush1.msra.mxu0 %v35
  %332 = vmatprep.subr.mxu0 0.0
  %333 = vmatpush1.msra.mxu0 %v36
  %334 = vmatprep.subr.mxu0 0.0
  %335 = vmatpush1.msra.mxu0 0.0
  %336 = vmatprep.subr.mxu0 0.0
  %337 = vmatpush1.msra.mxu0 0.0
  %338 = vmatprep.subr.mxu0 0.0
  %339 = vmatpush1.msra.mxu0 0.0
  %340 = vmatprep.subr.mxu0 0.0
  %341 = vmatpush1.msra.mxu0 0.0
  %342 = vmatprep.subr.mxu0 0.0
  %343 = vmatpush1.msra.mxu0 0.0
  %344 = vmatprep.subr.mxu0 0.0
  %345 = vmatpush1.msra.mxu0 0.0
  %346 = vmatprep.subr.mxu0 0.0
  %347 = vmatpush1.msra.mxu0 0.0
  %348 = vmatprep.subr.mxu0 0.0
  %349 = vmatpush1.msra.mxu0 0.0
  %350 = vmatprep.subr.mxu0 0.0
  %351 = vmatpush1.msra.mxu0 0.0
  %352 = vmatprep.subr.mxu0 0.0
  %353 = vmatpush1.msra.mxu0 0.0
  %354 = vmatprep.subr.mxu0 0.0
  %355 = vmatpush1.msra.mxu0 0.0
  %356 = vmatprep.subr.mxu0 0.0
  %357 = vmatpush1.msra.mxu0 0.0
  %358 = vmatprep.subr.mxu0 0.0
  %359 = vmatpush1.msra.mxu0 0.0
  %360 = vmatprep.subr.mxu0 0.0
  %361 = vmatpush1.msra.mxu0 0.0
  %362 = vmatprep.subr.mxu0 0.0
  %363 = vmatpush1.msra.mxu0 0.0
  %364 = vmatprep.subr.mxu0 0.0
  %365 = vmatpush1.msra.mxu0 0.0
  %366 = vmatprep.subr.mxu0 0.0
  %367 = vmatpush1.msra.mxu0 0.0
  %368 = vmatprep.subr.mxu0 0.0
  %369 = vmatpush1.msra.mxu0 0.0
  %370 = vmatprep.subr.mxu0 0.0
  %371 = vmatpush1.msra.mxu0 0.0
  %372 = vmatprep.subr.mxu0 0.0
  %373 = vmatpush1.msra.mxu0 0.0
  %374 = vmatprep.subr.mxu0 0.0
  %375 = vmatpush1.msra.mxu0 0.0
  %376 = vmatprep.subr.mxu0 0.0
  %377 = vmatpush1.msra.mxu0 0.0
  %378 = vmatprep.subr.mxu0 0.0
  %379 = vmatpush1.msra.mxu0 0.0
  %380 = vmatprep.subr.mxu0 0.0
  %381 = vmatpush1.msra.mxu0 0.0
  %382 = vmatprep.subr.mxu0 0.0
  %383 = vmatpush1.msra.mxu0 0.0
  %384 = vmatprep.subr.mxu0 0.0
  %385 = vmatpush1.msra.mxu0 0.0
  %386 = vmatprep.subr.mxu0 0.0
  %387 = vmatpush1.msra.mxu0 0.0
  %388 = vmatprep.subr.mxu0 0.0
  %389 = vmatpush1.msra.mxu0 0.0
  %390 = vmatprep.mubr.f32.mxu0 0.0
  %391 = vmatmul.mubr.f32.gmra.mrb[0].mxu0 %v96
  %v392 = vpop.f32.mrb[0].mxu0
  %v393 = vadd.f32 0.0, %v392
  %v394 = vpop.f32.mrb[0].mxu0
  %395 = vdwg.mxu0
  %v397 = vsel %vm238, %v325, 0
  %399 = vmatprep.subr.mxu0 0.0
  %400 = vmatpush1.msra.mxu0 %v393
  %401 = vmatprep.subr.mxu0 0.0
  %402 = vmatpush1.msra.mxu0 0.0
  %403 = vmatprep.subr.mxu0 0.0
  %404 = vmatpush1.msra.mxu0 0.0
  %405 = vmatprep.subr.mxu0 0.0
  %406 = vmatpush1.msra.mxu0 0.0
  %407 = vmatprep.subr.mxu0 0.0
  %408 = vmatpush1.msra.mxu0 0.0
  %409 = vmatprep.subr.mxu0 0.0
  %410 = vmatpush1.msra.mxu0 0.0
  %411 = vmatprep.subr.mxu0 0.0
  %412 = vmatpush1.msra.mxu0 0.0
  %413 = vmatprep.subr.mxu0 0.0
  %414 = vmatpush1.msra.mxu0 0.0
  %415 = vmatprep.subr.mxu0 0.0
  %416 = vmatpush1.msra.mxu0 0.0
  %417 = vmatprep.subr.mxu0 0.0
  %418 = vmatpush1.msra.mxu0 0.0
  %419 = vmatprep.subr.mxu0 0.0
  %420 = vmatpush1.msra.mxu0 0.0
  %421 = vmatprep.subr.mxu0 0.0
  %422 = vmatpush1.msra.mxu0 0.0
  %423 = vmatprep.subr.mxu0 0.0
  %424 = vmatpush1.msra.mxu0 0.0
  %425 = vmatprep.subr.mxu0 0.0
  %426 = vmatpush1.msra.mxu0 0.0
  %427 = vmatprep.subr.mxu0 0.0
  %428 = vmatpush1.msra.mxu0 0.0
  %429 = vmatprep.subr.mxu0 0.0
  %430 = vmatpush1.msra.mxu0 0.0
  %431 = vmatprep.subr.mxu0 0.0
  %432 = vmatpush1.msra.mxu0 0.0
  %433 = vmatprep.subr.mxu0 0.0
  %434 = vmatpush1.msra.mxu0 0.0
  %435 = vmatprep.subr.mxu0 0.0
  %436 = vmatpush1.msra.mxu0 0.0
  %437 = vmatprep.subr.mxu0 0.0
  %438 = vmatpush1.msra.mxu0 0.0
  %439 = vmatprep.subr.mxu0 0.0
  %440 = vmatpush1.msra.mxu0 0.0
  %441 = vmatprep.subr.mxu0 0.0
  %442 = vmatpush1.msra.mxu0 0.0
  %443 = vmatprep.subr.mxu0 0.0
  %444 = vmatpush1.msra.mxu0 0.0
  %445 = vmatprep.subr.mxu0 0.0
  %446 = vmatpush1.msra.mxu0 0.0
  %447 = vmatprep.subr.mxu0 0.0
  %448 = vmatpush1.msra.mxu0 0.0
  %449 = vmatprep.subr.mxu0 0.0
  %450 = vmatpush1.msra.mxu0 0.0
  %451 = vmatprep.subr.mxu0 0.0
  %452 = vmatpush1.msra.mxu0 0.0
  %453 = vmatprep.subr.mxu0 0.0
  %454 = vmatpush1.msra.mxu0 0.0
  %455 = vmatprep.subr.mxu0 0.0
  %456 = vmatpush1.msra.mxu0 0.0
  %457 = vmatprep.subr.mxu0 0.0
  %458 = vmatpush1.msra.mxu0 0.0
  %459 = vmatprep.subr.mxu0 0.0
  %460 = vmatpush1.msra.mxu0 0.0
  %461 = vmatprep.subr.mxu0 0.0
  %462 = vmatpush1.msra.mxu0 0.0
  %463 = vmatprep.mubr.f32.mxu0 0.0
  %464 = vmatmul.mubr.f32.gmra.mrb[0].mxu0 %v397
  %v465 = vpop.f32.mrb[0].mxu0
  %v466 = vadd.f32 0.0, %v465
  %v467 = vpop.f32.mrb[0].mxu0
  %468 = vdwg.mxu0
  %v469 = vadd.f32 %v21, %v466
  %470 = vrot.lane.b32.xlu0 %v165, 120
  %v471 = vpop.permute.xlu0 %470
  %472 = vrot.lane.b32.xlu0 %v235, 120
  %v473 = vpop.permute.xlu0 %472
  %v474 = vsel %vm238, %v471, 0
  %v476 = vsel %vm238, %v473, 0
  %478 = vmatprep.subr.mxu0 0.0
  %479 = vmatpush1.xpose.msra.mxu0 %v476
  %480 = vmatprep.subr.mxu0 0.0
  %481 = vmatpush1.xpose.msra.mxu0 0.0
  %482 = vmatprep.subr.mxu0 0.0
  %483 = vmatpush1.xpose.msra.mxu0 0.0
  %484 = vmatprep.subr.mxu0 0.0
  %485 = vmatpush1.xpose.msra.mxu0 0.0
  %486 = vmatprep.subr.mxu0 0.0
  %487 = vmatpush1.xpose.msra.mxu0 0.0
  %488 = vmatprep.subr.mxu0 0.0
  %489 = vmatpush1.xpose.msra.mxu0 0.0
  %490 = vmatprep.subr.mxu0 0.0
  %491 = vmatpush1.xpose.msra.mxu0 0.0
  %492 = vmatprep.subr.mxu0 0.0
  %493 = vmatpush1.xpose.msra.mxu0 0.0
  %494 = vmatprep.subr.mxu0 0.0
  %495 = vmatpush1.xpose.msra.mxu0 0.0
  %496 = vmatprep.subr.mxu0 0.0
  %497 = vmatpush1.xpose.msra.mxu0 0.0
  %498 = vmatprep.subr.mxu0 0.0
  %499 = vmatpush1.xpose.msra.mxu0 0.0
  %500 = vmatprep.subr.mxu0 0.0
  %501 = vmatpush1.xpose.msra.mxu0 0.0
  %502 = vmatprep.subr.mxu0 0.0
  %503 = vmatpush1.xpose.msra.mxu0 0.0
  %504 = vmatprep.subr.mxu0 0.0
  %505 = vmatpush1.xpose.msra.mxu0 0.0
  %506 = vmatprep.subr.mxu0 0.0
  %507 = vmatpush1.xpose.msra.mxu0 0.0
  %508 = vmatprep.subr.mxu0 0.0
  %509 = vmatpush1.xpose.msra.mxu0 0.0
  %510 = vmatprep.subr.mxu0 0.0
  %511 = vmatpush1.xpose.msra.mxu0 0.0
  %512 = vmatprep.subr.mxu0 0.0
  %513 = vmatpush1.xpose.msra.mxu0 0.0
  %514 = vmatprep.subr.mxu0 0.0
  %515 = vmatpush1.xpose.msra.mxu0 0.0
  %516 = vmatprep.subr.mxu0 0.0
  %517 = vmatpush1.xpose.msra.mxu0 0.0
  %518 = vmatprep.subr.mxu0 0.0
  %519 = vmatpush1.xpose.msra.mxu0 0.0
  %520 = vmatprep.subr.mxu0 0.0
  %521 = vmatpush1.xpose.msra.mxu0 0.0
  %522 = vmatprep.subr.mxu0 0.0
  %523 = vmatpush1.xpose.msra.mxu0 0.0
  %524 = vmatprep.subr.mxu0 0.0
  %525 = vmatpush1.xpose.msra.mxu0 0.0
  %526 = vmatprep.subr.mxu0 0.0
  %527 = vmatpush1.xpose.msra.mxu0 0.0
  %528 = vmatprep.subr.mxu0 0.0
  %529 = vmatpush1.xpose.msra.mxu0 0.0
  %530 = vmatprep.subr.mxu0 0.0
  %531 = vmatpush1.xpose.msra.mxu0 0.0
  %532 = vmatprep.subr.mxu0 0.0
  %533 = vmatpush1.xpose.msra.mxu0 0.0
  %534 = vmatprep.subr.mxu0 0.0
  %535 = vmatpush1.xpose.msra.mxu0 0.0
  %536 = vmatprep.subr.mxu0 0.0
  %537 = vmatpush1.xpose.msra.mxu0 0.0
  %538 = vmatprep.subr.mxu0 0.0
  %539 = vmatpush1.xpose.msra.mxu0 0.0
  %540 = vmatprep.subr.mxu0 0.0
  %541 = vmatpush1.xpose.msra.mxu0 0.0
  %542 = vmatprep.mubr.f32.mxu0 0.0
  %543 = vmatmul.mubr.f32.gmra.mrb[0].mxu0 %v474
  %v544 = vpop.f32.mrb[0].mxu0
  %v545 = vadd.f32 %v92, %v544
  %v546 = vpop.f32.mrb[0].mxu0
  %547 = vdwg.mxu0
  %v548 = vsel %vm238, %v545, -inf
  %549 = vmax.xlane.f32.xlu0 %v548
  %v550 = vpop.xlane.xlu0 %549
  %v551 = vsub.f32 %v545, %v550
  %v552 = vmul.f32 %v551, 1.442695
  %v553 = vpow.pop %v552
  %v554 = vsel %vm238, %v553, 0.0
  %555 = vadd.xlane.f32.xlu0 %v554
  %v556 = vpop.xlane.xlu0 %555
  %v557 = vrcp.pop %v556
  %v558 = vmul.f32 %v553, %v557
  %559 = vmatprep.subr.mxu0 0.0
  %560 = vmatpush1.msra.mxu0 %v37
  %561 = vmatprep.subr.mxu0 0.0
  %562 = vmatpush1.msra.mxu0 %v38
  %563 = vmatprep.subr.mxu0 0.0
  %564 = vmatpush1.msra.mxu0 %v39
  %565 = vmatprep.subr.mxu0 0.0
  %566 = vmatpush1.msra.mxu0 %v40
  %567 = vmatprep.subr.mxu0 0.0
  %568 = vmatpush1.msra.mxu0 0.0
  %569 = vmatprep.subr.mxu0 0.0
  %570 = vmatpush1.msra.mxu0 0.0
  %571 = vmatprep.subr.mxu0 0.0
  %572 = vmatpush1.msra.mxu0 0.0
  %573 = vmatprep.subr.mxu0 0.0
  %574 = vmatpush1.msra.mxu0 0.0
  %575 = vmatprep.subr.mxu0 0.0
  %576 = vmatpush1.msra.mxu0 0.0
  %577 = vmatprep.subr.mxu0 0.0
  %578 = vmatpush1.msra.mxu0 0.0
  %579 = vmatprep.subr.mxu0 0.0
  %580 = vmatpush1.msra.mxu0 0.0
  %581 = vmatprep.subr.mxu0 0.0
  %582 = vmatpush1.msra.mxu0 0.0
  %583 = vmatprep.subr.mxu0 0.0
  %584 = vmatpush1.msra.mxu0 0.0
  %585 = vmatprep.subr.mxu0 0.0
  %586 = vmatpush1.msra.mxu0 0.0
  %587 = vmatprep.subr.mxu0 0.0
  %588 = vmatpush1.msra.mxu0 0.0
  %589 = vmatprep.subr.mxu0 0.0
  %590 = vmatpush1.msra.mxu0 0.0
  %591 = vmatprep.subr.mxu0 0.0
  %592 = vmatpush1.msra.mxu0 0.0
  %593 = vmatprep.subr.mxu0 0.0
  %594 = vmatpush1.msra.mxu0 0.0
  %595 = vmatprep.subr.mxu0 0.0
  %596 = vmatpush1.msra.mxu0 0.0
  %597 = vmatprep.subr.mxu0 0.0
  %598 = vmatpush1.msra.mxu0 0.0
  %599 = vmatprep.subr.mxu0 0.0
  %600 = vmatpush1.msra.mxu0 0.0
  %601 = vmatprep.subr.mxu0 0.0
  %602 = vmatpush1.msra.mxu0 0.0
  %603 = vmatprep.subr.mxu0 0.0
  %604 = vmatpush1.msra.mxu0 0.0
  %605 = vmatprep.subr.mxu0 0.0
  %606 = vmatpush1.msra.mxu0 0.0
  %607 = vmatprep.subr.mxu0 0.0
  %608 = vmatpush1.msra.mxu0 0.0
  %609 = vmatprep.subr.mxu0 0.0
  %610 = vmatpush1.msra.mxu0 0.0
  %611 = vmatprep.subr.mxu0 0.0
  %612 = vmatpush1.msra.mxu0 0.0
  %613 = vmatprep.subr.mxu0 0.0
  %614 = vmatpush1.msra.mxu0 0.0
  %615 = vmatprep.subr.mxu0 0.0
  %616 = vmatpush1.msra.mxu0 0.0
  %617 = vmatprep.subr.mxu0 0.0
  %618 = vmatpush1.msra.mxu0 0.0
  %619 = vmatprep.subr.mxu0 0.0
  %620 = vmatpush1.msra.mxu0 0.0
  %621 = vmatprep.subr.mxu0 0.0
  %622 = vmatpush1.msra.mxu0 0.0
  %623 = vmatprep.mubr.f32.mxu0 0.0
  %624 = vmatmul.mubr.f32.gmra.mrb[0].mxu0 %v96
  %v625 = vpop.f32.mrb[0].mxu0
  %v626 = vadd.f32 0.0, %v625
  %v627 = vpop.f32.mrb[0].mxu0
  %628 = vdwg.mxu0
  %v630 = vsel %vm238, %v558, 0
  %632 = vmatprep.subr.mxu0 0.0
  %633 = vmatpush1.msra.mxu0 %v626
  %634 = vmatprep.subr.mxu0 0.0
  %635 = vmatpush1.msra.mxu0 0.0
  %636 = vmatprep.subr.mxu0 0.0
  %637 = vmatpush1.msra.mxu0 0.0
  %638 = vmatprep.subr.mxu0 0.0
  %639 = vmatpush1.msra.mxu0 0.0
  %640 = vmatprep.subr.mxu0 0.0
  %641 = vmatpush1.msra.mxu0 0.0
  %642 = vmatprep.subr.mxu0 0.0
  %643 = vmatpush1.msra.mxu0 0.0
  %644 = vmatprep.subr.mxu0 0.0
  %645 = vmatpush1.msra.mxu0 0.0
  %646 = vmatprep.subr.mxu0 0.0
  %647 = vmatpush1.msra.mxu0 0.0
  %648 = vmatprep.subr.mxu0 0.0
  %649 = vmatpush1.msra.mxu0 0.0
  %650 = vmatprep.subr.mxu0 0.0
  %651 = vmatpush1.msra.mxu0 0.0
  %652 = vmatprep.subr.mxu0 0.0
  %653 = vmatpush1.msra.mxu0 0.0
  %654 = vmatprep.subr.mxu0 0.0
  %655 = vmatpush1.msra.mxu0 0.0
  %656 = vmatprep.subr.mxu0 0.0
  %657 = vmatpush1.msra.mxu0 0.0
  %658 = vmatprep.subr.mxu0 0.0
  %659 = vmatpush1.msra.mxu0 0.0
  %660 = vmatprep.subr.mxu0 0.0
  %661 = vmatpush1.msra.mxu0 0.0
  %662 = vmatprep.subr.mxu0 0.0
  %663 = vmatpush1.msra.mxu0 0.0
  %664 = vmatprep.subr.mxu0 0.0
  %665 = vmatpush1.msra.mxu0 0.0
  %666 = vmatprep.subr.mxu0 0.0
  %667 = vmatpush1.msra.mxu0 0.0
  %668 = vmatprep.subr.mxu0 0.0
  %669 = vmatpush1.msra.mxu0 0.0
  %670 = vmatprep.subr.mxu0 0.0
  %671 = vmatpush1.msra.mxu0 0.0
  %672 = vmatprep.subr.mxu0 0.0
  %673 = vmatpush1.msra.mxu0 0.0
  %674 = vmatprep.subr.mxu0 0.0
  %675 = vmatpush1.msra.mxu0 0.0
  %676 = vmatprep.subr.mxu0 0.0
  %677 = vmatpush1.msra.mxu0 0.0
  %678 = vmatprep.subr.mxu0 0.0
  %679 = vmatpush1.msra.mxu0 0.0
  %680 = vmatprep.subr.mxu0 0.0
  %681 = vmatpush1.msra.mxu0 0.0
  %682 = vmatprep.subr.mxu0 0.0
  %683 = vmatpush1.msra.mxu0 0.0
  %684 = vmatprep.subr.mxu0 0.0
  %685 = vmatpush1.msra.mxu0 0.0
  %686 = vmatprep.subr.mxu0 0.0
  %687 = vmatpush1.msra.mxu0 0.0
  %688 = vmatprep.subr.mxu0 0.0
  %689 = vmatpush1.msra.mxu0 0.0
  %690 = vmatprep.subr.mxu0 0.0
  %691 = vmatpush1.msra.mxu0 0.0
  %692 = vmatprep.subr.mxu0 0.0
  %693 = vmatpush1.msra.mxu0 0.0
  %694 = vmatprep.subr.mxu0 0.0
  %695 = vmatpush1.msra.mxu0 0.0
  %696 = vmatprep.mubr.f32.mxu0 0.0
  %697 = vmatmul.mubr.f32.gmra.mrb[0].mxu0 %v630
  %v698 = vpop.f32.mrb[0].mxu0
  %v699 = vadd.f32 0.0, %v698
  %v700 = vpop.f32.mrb[0].mxu0
  %701 = vdwg.mxu0
  %v702 = vadd.f32 %v469, %v699
  %703 = vrot.lane.b32.xlu0 %v165, 112
  %v704 = vpop.permute.xlu0 %703
  %705 = vrot.lane.b32.xlu0 %v235, 112
  %v706 = vpop.permute.xlu0 %705
  %v707 = vsel %vm238, %v704, 0
  %v709 = vsel %vm238, %v706, 0
  %711 = vmatprep.subr.mxu0 0.0
  %712 = vmatpush1.xpose.msra.mxu0 %v709
  %713 = vmatprep.subr.mxu0 0.0
  %714 = vmatpush1.xpose.msra.mxu0 0.0
  %715 = vmatprep.subr.mxu0 0.0
  %716 = vmatpush1.xpose.msra.mxu0 0.0
  %717 = vmatprep.subr.mxu0 0.0
  %718 = vmatpush1.xpose.msra.mxu0 0.0
  %719 = vmatprep.subr.mxu0 0.0
  %720 = vmatpush1.xpose.msra.mxu0 0.0
  %721 = vmatprep.subr.mxu0 0.0
  %722 = vmatpush1.xpose.msra.mxu0 0.0
  %723 = vmatprep.subr.mxu0 0.0
  %724 = vmatpush1.xpose.msra.mxu0 0.0
  %725 = vmatprep.subr.mxu0 0.0
  %726 = vmatpush1.xpose.msra.mxu0 0.0
  %727 = vmatprep.subr.mxu0 0.0
  %728 = vmatpush1.xpose.msra.mxu0 0.0
  %729 = vmatprep.subr.mxu0 0.0
  %730 = vmatpush1.xpose.msra.mxu0 0.0
  %731 = vmatprep.subr.mxu0 0.0
  %732 = vmatpush1.xpose.msra.mxu0 0.0
  %733 = vmatprep.subr.mxu0 0.0
  %734 = vmatpush1.xpose.msra.mxu0 0.0
  %735 = vmatprep.subr.mxu0 0.0
  %736 = vmatpush1.xpose.msra.mxu0 0.0
  %737 = vmatprep.subr.mxu0 0.0
  %738 = vmatpush1.xpose.msra.mxu0 0.0
  %739 = vmatprep.subr.mxu0 0.0
  %740 = vmatpush1.xpose.msra.mxu0 0.0
  %741 = vmatprep.subr.mxu0 0.0
  %742 = vmatpush1.xpose.msra.mxu0 0.0
  %743 = vmatprep.subr.mxu0 0.0
  %744 = vmatpush1.xpose.msra.mxu0 0.0
  %745 = vmatprep.subr.mxu0 0.0
  %746 = vmatpush1.xpose.msra.mxu0 0.0
  %747 = vmatprep.subr.mxu0 0.0
  %748 = vmatpush1.xpose.msra.mxu0 0.0
  %749 = vmatprep.subr.mxu0 0.0
  %750 = vmatpush1.xpose.msra.mxu0 0.0
  %751 = vmatprep.subr.mxu0 0.0
  %752 = vmatpush1.xpose.msra.mxu0 0.0
  %753 = vmatprep.subr.mxu0 0.0
  %754 = vmatpush1.xpose.msra.mxu0 0.0
  %755 = vmatprep.subr.mxu0 0.0
  %756 = vmatpush1.xpose.msra.mxu0 0.0
  %757 = vmatprep.subr.mxu0 0.0
  %758 = vmatpush1.xpose.msra.mxu0 0.0
  %759 = vmatprep.subr.mxu0 0.0
  %760 = vmatpush1.xpose.msra.mxu0 0.0
  %761 = vmatprep.subr.mxu0 0.0
  %762 = vmatpush1.xpose.msra.mxu0 0.0
  %763 = vmatprep.subr.mxu0 0.0
  %764 = vmatpush1.xpose.msra.mxu0 0.0
  %765 = vmatprep.subr.mxu0 0.0
  %766 = vmatpush1.xpose.msra.mxu0 0.0
  %767 = vmatprep.subr.mxu0 0.0
  %768 = vmatpush1.xpose.msra.mxu0 0.0
  %769 = vmatprep.subr.mxu0 0.0
  %770 = vmatpush1.xpose.msra.mxu0 0.0
  %771 = vmatprep.subr.mxu0 0.0
  %772 = vmatpush1.xpose.msra.mxu0 0.0
  %773 = vmatprep.subr.mxu0 0.0
  %774 = vmatpush1.xpose.msra.mxu0 0.0
  %775 = vmatprep.mubr.f32.mxu0 0.0
  %776 = vmatmul.mubr.f32.gmra.mrb[0].mxu0 %v707
  %v777 = vpop.f32.mrb[0].mxu0
  %v778 = vadd.f32 %v92, %v777
  %v779 = vpop.f32.mrb[0].mxu0
  %780 = vdwg.mxu0
  %v781 = vsel %vm238, %v778, -inf
  %782 = vmax.xlane.f32.xlu0 %v781
  %v783 = vpop.xlane.xlu0 %782
  %v784 = vsub.f32 %v778, %v783
  %v785 = vmul.f32 %v784, 1.442695
  %v786 = vpow.pop %v785
  %v787 = vsel %vm238, %v786, 0.0
  %788 = vadd.xlane.f32.xlu0 %v787
  %v789 = vpop.xlane.xlu0 %788
  %v790 = vrcp.pop %v789
  %v791 = vmul.f32 %v786, %v790
  %792 = vmatprep.subr.mxu0 0.0
  %793 = vmatpush1.msra.mxu0 %v41
  %794 = vmatprep.subr.mxu0 0.0
  %795 = vmatpush1.msra.mxu0 %v42
  %796 = vmatprep.subr.mxu0 0.0
  %797 = vmatpush1.msra.mxu0 %v43
  %798 = vmatprep.subr.mxu0 0.0
  %799 = vmatpush1.msra.mxu0 %v44
  %800 = vmatprep.subr.mxu0 0.0
  %801 = vmatpush1.msra.mxu0 0.0
  %802 = vmatprep.subr.mxu0 0.0
  %803 = vmatpush1.msra.mxu0 0.0
  %804 = vmatprep.subr.mxu0 0.0
  %805 = vmatpush1.msra.mxu0 0.0
  %806 = vmatprep.subr.mxu0 0.0
  %807 = vmatpush1.msra.mxu0 0.0
  %808 = vmatprep.subr.mxu0 0.0
  %809 = vmatpush1.msra.mxu0 0.0
  %810 = vmatprep.subr.mxu0 0.0
  %811 = vmatpush1.msra.mxu0 0.0
  %812 = vmatprep.subr.mxu0 0.0
  %813 = vmatpush1.msra.mxu0 0.0
  %814 = vmatprep.subr.mxu0 0.0
  %815 = vmatpush1.msra.mxu0 0.0
  %816 = vmatprep.subr.mxu0 0.0
  %817 = vmatpush1.msra.mxu0 0.0
  %818 = vmatprep.subr.mxu0 0.0
  %819 = vmatpush1.msra.mxu0 0.0
  %820 = vmatprep.subr.mxu0 0.0
  %821 = vmatpush1.msra.mxu0 0.0
  %822 = vmatprep.subr.mxu0 0.0
  %823 = vmatpush1.msra.mxu0 0.0
  %824 = vmatprep.subr.mxu0 0.0
  %825 = vmatpush1.msra.mxu0 0.0
  %826 = vmatprep.subr.mxu0 0.0
  %827 = vmatpush1.msra.mxu0 0.0
  %828 = vmatprep.subr.mxu0 0.0
  %829 = vmatpush1.msra.mxu0 0.0
  %830 = vmatprep.subr.mxu0 0.0
  %831 = vmatpush1.msra.mxu0 0.0
  %832 = vmatprep.subr.mxu0 0.0
  %833 = vmatpush1.msra.mxu0 0.0
  %834 = vmatprep.subr.mxu0 0.0
  %835 = vmatpush1.msra.mxu0 0.0
  %836 = vmatprep.subr.mxu0 0.0
  %837 = vmatpush1.msra.mxu0 0.0
  %838 = vmatprep.subr.mxu0 0.0
  %839 = vmatpush1.msra.mxu0 0.0
  %840 = vmatprep.subr.mxu0 0.0
  %841 = vmatpush1.msra.mxu0 0.0
  %842 = vmatprep.subr.mxu0 0.0
  %843 = vmatpush1.msra.mxu0 0.0
  %844 = vmatprep.subr.mxu0 0.0
  %845 = vmatpush1.msra.mxu0 0.0
  %846 = vmatprep.subr.mxu0 0.0
  %847 = vmatpush1.msra.mxu0 0.0
  %848 = vmatprep.subr.mxu0 0.0
  %849 = vmatpush1.msra.mxu0 0.0
  %850 = vmatprep.subr.mxu0 0.0
  %851 = vmatpush1.msra.mxu0 0.0
  %852 = vmatprep.subr.mxu0 0.0
  %853 = vmatpush1.msra.mxu0 0.0
  %854 = vmatprep.subr.mxu0 0.0
  %855 = vmatpush1.msra.mxu0 0.0
  %856 = vmatprep.mubr.f32.mxu0 0.0
  %857 = vmatmul.mubr.f32.gmra.mrb[0].mxu0 %v96
  %v858 = vpop.f32.mrb[0].mxu0
  %v859 = vadd.f32 0.0, %v858
  %v860 = vpop.f32.mrb[0].mxu0
  %861 = vdwg.mxu0
  %v863 = vsel %vm238, %v791, 0
  %865 = vmatprep.subr.mxu0 0.0
  %866 = vmatpush1.msra.mxu0 %v859
  %867 = vmatprep.subr.mxu0 0.0
  %868 = vmatpush1.msra.mxu0 0.0
  %869 = vmatprep.subr.mxu0 0.0
  %870 = vmatpush1.msra.mxu0 0.0
  %871 = vmatprep.subr.mxu0 0.0
  %872 = vmatpush1.msra.mxu0 0.0
  %873 = vmatprep.subr.mxu0 0.0
  %874 = vmatpush1.msra.mxu0 0.0
  %875 = vmatprep.subr.mxu0 0.0
  %876 = vmatpush1.msra.mxu0 0.0
  %877 = vmatprep.subr.mxu0 0.0
  %878 = vmatpush1.msra.mxu0 0.0
  %879 = vmatprep.subr.mxu0 0.0
  %880 = vmatpush1.msra.mxu0 0.0
  %881 = vmatprep.subr.mxu0 0.0
  %882 = vmatpush1.msra.mxu0 0.0
  %883 = vmatprep.subr.mxu0 0.0
  %884 = vmatpush1.msra.mxu0 0.0
  %885 = vmatprep.subr.mxu0 0.0
  %886 = vmatpush1.msra.mxu0 0.0
  %887 = vmatprep.subr.mxu0 0.0
  %888 = vmatpush1.msra.mxu0 0.0
  %889 = vmatprep.subr.mxu0 0.0
  %890 = vmatpush1.msra.mxu0 0.0
  %891 = vmatprep.subr.mxu0 0.0
  %892 = vmatpush1.msra.mxu0 0.0
  %893 = vmatprep.subr.mxu0 0.0
  %894 = vmatpush1.msra.mxu0 0.0
  %895 = vmatprep.subr.mxu0 0.0
  %896 = vmatpush1.msra.mxu0 0.0
  %897 = vmatprep.subr.mxu0 0.0
  %898 = vmatpush1.msra.mxu0 0.0
  %899 = vmatprep.subr.mxu0 0.0
  %900 = vmatpush1.msra.mxu0 0.0
  %901 = vmatprep.subr.mxu0 0.0
  %902 = vmatpush1.msra.mxu0 0.0
  %903 = vmatprep.subr.mxu0 0.0
  %904 = vmatpush1.msra.mxu0 0.0
  %905 = vmatprep.subr.mxu0 0.0
  %906 = vmatpush1.msra.mxu0 0.0
  %907 = vmatprep.subr.mxu0 0.0
  %908 = vmatpush1.msra.mxu0 0.0
  %909 = vmatprep.subr.mxu0 0.0
  %910 = vmatpush1.msra.mxu0 0.0
  %911 = vmatprep.subr.mxu0 0.0
  %912 = vmatpush1.msra.mxu0 0.0
  %913 = vmatprep.subr.mxu0 0.0
  %914 = vmatpush1.msra.mxu0 0.0
  %915 = vmatprep.subr.mxu0 0.0
  %916 = vmatpush1.msra.mxu0 0.0
  %917 = vmatprep.subr.mxu0 0.0
  %918 = vmatpush1.msra.mxu0 0.0
  %919 = vmatprep.subr.mxu0 0.0
  %920 = vmatpush1.msra.mxu0 0.0
  %921 = vmatprep.subr.mxu0 0.0
  %922 = vmatpush1.msra.mxu0 0.0
  %923 = vmatprep.subr.mxu0 0.0
  %924 = vmatpush1.msra.mxu0 0.0
  %925 = vmatprep.subr.mxu0 0.0
  %926 = vmatpush1.msra.mxu0 0.0
  %927 = vmatprep.subr.mxu0 0.0
  %928 = vmatpush1.msra.mxu0 0.0
  %929 = vmatprep.mubr.f32.mxu0 0.0
  %930 = vmatmul.mubr.f32.gmra.mrb[0].mxu0 %v863
  %v931 = vpop.f32.mrb[0].mxu0
  %v932 = vadd.f32 0.0, %v931
  %v933 = vpop.f32.mrb[0].mxu0
  %934 = vdwg.mxu0
  %v935 = vadd.f32 %v702, %v932
  %936 = vrot.lane.b32.xlu0 %v165, 104
  %v937 = vpop.permute.xlu0 %936
  %938 = vrot.lane.b32.xlu0 %v235, 104
  %v939 = vpop.permute.xlu0 %938
  %v940 = vsel %vm238, %v937, 0
  %v942 = vsel %vm238, %v939, 0
  %944 = vmatprep.subr.mxu0 0.0
  %945 = vmatpush1.xpose.msra.mxu0 %v942
  %946 = vmatprep.subr.mxu0 0.0
  %947 = vmatpush1.xpose.msra.mxu0 0.0
  %948 = vmatprep.subr.mxu0 0.0
  %949 = vmatpush1.xpose.msra.mxu0 0.0
  %950 = vmatprep.subr.mxu0 0.0
  %951 = vmatpush1.xpose.msra.mxu0 0.0
  %952 = vmatprep.subr.mxu0 0.0
  %953 = vmatpush1.xpose.msra.mxu0 0.0
  %954 = vmatprep.subr.mxu0 0.0
  %955 = vmatpush1.xpose.msra.mxu0 0.0
  %956 = vmatprep.subr.mxu0 0.0
  %957 = vmatpush1.xpose.msra.mxu0 0.0
  %958 = vmatprep.subr.mxu0 0.0
  %959 = vmatpush1.xpose.msra.mxu0 0.0
  %960 = vmatprep.subr.mxu0 0.0
  %961 = vmatpush1.xpose.msra.mxu0 0.0
  %962 = vmatprep.subr.mxu0 0.0
  %963 = vmatpush1.xpose.msra.mxu0 0.0
  %964 = vmatprep.subr.mxu0 0.0
  %965 = vmatpush1.xpose.msra.mxu0 0.0
  %966 = vmatprep.subr.mxu0 0.0
  %967 = vmatpush1.xpose.msra.mxu0 0.0
  %968 = vmatprep.subr.mxu0 0.0
  %969 = vmatpush1.xpose.msra.mxu0 0.0
  %970 = vmatprep.subr.mxu0 0.0
  %971 = vmatpush1.xpose.msra.mxu0 0.0
  %972 = vmatprep.subr.mxu0 0.0
  %973 = vmatpush1.xpose.msra.mxu0 0.0
  %974 = vmatprep.subr.mxu0 0.0
  %975 = vmatpush1.xpose.msra.mxu0 0.0
  %976 = vmatprep.subr.mxu0 0.0
  %977 = vmatpush1.xpose.msra.mxu0 0.0
  %978 = vmatprep.subr.mxu0 0.0
  %979 = vmatpush1.xpose.msra.mxu0 0.0
  %980 = vmatprep.subr.mxu0 0.0
  %981 = vmatpush1.xpose.msra.mxu0 0.0
  %982 = vmatprep.subr.mxu0 0.0
  %983 = vmatpush1.xpose.msra.mxu0 0.0
  %984 = vmatprep.subr.mxu0 0.0
  %985 = vmatpush1.xpose.msra.mxu0 0.0
  %986 = vmatprep.subr.mxu0 0.0
  %987 = vmatpush1.xpose.msra.mxu0 0.0
  %988 = vmatprep.subr.mxu0 0.0
  %989 = vmatpush1.xpose.msra.mxu0 0.0
  %990 = vmatprep.subr.mxu0 0.0
  %991 = vmatpush1.xpose.msra.mxu0 0.0
  %992 = vmatprep.subr.mxu0 0.0
  %993 = vmatpush1.xpose.msra.mxu0 0.0
  %994 = vmatprep.subr.mxu0 0.0
  %995 = vmatpush1.xpose.msra.mxu0 0.0
  %996 = vmatprep.subr.mxu0 0.0
  %997 = vmatpush1.xpose.msra.mxu0 0.0
  %998 = vmatprep.subr.mxu0 0.0
  %999 = vmatpush1.xpose.msra.mxu0 0.0
  %1000 = vmatprep.subr.mxu0 0.0
  %1001 = vmatpush1.xpose.msra.mxu0 0.0
  %1002 = vmatprep.subr.mxu0 0.0
  %1003 = vmatpush1.xpose.msra.mxu0 0.0
  %1004 = vmatprep.subr.mxu0 0.0
  %1005 = vmatpush1.xpose.msra.mxu0 0.0
  %1006 = vmatprep.subr.mxu0 0.0
  %1007 = vmatpush1.xpose.msra.mxu0 0.0
  %1008 = vmatprep.mubr.f32.mxu0 0.0
  %1009 = vmatmul.mubr.f32.gmra.mrb[0].mxu0 %v940
  %v1010 = vpop.f32.mrb[0].mxu0
  %v1011 = vadd.f32 %v92, %v1010
  %v1012 = vpop.f32.mrb[0].mxu0
  %1013 = vdwg.mxu0
  %v1014 = vsel %vm238, %v1011, -inf
  %1015 = vmax.xlane.f32.xlu0 %v1014
  %v1016 = vpop.xlane.xlu0 %1015
  %v1017 = vsub.f32 %v1011, %v1016
  %v1018 = vmul.f32 %v1017, 1.442695
  %v1019 = vpow.pop %v1018
  %v1020 = vsel %vm238, %v1019, 0.0
  %1021 = vadd.xlane.f32.xlu0 %v1020
  %v1022 = vpop.xlane.xlu0 %1021
  %v1023 = vrcp.pop %v1022
  %v1024 = vmul.f32 %v1019, %v1023
  %1025 = vmatprep.subr.mxu0 0.0
  %1026 = vmatpush1.msra.mxu0 %v45
  %1027 = vmatprep.subr.mxu0 0.0
  %1028 = vmatpush1.msra.mxu0 %v46
  %1029 = vmatprep.subr.mxu0 0.0
  %1030 = vmatpush1.msra.mxu0 %v47
  %1031 = vmatprep.subr.mxu0 0.0
  %1032 = vmatpush1.msra.mxu0 %v48
  %1033 = vmatprep.subr.mxu0 0.0
  %1034 = vmatpush1.msra.mxu0 0.0
  %1035 = vmatprep.subr.mxu0 0.0
  %1036 = vmatpush1.msra.mxu0 0.0
  %1037 = vmatprep.subr.mxu0 0.0
  %1038 = vmatpush1.msra.mxu0 0.0
  %1039 = vmatprep.subr.mxu0 0.0
  %1040 = vmatpush1.msra.mxu0 0.0
  %1041 = vmatprep.subr.mxu0 0.0
  %1042 = vmatpush1.msra.mxu0 0.0
  %1043 = vmatprep.subr.mxu0 0.0
  %1044 = vmatpush1.msra.mxu0 0.0
  %1045 = vmatprep.subr.mxu0 0.0
  %1046 = vmatpush1.msra.mxu0 0.0
  %1047 = vmatprep.subr.mxu0 0.0
  %1048 = vmatpush1.msra.mxu0 0.0
  %1049 = vmatprep.subr.mxu0 0.0
  %1050 = vmatpush1.msra.mxu0 0.0
  %1051 = vmatprep.subr.mxu0 0.0
  %1052 = vmatpush1.msra.mxu0 0.0
  %1053 = vmatprep.subr.mxu0 0.0
  %1054 = vmatpush1.msra.mxu0 0.0
  %1055 = vmatprep.subr.mxu0 0.0
  %1056 = vmatpush1.msra.mxu0 0.0
  %1057 = vmatprep.subr.mxu0 0.0
  %1058 = vmatpush1.msra.mxu0 0.0
  %1059 = vmatprep.subr.mxu0 0.0
  %1060 = vmatpush1.msra.mxu0 0.0
  %1061 = vmatprep.subr.mxu0 0.0
  %1062 = vmatpush1.msra.mxu0 0.0
  %1063 = vmatprep.subr.mxu0 0.0
  %1064 = vmatpush1.msra.mxu0 0.0
  %1065 = vmatprep.subr.mxu0 0.0
  %1066 = vmatpush1.msra.mxu0 0.0
  %1067 = vmatprep.subr.mxu0 0.0
  %1068 = vmatpush1.msra.mxu0 0.0
  %1069 = vmatprep.subr.mxu0 0.0
  %1070 = vmatpush1.msra.mxu0 0.0
  %1071 = vmatprep.subr.mxu0 0.0
  %1072 = vmatpush1.msra.mxu0 0.0
  %1073 = vmatprep.subr.mxu0 0.0
  %1074 = vmatpush1.msra.mxu0 0.0
  %1075 = vmatprep.subr.mxu0 0.0
  %1076 = vmatpush1.msra.mxu0 0.0
  %1077 = vmatprep.subr.mxu0 0.0
  %1078 = vmatpush1.msra.mxu0 0.0
  %1079 = vmatprep.subr.mxu0 0.0
  %1080 = vmatpush1.msra.mxu0 0.0
  %1081 = vmatprep.subr.mxu0 0.0
  %1082 = vmatpush1.msra.mxu0 0.0
  %1083 = vmatprep.subr.mxu0 0.0
  %1084 = vmatpush1.msra.mxu0 0.0
  %1085 = vmatprep.subr.mxu0 0.0
  %1086 = vmatpush1.msra.mxu0 0.0
  %1087 = vmatprep.subr.mxu0 0.0
  %1088 = vmatpush1.msra.mxu0 0.0
  %1089 = vmatprep.mubr.f32.mxu0 0.0
  %1090 = vmatmul.mubr.f32.gmra.mrb[0].mxu0 %v96
  %v1091 = vpop.f32.mrb[0].mxu0
  %v1092 = vadd.f32 0.0, %v1091
  %v1093 = vpop.f32.mrb[0].mxu0
  %1094 = vdwg.mxu0
  %v1096 = vsel %vm238, %v1024, 0
  %1098 = vmatprep.subr.mxu0 0.0
  %1099 = vmatpush1.msra.mxu0 %v1092
  %1100 = vmatprep.subr.mxu0 0.0
  %1101 = vmatpush1.msra.mxu0 0.0
  %1102 = vmatprep.subr.mxu0 0.0
  %1103 = vmatpush1.msra.mxu0 0.0
  %1104 = vmatprep.subr.mxu0 0.0
  %1105 = vmatpush1.msra.mxu0 0.0
  %1106 = vmatprep.subr.mxu0 0.0
  %1107 = vmatpush1.msra.mxu0 0.0
  %1108 = vmatprep.subr.mxu0 0.0
  %1109 = vmatpush1.msra.mxu0 0.0
  %1110 = vmatprep.subr.mxu0 0.0
  %1111 = vmatpush1.msra.mxu0 0.0
  %1112 = vmatprep.subr.mxu0 0.0
  %1113 = vmatpush1.msra.mxu0 0.0
  %1114 = vmatprep.subr.mxu0 0.0
  %1115 = vmatpush1.msra.mxu0 0.0
  %1116 = vmatprep.subr.mxu0 0.0
  %1117 = vmatpush1.msra.mxu0 0.0
  %1118 = vmatprep.subr.mxu0 0.0
  %1119 = vmatpush1.msra.mxu0 0.0
  %1120 = vmatprep.subr.mxu0 0.0
  %1121 = vmatpush1.msra.mxu0 0.0
  %1122 = vmatprep.subr.mxu0 0.0
  %1123 = vmatpush1.msra.mxu0 0.0
  %1124 = vmatprep.subr.mxu0 0.0
  %1125 = vmatpush1.msra.mxu0 0.0
  %1126 = vmatprep.subr.mxu0 0.0
  %1127 = vmatpush1.msra.mxu0 0.0
  %1128 = vmatprep.subr.mxu0 0.0
  %1129 = vmatpush1.msra.mxu0 0.0
  %1130 = vmatprep.subr.mxu0 0.0
  %1131 = vmatpush1.msra.mxu0 0.0
  %1132 = vmatprep.subr.mxu0 0.0
  %1133 = vmatpush1.msra.mxu0 0.0
  %1134 = vmatprep.subr.mxu0 0.0
  %1135 = vmatpush1.msra.mxu0 0.0
  %1136 = vmatprep.subr.mxu0 0.0
  %1137 = vmatpush1.msra.mxu0 0.0
  %1138 = vmatprep.subr.mxu0 0.0
  %1139 = vmatpush1.msra.mxu0 0.0
  %1140 = vmatprep.subr.mxu0 0.0
  %1141 = vmatpush1.msra.mxu0 0.0
  %1142 = vmatprep.subr.mxu0 0.0
  %1143 = vmatpush1.msra.mxu0 0.0
  %1144 = vmatprep.subr.mxu0 0.0
  %1145 = vmatpush1.msra.mxu0 0.0
  %1146 = vmatprep.subr.mxu0 0.0
  %1147 = vmatpush1.msra.mxu0 0.0
  %1148 = vmatprep.subr.mxu0 0.0
  %1149 = vmatpush1.msra.mxu0 0.0
  %1150 = vmatprep.subr.mxu0 0.0
  %1151 = vmatpush1.msra.mxu0 0.0
  %1152 = vmatprep.subr.mxu0 0.0
  %1153 = vmatpush1.msra.mxu0 0.0
  %1154 = vmatprep.subr.mxu0 0.0
  %1155 = vmatpush1.msra.mxu0 0.0
  %1156 = vmatprep.subr.mxu0 0.0
  %1157 = vmatpush1.msra.mxu0 0.0
  %1158 = vmatprep.subr.mxu0 0.0
  %1159 = vmatpush1.msra.mxu0 0.0
  %1160 = vmatprep.subr.mxu0 0.0
  %1161 = vmatpush1.msra.mxu0 0.0
  %1162 = vmatprep.mubr.f32.mxu0 0.0
  %1163 = vmatmul.mubr.f32.gmra.mrb[0].mxu0 %v1096
  %v1164 = vpop.f32.mrb[0].mxu0
  %v1165 = vadd.f32 0.0, %v1164
  %v1166 = vpop.f32.mrb[0].mxu0
  %1167 = vdwg.mxu0
  %v1168 = vadd.f32 %v935, %v1165
  %v1169 = vadd.f32 %v90, %v1168
  %v1170 = vsel %vm94, %v1169, 0.0
  %1171 = vadd.xlane.f32.xlu0 %v1170
  %v1172 = vpop.xlane.xlu0 %1171
  %v1173 = vrcp.pop 32.0
  %v1174 = vmul.f32 %v1172, %v1173
  %v1175 = vsub.f32 %v1169, %v1174
  %v1176 = vmul.f32 %v1175, %v1175
  %v1177 = vsel %vm94, %v1176, 0.0
  %1178 = vadd.xlane.f32.xlu0 %v1177
  %v1179 = vpop.xlane.xlu0 %1178
  %v1180 = vmul.f32 %v1179, %v1173
  %v1181 = vadd.f32 %v1180, 1e-05
  %v1182 = vrsqrt.pop %v1181
  %v1183 = vmul.f32 %v1175, %v1182
  %v1184 = vmul.f32 %v1183, %v84
  %v1185 = vadd.f32 %v1184, %v87
  %v1187 = vsel %vm94, %v1185, 0
  %1189 = vmatprep.subr.mxu0 0.0
  %1190 = vmatpush1.msra.mxu0 %v22
  %1191 = vmatprep.subr.mxu0 0.0
  %1192 = vmatpush1.msra.mxu0 %v23
  %1193 = vmatprep.subr.mxu0 0.0
  %1194 = vmatpush1.msra.mxu0 %v24
  %1195 = vmatprep.subr.mxu0 0.0
  %1196 = vmatpush1.msra.mxu0 %v25
  %1197 = vmatprep.subr.mxu0 0.0
  %1198 = vmatpush1.msra.mxu0 0.0
  %1199 = vmatprep.subr.mxu0 0.0
  %1200 = vmatpush1.msra.mxu0 0.0
  %1201 = vmatprep.subr.mxu0 0.0
  %1202 = vmatpush1.msra.mxu0 0.0
  %1203 = vmatprep.subr.mxu0 0.0
  %1204 = vmatpush1.msra.mxu0 0.0
  %1205 = vmatprep.subr.mxu0 0.0
  %1206 = vmatpush1.msra.mxu0 0.0
  %1207 = vmatprep.subr.mxu0 0.0
  %1208 = vmatpush1.msra.mxu0 0.0
  %1209 = vmatprep.subr.mxu0 0.0
  %1210 = vmatpush1.msra.mxu0 0.0
  %1211 = vmatprep.subr.mxu0 0.0
  %1212 = vmatpush1.msra.mxu0 0.0
  %1213 = vmatprep.subr.mxu0 0.0
  %1214 = vmatpush1.msra.mxu0 0.0
  %1215 = vmatprep.subr.mxu0 0.0
  %1216 = vmatpush1.msra.mxu0 0.0
  %1217 = vmatprep.subr.mxu0 0.0
  %1218 = vmatpush1.msra.mxu0 0.0
  %1219 = vmatprep.subr.mxu0 0.0
  %1220 = vmatpush1.msra.mxu0 0.0
  %1221 = vmatprep.subr.mxu0 0.0
  %1222 = vmatpush1.msra.mxu0 0.0
  %1223 = vmatprep.subr.mxu0 0.0
  %1224 = vmatpush1.msra.mxu0 0.0
  %1225 = vmatprep.subr.mxu0 0.0
  %1226 = vmatpush1.msra.mxu0 0.0
  %1227 = vmatprep.subr.mxu0 0.0
  %1228 = vmatpush1.msra.mxu0 0.0
  %1229 = vmatprep.subr.mxu0 0.0
  %1230 = vmatpush1.msra.mxu0 0.0
  %1231 = vmatprep.subr.mxu0 0.0
  %1232 = vmatpush1.msra.mxu0 0.0
  %1233 = vmatprep.subr.mxu0 0.0
  %1234 = vmatpush1.msra.mxu0 0.0
  %1235 = vmatprep.subr.mxu0 0.0
  %1236 = vmatpush1.msra.mxu0 0.0
  %1237 = vmatprep.subr.mxu0 0.0
  %1238 = vmatpush1.msra.mxu0 0.0
  %1239 = vmatprep.subr.mxu0 0.0
  %1240 = vmatpush1.msra.mxu0 0.0
  %1241 = vmatprep.subr.mxu0 0.0
  %1242 = vmatpush1.msra.mxu0 0.0
  %1243 = vmatprep.subr.mxu0 0.0
  %1244 = vmatpush1.msra.mxu0 0.0
  %1245 = vmatprep.subr.mxu0 0.0
  %1246 = vmatpush1.msra.mxu0 0.0
  %1247 = vmatprep.subr.mxu0 0.0
  %1248 = vmatpush1.msra.mxu0 0.0
  %1249 = vmatprep.subr.mxu0 0.0
  %1250 = vmatpush1.msra.mxu0 0.0
  %1251 = vmatprep.subr.mxu0 0.0
  %1252 = vmatpush1.msra.mxu0 0.0
  %1253 = vmatprep.mubr.f32.mxu0 0.0
  %1254 = vmatmul.mubr.f32.gmra.mrb[0].mxu0 %v1187
  %v1255 = vpop.f32.mrb[0].mxu0
  %v1256 = vadd.f32 %v26, %v1255
  %v1257 = vpop.f32.mrb[0].mxu0
  %1258 = vdwg.mxu0
  %v1260 = vsel %vm94, %v91, 0
  %1262 = vmatprep.subr.mxu0 0.0
  %1263 = vmatpush1.msra.mxu0 %v27
  %1264 = vmatprep.subr.mxu0 0.0
  %1265 = vmatpush1.msra.mxu0 %v28
  %1266 = vmatprep.subr.mxu0 0.0
  %1267 = vmatpush1.msra.mxu0 %v29
  %1268 = vmatprep.subr.mxu0 0.0
  %1269 = vmatpush1.msra.mxu0 %v30
  %1270 = vmatprep.subr.mxu0 0.0
  %1271 = vmatpush1.msra.mxu0 0.0
  %1272 = vmatprep.subr.mxu0 0.0
  %1273 = vmatpush1.msra.mxu0 0.0
  %1274 = vmatprep.subr.mxu0 0.0
  %1275 = vmatpush1.msra.mxu0 0.0
  %1276 = vmatprep.subr.mxu0 0.0
  %1277 = vmatpush1.msra.mxu0 0.0
  %1278 = vmatprep.subr.mxu0 0.0
  %1279 = vmatpush1.msra.mxu0 0.0
  %1280 = vmatprep.subr.mxu0 0.0
  %1281 = vmatpush1.msra.mxu0 0.0
  %1282 = vmatprep.subr.mxu0 0.0
  %1283 = vmatpush1.msra.mxu0 0.0
  %1284 = vmatprep.subr.mxu0 0.0
  %1285 = vmatpush1.msra.mxu0 0.0
  %1286 = vmatprep.subr.mxu0 0.0
  %1287 = vmatpush1.msra.mxu0 0.0
  %1288 = vmatprep.subr.mxu0 0.0
  %1289 = vmatpush1.msra.mxu0 0.0
  %1290 = vmatprep.subr.mxu0 0.0
  %1291 = vmatpush1.msra.mxu0 0.0
  %1292 = vmatprep.subr.mxu0 0.0
  %1293 = vmatpush1.msra.mxu0 0.0
  %1294 = vmatprep.subr.mxu0 0.0
  %1295 = vmatpush1.msra.mxu0 0.0
  %1296 = vmatprep.subr.mxu0 0.0
  %1297 = vmatpush1.msra.mxu0 0.0
  %1298 = vmatprep.subr.mxu0 0.0
  %1299 = vmatpush1.msra.mxu0 0.0
  %1300 = vmatprep.subr.mxu0 0.0
  %1301 = vmatpush1.msra.mxu0 0.0
  %1302 = vmatprep.subr.mxu0 0.0
  %1303 = vmatpush1.msra.mxu0 0.0
  %1304 = vmatprep.subr.mxu0 0.0
  %1305 = vmatpush1.msra.mxu0 0.0
  %1306 = vmatprep.subr.mxu0 0.0
  %1307 = vmatpush1.msra.mxu0 0.0
  %1308 = vmatprep.subr.mxu0 0.0
  %1309 = vmatpush1.msra.mxu0 0.0
  %1310 = vmatprep.subr.mxu0 0.0
  %1311 = vmatpush1.msra.mxu0 0.0
  %1312 = vmatprep.subr.mxu0 0.0
  %1313 = vmatpush1.msra.mxu0 0.0
  %1314 = vmatprep.subr.mxu0 0.0
  %1315 = vmatpush1.msra.mxu0 0.0
  %1316 = vmatprep.subr.mxu0 0.0
  %1317 = vmatpush1.msra.mxu0 0.0
  %1318 = vmatprep.subr.mxu0 0.0
  %1319 = vmatpush1.msra.mxu0 0.0
  %1320 = vmatprep.subr.mxu0 0.0
  %1321 = vmatpush1.msra.mxu0 0.0
  %1322 = vmatprep.subr.mxu0 0.0
  %1323 = vmatpush1.msra.mxu0 0.0
  %1324 = vmatprep.subr.mxu0 0.0
  %1325 = vmatpush1.msra.mxu0 0.0
  %1326 = vmatprep.mubr.f32.mxu0 0.0
  %1327 = vmatmul.mubr.f32.gmra.mrb[0].mxu0 %v1260
  %v1328 = vpop.f32.mrb[0].mxu0
  %v1329 = vadd.f32 %v31, %v1328
  %v1330 = vpop.f32.mrb[0].mxu0
  %1331 = vdwg.mxu0
  %v1333 = vsel %vm238, %v1256, 0
  %v1336 = vsel %vm238, %v1329, 0
  %1338 = vmatprep.subr.mxu0 0.0
  %1339 = vmatpush1.xpose.msra.mxu0 %v1336
  %1340 = vmatprep.subr.mxu0 0.0
  %1341 = vmatpush1.xpose.msra.mxu0 0.0
  %1342 = vmatprep.subr.mxu0 0.0
  %1343 = vmatpush1.xpose.msra.mxu0 0.0
  %1344 = vmatprep.subr.mxu0 0.0
  %1345 = vmatpush1.xpose.msra.mxu0 0.0
  %1346 = vmatprep.subr.mxu0 0.0
  %1347 = vmatpush1.xpose.msra.mxu0 0.0
  %1348 = vmatprep.subr.mxu0 0.0
  %1349 = vmatpush1.xpose.msra.mxu0 0.0
  %1350 = vmatprep.subr.mxu0 0.0
  %1351 = vmatpush1.xpose.msra.mxu0 0.0
  %1352 = vmatprep.subr.mxu0 0.0
  %1353 = vmatpush1.xpose.msra.mxu0 0.0
  %1354 = vmatprep.subr.mxu0 0.0
  %1355 = vmatpush1.xpose.msra.mxu0 0.0
  %1356 = vmatprep.subr.mxu0 0.0
  %1357 = vmatpush1.xpose.msra.mxu0 0.0
  %1358 = vmatprep.subr.mxu0 0.0
  %1359 = vmatpush1.xpose.msra.mxu0 0.0
  %1360 = vmatprep.subr.mxu0 0.0
  %1361 = vmatpush1.xpose.msra.mxu0 0.0
  %1362 = vmatprep.subr.mxu0 0.0
  %1363 = vmatpush1.xpose.msra.mxu0 0.0
  %1364 = vmatprep.subr.mxu0 0.0
  %1365 = vmatpush1.xpose.msra.mxu0 0.0
  %1366 = vmatprep.subr.mxu0 0.0
  %1367 = vmatpush1.xpose.msra.mxu0 0.0
  %1368 = vmatprep.subr.mxu0 0.0
  %1369 = vmatpush1.xpose.msra.mxu0 0.0
  %1370 = vmatprep.subr.mxu0 0.0
  %1371 = vmatpush1.xpose.msra.mxu0 0.0
  %1372 = vmatprep.subr.mxu0 0.0
  %1373 = vmatpush1.xpose.msra.mxu0 0.0
  %1374 = vmatprep.subr.mxu0 0.0
  %1375 = vmatpush1.xpose.msra.mxu0 0.0
  %1376 = vmatprep.subr.mxu0 0.0
  %1377 = vmatpush1.xpose.msra.mxu0 0.0
  %1378 = vmatprep.subr.mxu0 0.0
  %1379 = vmatpush1.xpose.msra.mxu0 0.0
  %1380 = vmatprep.subr.mxu0 0.0
  %1381 = vmatpush1.xpose.msra.mxu0 0.0
  %1382 = vmatprep.subr.mxu0 0.0
  %1383 = vmatpush1.xpose.msra.mxu0 0.0
  %1384 = vmatprep.subr.mxu0 0.0
  %1385 = vmatpush1.xpose.msra.mxu0 0.0
  %1386 = vmatprep.subr.mxu0 0.0
  %1387 = vmatpush1.xpose.msra.mxu0 0.0
  %1388 = vmatprep.subr.mxu0 0.0
  %1389 = vmatpush1.xpose.msra.mxu0 0.0
  %1390 = vmatprep.subr.mxu0 0.0
  %1391 = vmatpush1.xpose.msra.mxu0 0.0
  %1392 = vmatprep.subr.mxu0 0.0
  %1393 = vmatpush1.xpose.msra.mxu0 0.0
  %1394 = vmatprep.subr.mxu0 0.0
  %1395 = vmatpush1.xpose.msra.mxu0 0.0
  %1396 = vmatprep.subr.mxu0 0.0
  %1397 = vmatpush1.xpose.msra.mxu0 0.0
  %1398 = vmatprep.subr.mxu0 0.0
  %1399 = vmatpush1.xpose.msra.mxu0 0.0
  %1400 = vmatprep.subr.mxu0 0.0
  %1401 = vmatpush1.xpose.msra.mxu0 0.0
  %1402 = vmatprep.mubr.f32.mxu0 0.0
  %1403 = vmatmul.mubr.f32.gmra.mrb[0].mxu0 %v1333
  %v1404 = vpop.f32.mrb[0].mxu0
  %v1405 = vadd.f32 %v93, %v1404
  %v1406 = vpop.f32.mrb[0].mxu0
  %1407 = vdwg.mxu0
  %v1408 = vsel %vm238, %v1405, -inf
  %1409 = vmax.xlane.f32.xlu0 %v1408
  %v1410 = vpop.xlane.xlu0 %1409
  %v1411 = vsub.f32 %v1405, %v1410
  %v1412 = vmul.f32 %v1411, 1.442695
  %v1413 = vpow.pop %v1412
  %v1414 = vsel %vm238, %v1413, 0.0
  %1415 = vadd.xlane.f32.xlu0 %v1414
  %v1416 = vpop.xlane.xlu0 %1415
  %v1417 = vrcp.pop %v1416
  %v1418 = vmul.f32 %v1413, %v1417
  %1419 = vmatprep.subr.mxu0 0.0
  %1420 = vmatpush1.msra.mxu0 %v49
  %1421 = vmatprep.subr.mxu0 0.0
  %1422 = vmatpush1.msra.mxu0 %v50
  %1423 = vmatprep.subr.mxu0 0.0
  %1424 = vmatpush1.msra.mxu0 %v51
  %1425 = vmatprep.subr.mxu0 0.0
  %1426 = vmatpush1.msra.mxu0 %v52
  %1427 = vmatprep.subr.mxu0 0.0
  %1428 = vmatpush1.msra.mxu0 0.0
  %1429 = vmatprep.subr.mxu0 0.0
  %1430 = vmatpush1.msra.mxu0 0.0
  %1431 = vmatprep.subr.mxu0 0.0
  %1432 = vmatpush1.msra.mxu0 0.0
  %1433 = vmatprep.subr.mxu0 0.0
  %1434 = vmatpush1.msra.mxu0 0.0
  %1435 = vmatprep.subr.mxu0 0.0
  %1436 = vmatpush1.msra.mxu0 0.0
  %1437 = vmatprep.subr.mxu0 0.0
  %1438 = vmatpush1.msra.mxu0 0.0
  %1439 = vmatprep.subr.mxu0 0.0
  %1440 = vmatpush1.msra.mxu0 0.0
  %1441 = vmatprep.subr.mxu0 0.0
  %1442 = vmatpush1.msra.mxu0 0.0
  %1443 = vmatprep.subr.mxu0 0.0
  %1444 = vmatpush1.msra.mxu0 0.0
  %1445 = vmatprep.subr.mxu0 0.0
  %1446 = vmatpush1.msra.mxu0 0.0
  %1447 = vmatprep.subr.mxu0 0.0
  %1448 = vmatpush1.msra.mxu0 0.0
  %1449 = vmatprep.subr.mxu0 0.0
  %1450 = vmatpush1.msra.mxu0 0.0
  %1451 = vmatprep.subr.mxu0 0.0
  %1452 = vmatpush1.msra.mxu0 0.0
  %1453 = vmatprep.subr.mxu0 0.0
  %1454 = vmatpush1.msra.mxu0 0.0
  %1455 = vmatprep.subr.mxu0 0.0
  %1456 = vmatpush1.msra.mxu0 0.0
  %1457 = vmatprep.subr.mxu0 0.0
  %1458 = vmatpush1.msra.mxu0 0.0
  %1459 = vmatprep.subr.mxu0 0.0
  %1460 = vmatpush1.msra.mxu0 0.0
  %1461 = vmatprep.subr.mxu0 0.0
  %1462 = vmatpush1.msra.mxu0 0.0
  %1463 = vmatprep.subr.mxu0 0.0
  %1464 = vmatpush1.msra.mxu0 0.0
  %1465 = vmatprep.subr.mxu0 0.0
  %1466 = vmatpush1.msra.mxu0 0.0
  %1467 = vmatprep.subr.mxu0 0.0
  %1468 = vmatpush1.msra.mxu0 0.0
  %1469 = vmatprep.subr.mxu0 0.0
  %1470 = vmatpush1.msra.mxu0 0.0
  %1471 = vmatprep.subr.mxu0 0.0
  %1472 = vmatpush1.msra.mxu0 0.0
  %1473 = vmatprep.subr.mxu0 0.0
  %1474 = vmatpush1.msra.mxu0 0.0
  %1475 = vmatprep.subr.mxu0 0.0
  %1476 = vmatpush1.msra.mxu0 0.0
  %1477 = vmatprep.subr.mxu0 0.0
  %1478 = vmatpush1.msra.mxu0 0.0
  %1479 = vmatprep.subr.mxu0 0.0
  %1480 = vmatpush1.msra.mxu0 0.0
  %1481 = vmatprep.subr.mxu0 0.0
  %1482 = vmatpush1.msra.mxu0 0.0
  %1483 = vmatprep.mubr.f32.mxu0 0.0
  %1484 = vmatmul.mubr.f32.gmra.mrb[0].mxu0 %v1260
  %v1485 = vpop.f32.mrb[0].mxu0
  %v1486 = vadd.f32 0.0, %v1485
  %v1487 = vpop.f32.mrb[0].mxu0
  %1488 = vdwg.mxu0
  %v1490 = vsel %vm238, %v1418, 0
  %1492 = vmatprep.subr.mxu0 0.0
  %1493 = vmatpush1.msra.mxu0 %v1486
  %1494 = vmatprep.subr.mxu0 0.0
  %1495 = vmatpush1.msra.mxu0 0.0
  %1496 = vmatprep.subr.mxu0 0.0
  %1497 = vmatpush1.msra.mxu0 0.0
  %1498 = vmatprep.subr.mxu0 0.0
  %1499 = vmatpush1.msra.mxu0 0.0
  %1500 = vmatprep.subr.mxu0 0.0
  %1501 = vmatpush1.msra.mxu0 0.0
  %1502 = vmatprep.subr.mxu0 0.0
  %1503 = vmatpush1.msra.mxu0 0.0
  %1504 = vmatprep.subr.mxu0 0.0
  %1505 = vmatpush1.msra.mxu0 0.0
  %1506 = vmatprep.subr.mxu0 0.0
  %1507 = vmatpush1.msra.mxu0 0.0
  %1508 = vmatprep.subr.mxu0 0.0
  %1509 = vmatpush1.msra.mxu0 0.0
  %1510 = vmatprep.subr.mxu0 0.0
  %1511 = vmatpush1.msra.mxu0 0.0
  %1512 = vmatprep.subr.mxu0 0.0
  %1513 = vmatpush1.msra.mxu0 0.0
  %1514 = vmatprep.subr.mxu0 0.0
  %1515 = vmatpush1.msra.mxu0 0.0
  %1516 = vmatprep.subr.mxu0 0.0
  %1517 = vmatpush1.msra.mxu0 0.0
  %1518 = vmatprep.subr.mxu0 0.0
  %1519 = vmatpush1.msra.mxu0 0.0
  %1520 = vmatprep.subr.mxu0 0.0
  %1521 = vmatpush1.msra.mxu0 0.0
  %1522 = vmatprep.subr.mxu0 0.0
  %1523 = vmatpush1.msra.mxu0 0.0
  %1524 = vmatprep.subr.mxu0 0.0
  %1525 = vmatpush1.msra.mxu0 0.0
  %1526 = vmatprep.subr.mxu0 0.0
  %1527 = vmatpush1.msra.mxu0 0.0
  %1528 = vmatprep.subr.mxu0 0.0
  %1529 = vmatpush1.msra.mxu0 0.0
  %1530 = vmatprep.subr.mxu0 0.0
  %1531 = vmatpush1.msra.mxu0 0.0
  %1532 = vmatprep.subr.mxu0 0.0
  %1533 = vmatpush1.msra.mxu0 0.0
  %1534 = vmatprep.subr.mxu0 0.0
  %1535 = vmatpush1.msra.mxu0 0.0
  %1536 = vmatprep.subr.mxu0 0.0
  %1537 = vmatpush1.msra.mxu0 0.0
  %1538 = vmatprep.subr.mxu0 0.0
  %1539 = vmatpush1.msra.mxu0 0.0
  %1540 = vmatprep.subr.mxu0 0.0
  %1541 = vmatpush1.msra.mxu0 0.0
  %1542 = vmatprep.subr.mxu0 0.0
  %1543 = vmatpush1.msra.mxu0 0.0
  %1544 = vmatprep.subr.mxu0 0.0
  %1545 = vmatpush1.msra.mxu0 0.0
  %1546 = vmatprep.subr.mxu0 0.0
  %1547 = vmatpush1.msra.mxu0 0.0
  %1548 = vmatprep.subr.mxu0 0.0
  %1549 = vmatpush1.msra.mxu0 0.0
  %1550 = vmatprep.subr.mxu0 0.0
  %1551 = vmatpush1.msra.mxu0 0.0
  %1552 = vmatprep.subr.mxu0 0.0
  %1553 = vmatpush1.msra.mxu0 0.0
  %1554 = vmatprep.subr.mxu0 0.0
  %1555 = vmatpush1.msra.mxu0 0.0
  %1556 = vmatprep.mubr.f32.mxu0 0.0
  %1557 = vmatmul.mubr.f32.gmra.mrb[0].mxu0 %v1490
  %v1558 = vpop.f32.mrb[0].mxu0
  %v1559 = vadd.f32 0.0, %v1558
  %v1560 = vpop.f32.mrb[0].mxu0
  %1561 = vdwg.mxu0
  %v1562 = vadd.f32 %v32, %v1559
  %1563 = vrot.lane.b32.xlu0 %v1256, 120
  %v1564 = vpop.permute.xlu0 %1563
  %1565 = vrot.lane.b32.xlu0 %v1329, 120
  %v1566 = vpop.permute.xlu0 %1565
  %v1567 = vsel %vm238, %v1564, 0
  %v1569 = vsel %vm238, %v1566, 0
  %1571 = vmatprep.subr.mxu0 0.0
  %1572 = vmatpush1.xpose.msra.mxu0 %v1569
  %1573 = vmatprep.subr.mxu0 0.0
  %1574 = vmatpush1.xpose.msra.mxu0 0.0
  %1575 = vmatprep.subr.mxu0 0.0
  %1576 = vmatpush1.xpose.msra.mxu0 0.0
  %1577 = vmatprep.subr.mxu0 0.0
  %1578 = vmatpush1.xpose.msra.mxu0 0.0
  %1579 = vmatprep.subr.mxu0 0.0
  %1580 = vmatpush1.xpose.msra.mxu0 0.0
  %1581 = vmatprep.subr.mxu0 0.0
  %1582 = vmatpush1.xpose.msra.mxu0 0.0
  %1583 = vmatprep.subr.mxu0 0.0
  %1584 = vmatpush1.xpose.msra.mxu0 0.0
  %1585 = vmatprep.subr.mxu0 0.0
  %1586 = vmatpush1.xpose.msra.mxu0 0.0
  %1587 = vmatprep.subr.mxu0 0.0
  %1588 = vmatpush1.xpose.msra.mxu0 0.0
  %1589 = vmatprep.subr.mxu0 0.0
  %1590 = vmatpush1.xpose.msra.mxu0 0.0
  %1591 = vmatprep.subr.mxu0 0.0
  %1592 = vmatpush1.xpose.msra.mxu0 0.0
  %1593 = vmatprep.subr.mxu0 0.0
  %1594 = vmatpush1.xpose.msra.mxu0 0.0
  %1595 = vmatprep.subr.mxu0 0.0
  %1596 = vmatpush1.xpose.msra.mxu0 0.0
  %1597 = vmatprep.subr.mxu0 0.0
  %1598 = vmatpush1.xpose.msra.mxu0 0.0
  %1599 = vmatprep.subr.mxu0 0.0
  %1600 = vmatpush1.xpose.msra.mxu0 0.0
  %1601 = vmatprep.subr.mxu0 0.0
  %1602 = vmatpush1.xpose.msra.mxu0 0.0
  %1603 = vmatprep.subr.mxu0 0.0
  %1604 = vmatpush1.xpose.msra.mxu0 0.0
  %1605 = vmatprep.subr.mxu0 0.0
  %1606 = vmatpush1.xpose.msra.mxu0 0.0
  %1607 = vmatprep.subr.mxu0 0.0
  %1608 = vmatpush1.xpose.msra.mxu0 0.0
  %1609 = vmatprep.subr.mxu0 0.0
  %1610 = vmatpush1.xpose.msra.mxu0 0.0
  %1611 = vmatprep.subr.mxu0 0.0
  %1612 = vmatpush1.xpose.msra.mxu0 0.0
  %1613 = vmatprep.subr.mxu0 0.0
  %1614 = vmatpush1.xpose.msra.mxu0 0.0
  %1615 = vmatprep.subr.mxu0 0.0
  %1616 = vmatpush1.xpose.msra.mxu0 0.0
  %1617 = vmatprep.subr.mxu0 0.0
  %1618 = vmatpush1.xpose.msra.mxu0 0.0
  %1619 = vmatprep.subr.mxu0 0.0
  %1620 = vmatpush1.xpose.msra.mxu0 0.0
  %1621 = vmatprep.subr.mxu0 0.0
  %1622 = vmatpush1.xpose.msra.mxu0 0.0
  %1623 = vmatprep.subr.mxu0 0.0
  %1624 = vmatpush1.xpose.msra.mxu0 0.0
  %1625 = vmatprep.subr.mxu0 0.0
  %1626 = vmatpush1.xpose.msra.mxu0 0.0
  %1627 = vmatprep.subr.mxu0 0.0
  %1628 = vmatpush1.xpose.msra.mxu0 0.0
  %1629 = vmatprep.subr.mxu0 0.0
  %1630 = vmatpush1.xpose.msra.mxu0 0.0
  %1631 = vmatprep.subr.mxu0 0.0
  %1632 = vmatpush1.xpose.msra.mxu0 0.0
  %1633 = vmatprep.subr.mxu0 0.0
  %1634 = vmatpush1.xpose.msra.mxu0 0.0
  %1635 = vmatprep.mubr.f32.mxu0 0.0
  %1636 = vmatmul.mubr.f32.gmra.mrb[0].mxu0 %v1567
  %v1637 = vpop.f32.mrb[0].mxu0
  %v1638 = vadd.f32 %v93, %v1637
  %v1639 = vpop.f32.mrb[0].mxu0
  %1640 = vdwg.mxu0
  %v1641 = vsel %vm238, %v1638, -inf
  %1642 = vmax.xlane.f32.xlu0 %v1641
  %v1643 = vpop.xlane.xlu0 %1642
  %v1644 = vsub.f32 %v1638, %v1643
  %v1645 = vmul.f32 %v1644, 1.442695
  %v1646 = vpow.pop %v1645
  %v1647 = vsel %vm238, %v1646, 0.0
  %1648 = vadd.xlane.f32.xlu0 %v1647
  %v1649 = vpop.xlane.xlu0 %1648
  %v1650 = vrcp.pop %v1649
  %v1651 = vmul.f32 %v1646, %v1650
  %1652 = vmatprep.subr.mxu0 0.0
  %1653 = vmatpush1.msra.mxu0 %v53
  %1654 = vmatprep.subr.mxu0 0.0
  %1655 = vmatpush1.msra.mxu0 %v54
  %1656 = vmatprep.subr.mxu0 0.0
  %1657 = vmatpush1.msra.mxu0 %v55
  %1658 = vmatprep.subr.mxu0 0.0
  %1659 = vmatpush1.msra.mxu0 %v56
  %1660 = vmatprep.subr.mxu0 0.0
  %1661 = vmatpush1.msra.mxu0 0.0
  %1662 = vmatprep.subr.mxu0 0.0
  %1663 = vmatpush1.msra.mxu0 0.0
  %1664 = vmatprep.subr.mxu0 0.0
  %1665 = vmatpush1.msra.mxu0 0.0
  %1666 = vmatprep.subr.mxu0 0.0
  %1667 = vmatpush1.msra.mxu0 0.0
  %1668 = vmatprep.subr.mxu0 0.0
  %1669 = vmatpush1.msra.mxu0 0.0
  %1670 = vmatprep.subr.mxu0 0.0
  %1671 = vmatpush1.msra.mxu0 0.0
  %1672 = vmatprep.subr.mxu0 0.0
  %1673 = vmatpush1.msra.mxu0 0.0
  %1674 = vmatprep.subr.mxu0 0.0
  %1675 = vmatpush1.msra.mxu0 0.0
  %1676 = vmatprep.subr.mxu0 0.0
  %1677 = vmatpush1.msra.mxu0 0.0
  %1678 = vmatprep.subr.mxu0 0.0
  %1679 = vmatpush1.msra.mxu0 0.0
  %1680 = vmatprep.subr.mxu0 0.0
  %1681 = vmatpush1.msra.mxu0 0.0
  %1682 = vmatprep.subr.mxu0 0.0
  %1683 = vmatpush1.msra.mxu0 0.0
  %1684 = vmatprep.subr.mxu0 0.0
  %1685 = vmatpush1.msra.mxu0 0.0
  %1686 = vmatprep.subr.mxu0 0.0
  %1687 = vmatpush1.msra.mxu0 0.0
  %1688 = vmatprep.subr.mxu0 0.0
  %1689 = vmatpush1.msra.mxu0 0.0
  %1690 = vmatprep.subr.mxu0 0.0
  %1691 = vmatpush1.msra.mxu0 0.0
  %1692 = vmatprep.subr.mxu0 0.0
  %1693 = vmatpush1.msra.mxu0 0.0
  %1694 = vmatprep.subr.mxu0 0.0
  %1695 = vmatpush1.msra.mxu0 0.0
  %1696 = vmatprep.subr.mxu0 0.0
  %1697 = vmatpush1.msra.mxu0 0.0
  %1698 = vmatprep.subr.mxu0 0.0
  %1699 = vmatpush1.msra.mxu0 0.0
  %1700 = vmatprep.subr.mxu0 0.0
  %1701 = vmatpush1.msra.mxu0 0.0
  %1702 = vmatprep.subr.mxu0 0.0
  %1703 = vmatpush1.msra.mxu0 0.0
  %1704 = vmatprep.subr.mxu0 0.0
  %1705 = vmatpush1.msra.mxu0 0.0
  %1706 = vmatprep.subr.mxu0 0.0
  %1707 = vmatpush1.msra.mxu0 0.0
  %1708 = vmatprep.subr.mxu0 0.0
  %1709 = vmatpush1.msra.mxu0 0.0
  %1710 = vmatprep.subr.mxu0 0.0
  %1711 = vmatpush1.msra.mxu0 0.0
  %1712 = vmatprep.subr.mxu0 0.0
  %1713 = vmatpush1.msra.mxu0 0.0
  %1714 = vmatprep.subr.mxu0 0.0
  %1715 = vmatpush1.msra.mxu0 0.0
  %1716 = vmatprep.mubr.f32.mxu0 0.0
  %1717 = vmatmul.mubr.f32.gmra.mrb[0].mxu0 %v1260
  %v1718 = vpop.f32.mrb[0].mxu0
  %v1719 = vadd.f32 0.0, %v1718
  %v1720 = vpop.f32.mrb[0].mxu0
  %1721 = vdwg.mxu0
  %v1723 = vsel %vm238, %v1651, 0
  %1725 = vmatprep.subr.mxu0 0.0
  %1726 = vmatpush1.msra.mxu0 %v1719
  %1727 = vmatprep.subr.mxu0 0.0
  %1728 = vmatpush1.msra.mxu0 0.0
  %1729 = vmatprep.subr.mxu0 0.0
  %1730 = vmatpush1.msra.mxu0 0.0
  %1731 = vmatprep.subr.mxu0 0.0
  %1732 = vmatpush1.msra.mxu0 0.0
  %1733 = vmatprep.subr.mxu0 0.0
  %1734 = vmatpush1.msra.mxu0 0.0
  %1735 = vmatprep.subr.mxu0 0.0
  %1736 = vmatpush1.msra.mxu0 0.0
  %1737 = vmatprep.subr.mxu0 0.0
  %1738 = vmatpush1.msra.mxu0 0.0
  %1739 = vmatprep.subr.mxu0 0.0
  %1740 = vmatpush1.msra.mxu0 0.0
  %1741 = vmatprep.subr.mxu0 0.0
  %1742 = vmatpush1.msra.mxu0 0.0
  %1743 = vmatprep.subr.mxu0 0.0
  %1744 = vmatpush1.msra.mxu0 0.0
  %1745 = vmatprep.subr.mxu0 0.0
  %1746 = vmatpush1.msra.mxu0 0.0
  %1747 = vmatprep.subr.mxu0 0.0
  %1748 = vmatpush1.msra.mxu0 0.0
  %1749 = vmatprep.subr.mxu0 0.0
  %1750 = vmatpush1.msra.mxu0 0.0
  %1751 = vmatprep.subr.mxu0 0.0
  %1752 = vmatpush1.msra.mxu0 0.0
  %1753 = vmatprep.subr.mxu0 0.0
  %1754 = vmatpush1.msra.mxu0 0.0
  %1755 = vmatprep.subr.mxu0 0.0
  %1756 = vmatpush1.msra.mxu0 0.0
  %1757 = vmatprep.subr.mxu0 0.0
  %1758 = vmatpush1.msra.mxu0 0.0
  %1759 = vmatprep.subr.mxu0 0.0
  %1760 = vmatpush1.msra.mxu0 0.0
  %1761 = vmatprep.subr.mxu0 0.0
  %1762 = vmatpush1.msra.mxu0 0.0
  %1763 = vmatprep.subr.mxu0 0.0
  %1764 = vmatpush1.msra.mxu0 0.0
  %1765 = vmatprep.subr.mxu0 0.0
  %1766 = vmatpush1.msra.mxu0 0.0
  %1767 = vmatprep.subr.mxu0 0.0
  %1768 = vmatpush1.msra.mxu0 0.0
  %1769 = vmatprep.subr.mxu0 0.0
  %1770 = vmatpush1.msra.mxu0 0.0
  %1771 = vmatprep.subr.mxu0 0.0
  %1772 = vmatpush1.msra.mxu0 0.0
  %1773 = vmatprep.subr.mxu0 0.0
  %1774 = vmatpush1.msra.mxu0 0.0
  %1775 = vmatprep.subr.mxu0 0.0
  %1776 = vmatpush1.msra.mxu0 0.0
  %1777 = vmatprep.subr.mxu0 0.0
  %1778 = vmatpush1.msra.mxu0 0.0
  %1779 = vmatprep.subr.mxu0 0.0
  %1780 = vmatpush1.msra.mxu0 0.0
  %1781 = vmatprep.subr.mxu0 0.0
  %1782 = vmatpush1.msra.mxu0 0.0
  %1783 = vmatprep.subr.mxu0 0.0
  %1784 = vmatpush1.msra.mxu0 0.0
  %1785 = vmatprep.subr.mxu0 0.0
  %1786 = vmatpush1.msra.mxu0 0.0
  %1787 = vmatprep.subr.mxu0 0.0
  %1788 = vmatpush1.msra.mxu0 0.0
  %1789 = vmatprep.mubr.f32.mxu0 0.0
  %1790 = vmatmul.mubr.f32.gmra.mrb[0].mxu0 %v1723
  %v1791 = vpop.f32.mrb[0].mxu0
  %v1792 = vadd.f32 0.0, %v1791
  %v1793 = vpop.f32.mrb[0].mxu0
  %1794 = vdwg.mxu0
  %v1795 = vadd.f32 %v1562, %v1792
  %v1796 = vadd.f32 %v1418, %v1651
  %1797 = vrot.lane.b32.xlu0 %v1256, 112
  %v1798 = vpop.permute.xlu0 %1797
  %1799 = vrot.lane.b32.xlu0 %v1329, 112
  %v1800 = vpop.permute.xlu0 %1799
  %v1801 = vsel %vm238, %v1798, 0
  %v1803 = vsel %vm238, %v1800, 0
  %1805 = vmatprep.subr.mxu0 0.0
  %1806 = vmatpush1.xpose.msra.mxu0 %v1803
  %1807 = vmatprep.subr.mxu0 0.0
  %1808 = vmatpush1.xpose.msra.mxu0 0.0
  %1809 = vmatprep.subr.mxu0 0.0
  %1810 = vmatpush1.xpose.msra.mxu0 0.0
  %1811 = vmatprep.subr.mxu0 0.0
  %1812 = vmatpush1.xpose.msra.mxu0 0.0
  %1813 = vmatprep.subr.mxu0 0.0
  %1814 = vmatpush1.xpose.msra.mxu0 0.0
  %1815 = vmatprep.subr.mxu0 0.0
  %1816 = vmatpush1.xpose.msra.mxu0 0.0
  %1817 = vmatprep.subr.mxu0 0.0
  %1818 = vmatpush1.xpose.msra.mxu0 0.0
  %1819 = vmatprep.subr.mxu0 0.0
  %1820 = vmatpush1.xpose.msra.mxu0 0.0
  %1821 = vmatprep.subr.mxu0 0.0
  %1822 = vmatpush1.xpose.msra.mxu0 0.0
  %1823 = vmatprep.subr.mxu0 0.0
  %1824 = vmatpush1.xpose.msra.mxu0 0.0
  %1825 = vmatprep.subr.mxu0 0.0
  %1826 = vmatpush1.xpose.msra.mxu0 0.0
  %1827 = vmatprep.subr.mxu0 0.0
  %1828 = vmatpush1.xpose.msra.mxu0 0.0
  %1829 = vmatprep.subr.mxu0 0.0
  %1830 = vmatpush1.xpose.msra.mxu0 0.0
  %1831 = vmatprep.subr.mxu0 0.0
  %1832 = vmatpush1.xpose.msra.mxu0 0.0
  %1833 = vmatprep.subr.mxu0 0.0
  %1834 = vmatpush1.xpose.msra.mxu0 0.0
  %1835 = vmatprep.subr.mxu0 0.0
  %1836 = vmatpush1.xpose.msra.mxu0 0.0
  %1837 = vmatprep.subr.mxu0 0.0
  %1838 = vmatpush1.xpose.msra.mxu0 0.0
  %1839 = vmatprep.subr.mxu0 0.0
  %1840 = vmatpush1.xpose.msra.mxu0 0.0
  %1841 = vmatprep.subr.mxu0 0.0
  %1842 = vmatpush1.xpose.msra.mxu0 0.0
  %1843 = vmatprep.subr.mxu0 0.0
  %1844 = vmatpush1.xpose.msra.mxu0 0.0
  %1845 = vmatprep.subr.mxu0 0.0
  %1846 = vmatpush1.xpose.msra.mxu0 0.0
  %1847 = vmatprep.subr.mxu0 0.0
  %1848 = vmatpush1.xpose.msra.mxu0 0.0
  %1849 = vmatprep.subr.mxu0 0.0
  %1850 = vmatpush1.xpose.msra.mxu0 0.0
  %1851 = vmatprep.subr.mxu0 0.0
  %1852 = vmatpush1.xpose.msra.mxu0 0.0
  %1853 = vmatprep.subr.mxu0 0.0
  %1854 = vmatpush1.xpose.msra.mxu0 0.0
  %1855 = vmatprep.subr.mxu0 0.0
  %1856 = vmatpush1.xpose.msra.mxu0 0.0
  %1857 = vmatprep.subr.mxu0 0.0
  %1858 = vmatpush1.xpose.msra.mxu0 0.0
  %1859 = vmatprep.subr.mxu0 0.0
  %1860 = vmatpush1.xpose.msra.mxu0 0.0
  %1861 = vmatprep.subr.mxu0 0.0
  %1862 = vmatpush1.xpose.msra.mxu0 0.0
  %1863 = vmatprep.subr.mxu0 0.0
  %1864 = vmatpush1.xpose.msra.mxu0 0.0
  %1865 = vmatprep.subr.mxu0 0.0
  %1866 = vmatpush1.xpose.msra.mxu0 0.0
  %1867 = vmatprep.subr.mxu0 0.0
  %1868 = vmatpush1.xpose.msra.mxu0 0.0
  %1869 = vmatprep.mubr.f32.mxu0 0.0
  %1870 = vmatmul.mubr.f32.gmra.mrb[0].mxu0 %v1801
  %v1871 = vpop.f32.mrb[0].mxu0
  %v1872 = vadd.f32 %v93, %v1871
  %v1873 = vpop.f32.mrb[0].mxu0
  %1874 = vdwg.mxu0
  %v1875 = vsel %vm238, %v1872, -inf
  %1876 = vmax.xlane.f32.xlu0 %v1875
  %v1877 = vpop.xlane.xlu0 %1876
  %v1878 = vsub.f32 %v1872, %v1877
  %v1879 = vmul.f32 %v1878, 1.442695
  %v1880 = vpow.pop %v1879
  %v1881 = vsel %vm238, %v1880, 0.0
  %1882 = vadd.xlane.f32.xlu0 %v1881
  %v1883 = vpop.xlane.xlu0 %1882
  %v1884 = vrcp.pop %v1883
  %v1885 = vmul.f32 %v1880, %v1884
  %1886 = vmatprep.subr.mxu0 0.0
  %1887 = vmatpush1.msra.mxu0 %v57
  %1888 = vmatprep.subr.mxu0 0.0
  %1889 = vmatpush1.msra.mxu0 %v58
  %1890 = vmatprep.subr.mxu0 0.0
  %1891 = vmatpush1.msra.mxu0 %v59
  %1892 = vmatprep.subr.mxu0 0.0
  %1893 = vmatpush1.msra.mxu0 %v60
  %1894 = vmatprep.subr.mxu0 0.0
  %1895 = vmatpush1.msra.mxu0 0.0
  %1896 = vmatprep.subr.mxu0 0.0
  %1897 = vmatpush1.msra.mxu0 0.0
  %1898 = vmatprep.subr.mxu0 0.0
  %1899 = vmatpush1.msra.mxu0 0.0
  %1900 = vmatprep.subr.mxu0 0.0
  %1901 = vmatpush1.msra.mxu0 0.0
  %1902 = vmatprep.subr.mxu0 0.0
  %1903 = vmatpush1.msra.mxu0 0.0
  %1904 = vmatprep.subr.mxu0 0.0
  %1905 = vmatpush1.msra.mxu0 0.0
  %1906 = vmatprep.subr.mxu0 0.0
  %1907 = vmatpush1.msra.mxu0 0.0
  %1908 = vmatprep.subr.mxu0 0.0
  %1909 = vmatpush1.msra.mxu0 0.0
  %1910 = vmatprep.subr.mxu0 0.0
  %1911 = vmatpush1.msra.mxu0 0.0
  %1912 = vmatprep.subr.mxu0 0.0
  %1913 = vmatpush1.msra.mxu0 0.0
  %1914 = vmatprep.subr.mxu0 0.0
  %1915 = vmatpush1.msra.mxu0 0.0
  %1916 = vmatprep.subr.mxu0 0.0
  %1917 = vmatpush1.msra.mxu0 0.0
  %1918 = vmatprep.subr.mxu0 0.0
  %1919 = vmatpush1.msra.mxu0 0.0
  %1920 = vmatprep.subr.mxu0 0.0
  %1921 = vmatpush1.msra.mxu0 0.0
  %1922 = vmatprep.subr.mxu0 0.0
  %1923 = vmatpush1.msra.mxu0 0.0
  %1924 = vmatprep.subr.mxu0 0.0
  %1925 = vmatpush1.msra.mxu0 0.0
  %1926 = vmatprep.subr.mxu0 0.0
  %1927 = vmatpush1.msra.mxu0 0.0
  %1928 = vmatprep.subr.mxu0 0.0
  %1929 = vmatpush1.msra.mxu0 0.0
  %1930 = vmatprep.subr.mxu0 0.0
  %1931 = vmatpush1.msra.mxu0 0.0
  %1932 = vmatprep.subr.mxu0 0.0
  %1933 = vmatpush1.msra.mxu0 0.0
  %1934 = vmatprep.subr.mxu0 0.0
  %1935 = vmatpush1.msra.mxu0 0.0
  %1936 = vmatprep.subr.mxu0 0.0
  %1937 = vmatpush1.msra.mxu0 0.0
  %1938 = vmatprep.subr.mxu0 0.0
  %1939 = vmatpush1.msra.mxu0 0.0
  %1940 = vmatprep.subr.mxu0 0.0
  %1941 = vmatpush1.msra.mxu0 0.0
  %1942 = vmatprep.subr.mxu0 0.0
  %1943 = vmatpush1.msra.mxu0 0.0
  %1944 = vmatprep.subr.mxu0 0.0
  %1945 = vmatpush1.msra.mxu0 0.0
  %1946 = vmatprep.subr.mxu0 0.0
  %1947 = vmatpush1.msra.mxu0 0.0
  %1948 = vmatprep.subr.mxu0 0.0
  %1949 = vmatpush1.msra.mxu0 0.0
  %1950 = vmatprep.mubr.f32.mxu0 0.0
  %1951 = vmatmul.mubr.f32.gmra.mrb[0].mxu0 %v1260
  %v1952 = vpop.f32.mrb[0].mxu0
  %v1953 = vadd.f32 0.0, %v1952
  %v1954 = vpop.f32.mrb[0].mxu0
  %1955 = vdwg.mxu0
  %v1957 = vsel %vm238, %v1885, 0
  %1959 = vmatprep.subr.mxu0 0.0
  %1960 = vmatpush1.msra.mxu0 %v1953
  %1961 = vmatprep.subr.mxu0 0.0
  %1962 = vmatpush1.msra.mxu0 0.0
  %1963 = vmatprep.subr.mxu0 0.0
  %1964 = vmatpush1.msra.mxu0 0.0
  %1965 = vmatprep.subr.mxu0 0.0
  %1966 = vmatpush1.msra.mxu0 0.0
  %1967 = vmatprep.subr.mxu0 0.0
  %1968 = vmatpush1.msra.mxu0 0.0
  %1969 = vmatprep.subr.mxu0 0.0
  %1970 = vmatpush1.msra.mxu0 0.0
  %1971 = vmatprep.subr.mxu0 0.0
  %1972 = vmatpush1.msra.mxu0 0.0
  %1973 = vmatprep.subr.mxu0 0.0
  %1974 = vmatpush1.msra.mxu0 0.0
  %1975 = vmatprep.subr.mxu0 0.0
  %1976 = vmatpush1.msra.mxu0 0.0
  %1977 = vmatprep.subr.mxu0 0.0
  %1978 = vmatpush1.msra.mxu0 0.0
  %1979 = vmatprep.subr.mxu0 0.0
  %1980 = vmatpush1.msra.mxu0 0.0
  %1981 = vmatprep.subr.mxu0 0.0
  %1982 = vmatpush1.msra.mxu0 0.0
  %1983 = vmatprep.subr.mxu0 0.0
  %1984 = vmatpush1.msra.mxu0 0.0
  %1985 = vmatprep.subr.mxu0 0.0
  %1986 = vmatpush1.msra.mxu0 0.0
  %1987 = vmatprep.subr.mxu0 0.0
  %1988 = vmatpush1.msra.mxu0 0.0
  %1989 = vmatprep.subr.mxu0 0.0
  %1990 = vmatpush1.msra.mxu0 0.0
  %1991 = vmatprep.subr.mxu0 0.0
  %1992 = vmatpush1.msra.mxu0 0.0
  %1993 = vmatprep.subr.mxu0 0.0
  %1994 = vmatpush1.msra.mxu0 0.0
  %1995 = vmatprep.subr.mxu0 0.0
  %1996 = vmatpush1.msra.mxu0 0.0
  %1997 = vmatprep.subr.mxu0 0.0
  %1998 = vmatpush1.msra.mxu0 0.0
  %1999 = vmatprep.subr.mxu0 0.0
  %2000 = vmatpush1.msra.mxu0 0.0
  %2001 = vmatprep.subr.mxu0 0.0
  %2002 = vmatpush1.msra.mxu0 0.0
  %2003 = vmatprep.subr.mxu0 0.0
  %2004 = vmatpush1.msra.mxu0 0.0
  %2005 = vmatprep.subr.mxu0 0.0
  %2006 = vmatpush1.msra.mxu0 0.0
  %2007 = vmatprep.subr.mxu0 0.0
  %2008 = vmatpush1.msra.mxu0 0.0
  %2009 = vmatprep.subr.mxu0 0.0
  %2010 = vmatpush1.msra.mxu0 0.0
  %2011 = vmatprep.subr.mxu0 0.0
  %2012 = vmatpush1.msra.mxu0 0.0
  %2013 = vmatprep.subr.mxu0 0.0
  %2014 = vmatpush1.msra.mxu0 0.0
  %2015 = vmatprep.subr.mxu0 0.0
  %2016 = vmatpush1.msra.mxu0 0.0
  %2017 = vmatprep.subr.mxu0 0.0
  %2018 = vmatpush1.msra.mxu0 0.0
  %2019 = vmatprep.subr.mxu0 0.0
  %2020 = vmatpush1.msra.mxu0 0.0
  %2021 = vmatprep.subr.mxu0 0.0
  %2022 = vmatpush1.msra.mxu0 0.0
  %2023 = vmatprep.mubr.f32.mxu0 0.0
  %2024 = vmatmul.mubr.f32.gmra.mrb[0].mxu0 %v1957
  %v2025 = vpop.f32.mrb[0].mxu0
  %v2026 = vadd.f32 0.0, %v2025
  %v2027 = vpop.f32.mrb[0].mxu0
  %2028 = vdwg.mxu0
  %v2029 = vadd.f32 %v1795, %v2026
  %v2030 = vadd.f32 %v1796, %v1885
  %2031 = vrot.lane.b32.xlu0 %v1256, 104
  %v2032 = vpop.permute.xlu0 %2031
  %2033 = vrot.lane.b32.xlu0 %v1329, 104
  %v2034 = vpop.permute.xlu0 %2033
  %v2035 = vsel %vm238, %v2032, 0
  %v2037 = vsel %vm238, %v2034, 0
  %2039 = vmatprep.subr.mxu0 0.0
  %2040 = vmatpush1.xpose.msra.mxu0 %v2037
  %2041 = vmatprep.subr.mxu0 0.0
  %2042 = vmatpush1.xpose.msra.mxu0 0.0
  %2043 = vmatprep.subr.mxu0 0.0
  %2044 = vmatpush1.xpose.msra.mxu0 0.0
  %2045 = vmatprep.subr.mxu0 0.0
  %2046 = vmatpush1.xpose.msra.mxu0 0.0
  %2047 = vmatprep.subr.mxu0 0.0
  %2048 = vmatpush1.xpose.msra.mxu0 0.0
  %2049 = vmatprep.subr.mxu0 0.0
  %2050 = vmatpush1.xpose.msra.mxu0 0.0
  %2051 = vmatprep.subr.mxu0 0.0
  %2052 = vmatpush1.xpose.msra.mxu0 0.0
  %2053 = vmatprep.subr.mxu0 0.0
  %2054 = vmatpush1.xpose.msra.mxu0 0.0
  %2055 = vmatprep.subr.mxu0 0.0
  %2056 = vmatpush1.xpose.msra.mxu0 0.0
  %2057 = vmatprep.subr.mxu0 0.0
  %2058 = vmatpush1.xpose.msra.mxu0 0.0
  %2059 = vmatprep.subr.mxu0 0.0
  %2060 = vmatpush1.xpose.msra.mxu0 0.0
  %2061 = vmatprep.subr.mxu0 0.0
  %2062 = vmatpush1.xpose.msra.mxu0 0.0
  %2063 = vmatprep.subr.mxu0 0.0
  %2064 = vmatpush1.xpose.msra.mxu0 0.0
  %2065 = vmatprep.subr.mxu0 0.0
  %2066 = vmatpush1.xpose.msra.mxu0 0.0
  %2067 = vmatprep.subr.mxu0 0.0
  %2068 = vmatpush1.xpose.msra.mxu0 0.0
  %2069 = vmatprep.subr.mxu0 0.0
  %2070 = vmatpush1.xpose.msra.mxu0 0.0
  %2071 = vmatprep.subr.mxu0 0.0
  %2072 = vmatpush1.xpose.msra.mxu0 0.0
  %2073 = vmatprep.subr.mxu0 0.0
  %2074 = vmatpush1.xpose.msra.mxu0 0.0
  %2075 = vmatprep.subr.mxu0 0.0
  %2076 = vmatpush1.xpose.msra.mxu0 0.0
  %2077 = vmatprep.subr.mxu0 0.0
  %2078 = vmatpush1.xpose.msra.mxu0 0.0
  %2079 = vmatprep.subr.mxu0 0.0
  %2080 = vmatpush1.xpose.msra.mxu0 0.0
  %2081 = vmatprep.subr.mxu0 0.0
  %2082 = vmatpush1.xpose.msra.mxu0 0.0
  %2083 = vmatprep.subr.mxu0 0.0
  %2084 = vmatpush1.xpose.msra.mxu0 0.0
  %2085 = vmatprep.subr.mxu0 0.0
  %2086 = vmatpush1.xpose.msra.mxu0 0.0
  %2087 = vmatprep.subr.mxu0 0.0
  %2088 = vmatpush1.xpose.msra.mxu0 0.0
  %2089 = vmatprep.subr.mxu0 0.0
  %2090 = vmatpush1.xpose.msra.mxu0 0.0
  %2091 = vmatprep.subr.mxu0 0.0
  %2092 = vmatpush1.xpose.msra.mxu0 0.0
  %2093 = vmatprep.subr.mxu0 0.0
  %2094 = vmatpush1.xpose.msra.mxu0 0.0
  %2095 = vmatprep.subr.mxu0 0.0
  %2096 = vmatpush1.xpose.msra.mxu0 0.0
  %2097 = vmatprep.subr.mxu0 0.0
  %2098 = vmatpush1.xpose.msra.mxu0 0.0
  %2099 = vmatprep.subr.mxu0 0.0
  %2100 = vmatpush1.xpose.msra.mxu0 0.0
  %2101 = vmatprep.subr.mxu0 0.0
  %2102 = vmatpush1.xpose.msra.mxu0 0.0
  %2103 = vmatprep.mubr.f32.mxu0 0.0
  %2104 = vmatmul.mubr.f32.gmra.mrb[0].mxu0 %v2035
  %v2105 = vpop.f32.mrb[0].mxu0
  %v2106 = vadd.f32 %v93, %v2105
  %v2107 = vpop.f32.mrb[0].mxu0
  %2108 = vdwg.mxu0
  %v2109 = vsel %vm238, %v2106, -inf
  %2110 = vmax.xlane.f32.xlu0 %v2109
  %v2111 = vpop.xlane.xlu0 %2110
  %v2112 = vsub.f32 %v2106, %v2111
  %v2113 = vmul.f32 %v2112, 1.442695
  %v2114 = vpow.pop %v2113
  %v2115 = vsel %vm238, %v2114, 0.0
  %2116 = vadd.xlane.f32.xlu0 %v2115
  %v2117 = vpop.xlane.xlu0 %2116
  %v2118 = vrcp.pop %v2117
  %v2119 = vmul.f32 %v2114, %v2118
  %2120 = vmatprep.subr.mxu0 0.0
  %2121 = vmatpush1.msra.mxu0 %v61
  %2122 = vmatprep.subr.mxu0 0.0
  %2123 = vmatpush1.msra.mxu0 %v62
  %2124 = vmatprep.subr.mxu0 0.0
  %2125 = vmatpush1.msra.mxu0 %v63
  %2126 = vmatprep.subr.mxu0 0.0
  %2127 = vmatpush1.msra.mxu0 %v64
  %2128 = vmatprep.subr.mxu0 0.0
  %2129 = vmatpush1.msra.mxu0 0.0
  %2130 = vmatprep.subr.mxu0 0.0
  %2131 = vmatpush1.msra.mxu0 0.0
  %2132 = vmatprep.subr.mxu0 0.0
  %2133 = vmatpush1.msra.mxu0 0.0
  %2134 = vmatprep.subr.mxu0 0.0
  %2135 = vmatpush1.msra.mxu0 0.0
  %2136 = vmatprep.subr.mxu0 0.0
  %2137 = vmatpush1.msra.mxu0 0.0
  %2138 = vmatprep.subr.mxu0 0.0
  %2139 = vmatpush1.msra.mxu0 0.0
  %2140 = vmatprep.subr.mxu0 0.0
  %2141 = vmatpush1.msra.mxu0 0.0
  %2142 = vmatprep.subr.mxu0 0.0
  %2143 = vmatpush1.msra.mxu0 0.0
  %2144 = vmatprep.subr.mxu0 0.0
  %2145 = vmatpush1.msra.mxu0 0.0
  %2146 = vmatprep.subr.mxu0 0.0
  %2147 = vmatpush1.msra.mxu0 0.0
  %2148 = vmatprep.subr.mxu0 0.0
  %2149 = vmatpush1.msra.mxu0 0.0
  %2150 = vmatprep.subr.mxu0 0.0
  %2151 = vmatpush1.msra.mxu0 0.0
  %2152 = vmatprep.subr.mxu0 0.0
  %2153 = vmatpush1.msra.mxu0 0.0
  %2154 = vmatprep.subr.mxu0 0.0
  %2155 = vmatpush1.msra.mxu0 0.0
  %2156 = vmatprep.subr.mxu0 0.0
  %2157 = vmatpush1.msra.mxu0 0.0
  %2158 = vmatprep.subr.mxu0 0.0
  %2159 = vmatpush1.msra.mxu0 0.0
  %2160 = vmatprep.subr.mxu0 0.0
  %2161 = vmatpush1.msra.mxu0 0.0
  %2162 = vmatprep.subr.mxu0 0.0
  %2163 = vmatpush1.msra.mxu0 0.0
  %2164 = vmatprep.subr.mxu0 0.0
  %2165 = vmatpush1.msra.mxu0 0.0
  %2166 = vmatprep.subr.mxu0 0.0
  %2167 = vmatpush1.msra.mxu0 0.0
  %2168 = vmatprep.subr.mxu0 0.0
  %2169 = vmatpush1.msra.mxu0 0.0
  %2170 = vmatprep.subr.mxu0 0.0
  %2171 = vmatpush1.msra.mxu0 0.0
  %2172 = vmatprep.subr.mxu0 0.0
  %2173 = vmatpush1.msra.mxu0 0.0
  %2174 = vmatprep.subr.mxu0 0.0
  %2175 = vmatpush1.msra.mxu0 0.0
  %2176 = vmatprep.subr.mxu0 0.0
  %2177 = vmatpush1.msra.mxu0 0.0
  %2178 = vmatprep.subr.mxu0 0.0
  %2179 = vmatpush1.msra.mxu0 0.0
  %2180 = vmatprep.subr.mxu0 0.0
  %2181 = vmatpush1.msra.mxu0 0.0
  %2182 = vmatprep.subr.mxu0 0.0
  %2183 = vmatpush1.msra.mxu0 0.0
  %2184 = vmatprep.mubr.f32.mxu0 0.0
  %2185 = vmatmul.mubr.f32.gmra.mrb[0].mxu0 %v1260
  %v2186 = vpop.f32.mrb[0].mxu0
  %v2187 = vadd.f32 0.0, %v2186
  %v2188 = vpop.f32.mrb[0].mxu0
  %2189 = vdwg.mxu0
  %v2191 = vsel %vm238, %v2119, 0
  %2193 = vmatprep.subr.mxu0 0.0
  %2194 = vmatpush1.msra.mxu0 %v2187
  %2195 = vmatprep.subr.mxu0 0.0
  %2196 = vmatpush1.msra.mxu0 0.0
  %2197 = vmatprep.subr.mxu0 0.0
  %2198 = vmatpush1.msra.mxu0 0.0
  %2199 = vmatprep.subr.mxu0 0.0
  %2200 = vmatpush1.msra.mxu0 0.0
  %2201 = vmatprep.subr.mxu0 0.0
  %2202 = vmatpush1.msra.mxu0 0.0
  %2203 = vmatprep.subr.mxu0 0.0
  %2204 = vmatpush1.msra.mxu0 0.0
  %2205 = vmatprep.subr.mxu0 0.0
  %2206 = vmatpush1.msra.mxu0 0.0
  %2207 = vmatprep.subr.mxu0 0.0
  %2208 = vmatpush1.msra.mxu0 0.0
  %2209 = vmatprep.subr.mxu0 0.0
  %2210 = vmatpush1.msra.mxu0 0.0
  %2211 = vmatprep.subr.mxu0 0.0
  %2212 = vmatpush1.msra.mxu0 0.0
  %2213 = vmatprep.subr.mxu0 0.0
  %2214 = vmatpush1.msra.mxu0 0.0
  %2215 = vmatprep.subr.mxu0 0.0
  %2216 = vmatpush1.msra.mxu0 0.0
  %2217 = vmatprep.subr.mxu0 0.0
  %2218 = vmatpush1.msra.mxu0 0.0
  %2219 = vmatprep.subr.mxu0 0.0
  %2220 = vmatpush1.msra.mxu0 0.0
  %2221 = vmatprep.subr.mxu0 0.0
  %2222 = vmatpush1.msra.mxu0 0.0
  %2223 = vmatprep.subr.mxu0 0.0
  %2224 = vmatpush1.msra.mxu0 0.0
  %2225 = vmatprep.subr.mxu0 0.0
  %2226 = vmatpush1.msra.mxu0 0.0
  %2227 = vmatprep.subr.mxu0 0.0
  %2228 = vmatpush1.msra.mxu0 0.0
  %2229 = vmatprep.subr.mxu0 0.0
  %2230 = vmatpush1.msra.mxu0 0.0
  %2231 = vmatprep.subr.mxu0 0.0
  %2232 = vmatpush1.msra.mxu0 0.0
  %2233 = vmatprep.subr.mxu0 0.0
  %2234 = vmatpush1.msra.mxu0 0.0
  %2235 = vmatprep.subr.mxu0 0.0
  %2236 = vmatpush1.msra.mxu0 0.0
  %2237 = vmatprep.subr.mxu0 0.0
  %2238 = vmatpush1.msra.mxu0 0.0
  %2239 = vmatprep.subr.mxu0 0.0
  %2240 = vmatpush1.msra.mxu0 0.0
  %2241 = vmatprep.subr.mxu0 0.0
  %2242 = vmatpush1.msra.mxu0 0.0
  %2243 = vmatprep.subr.mxu0 0.0
  %2244 = vmatpush1.msra.mxu0 0.0
  %2245 = vmatprep.subr.mxu0 0.0
  %2246 = vmatpush1.msra.mxu0 0.0
  %2247 = vmatprep.subr.mxu0 0.0
  %2248 = vmatpush1.msra.mxu0 0.0
  %2249 = vmatprep.subr.mxu0 0.0
  %2250 = vmatpush1.msra.mxu0 0.0
  %2251 = vmatprep.subr.mxu0 0.0
  %2252 = vmatpush1.msra.mxu0 0.0
  %2253 = vmatprep.subr.mxu0 0.0
  %2254 = vmatpush1.msra.mxu0 0.0
  %2255 = vmatprep.subr.mxu0 0.0
  %2256 = vmatpush1.msra.mxu0 0.0
  %2257 = vmatprep.mubr.f32.mxu0 0.0
  %2258 = vmatmul.mubr.f32.gmra.mrb[0].mxu0 %v2191
  %v2259 = vpop.f32.mrb[0].mxu0
  %v2260 = vadd.f32 0.0, %v2259
  %v2261 = vpop.f32.mrb[0].mxu0
  %2262 = vdwg.mxu0
  %v2263 = vadd.f32 %v2029, %v2260
  %v2264 = vadd.f32 %v2030, %v2119
  %v2265 = vadd.f32 %v1185, %v2263
  %v2266 = vsel %vm94, %v2265, 0.0
  %2267 = vadd.xlane.f32.xlu0 %v2266
  %v2268 = vpop.xlane.xlu0 %2267
  %v2269 = vmul.f32 %v2268, %v1173
  %v2270 = vsub.f32 %v2265, %v2269
  %v2271 = vmul.f32 %v2270, %v2270
  %v2272 = vsel %vm94, %v2271, 0.0
  %2273 = vadd.xlane.f32.xlu0 %v2272
  %v2274 = vpop.xlane.xlu0 %2273
  %v2275 = vmul.f32 %v2274, %v1173
  %v2276 = vadd.f32 %v2275, 1e-05
  %v2277 = vrsqrt.pop %v2276
  %v2278 = vmul.f32 %v2270, %v2277
  %v2279 = vmul.f32 %v2278, %v85
  %v2280 = vadd.f32 %v2279, %v88
  %v2282 = vsel %vm94, %v2280, 0
  %2284 = vmatprep.subr.mxu0 0.0
  %2285 = vmatpush1.msra.mxu0 %v65
  %2286 = vmatprep.subr.mxu0 0.0
  %2287 = vmatpush1.msra.mxu0 %v66
  %2288 = vmatprep.subr.mxu0 0.0
  %2289 = vmatpush1.msra.mxu0 %v67
  %2290 = vmatprep.subr.mxu0 0.0
  %2291 = vmatpush1.msra.mxu0 %v68
  %2292 = vmatprep.subr.mxu0 0.0
  %2293 = vmatpush1.msra.mxu0 0.0
  %2294 = vmatprep.subr.mxu0 0.0
  %2295 = vmatpush1.msra.mxu0 0.0
  %2296 = vmatprep.subr.mxu0 0.0
  %2297 = vmatpush1.msra.mxu0 0.0
  %2298 = vmatprep.subr.mxu0 0.0
  %2299 = vmatpush1.msra.mxu0 0.0
  %2300 = vmatprep.subr.mxu0 0.0
  %2301 = vmatpush1.msra.mxu0 0.0
  %2302 = vmatprep.subr.mxu0 0.0
  %2303 = vmatpush1.msra.mxu0 0.0
  %2304 = vmatprep.subr.mxu0 0.0
  %2305 = vmatpush1.msra.mxu0 0.0
  %2306 = vmatprep.subr.mxu0 0.0
  %2307 = vmatpush1.msra.mxu0 0.0
  %2308 = vmatprep.subr.mxu0 0.0
  %2309 = vmatpush1.msra.mxu0 0.0
  %2310 = vmatprep.subr.mxu0 0.0
  %2311 = vmatpush1.msra.mxu0 0.0
  %2312 = vmatprep.subr.mxu0 0.0
  %2313 = vmatpush1.msra.mxu0 0.0
  %2314 = vmatprep.subr.mxu0 0.0
  %2315 = vmatpush1.msra.mxu0 0.0
  %2316 = vmatprep.subr.mxu0 0.0
  %2317 = vmatpush1.msra.mxu0 0.0
  %2318 = vmatprep.subr.mxu0 0.0
  %2319 = vmatpush1.msra.mxu0 0.0
  %2320 = vmatprep.subr.mxu0 0.0
  %2321 = vmatpush1.msra.mxu0 0.0
  %2322 = vmatprep.subr.mxu0 0.0
  %2323 = vmatpush1.msra.mxu0 0.0
  %2324 = vmatprep.subr.mxu0 0.0
  %2325 = vmatpush1.msra.mxu0 0.0
  %2326 = vmatprep.subr.mxu0 0.0
  %2327 = vmatpush1.msra.mxu0 0.0
  %2328 = vmatprep.subr.mxu0 0.0
  %2329 = vmatpush1.msra.mxu0 0.0
  %2330 = vmatprep.subr.mxu0 0.0
  %2331 = vmatpush1.msra.mxu0 0.0
  %2332 = vmatprep.subr.mxu0 0.0
  %2333 = vmatpush1.msra.mxu0 0.0
  %2334 = vmatprep.subr.mxu0 0.0
  %2335 = vmatpush1.msra.mxu0 0.0
  %2336 = vmatprep.subr.mxu0 0.0
  %2337 = vmatpush1.msra.mxu0 0.0
  %2338 = vmatprep.subr.mxu0 0.0
  %2339 = vmatpush1.msra.mxu0 0.0
  %2340 = vmatprep.subr.mxu0 0.0
  %2341 = vmatpush1.msra.mxu0 0.0
  %2342 = vmatprep.subr.mxu0 0.0
  %2343 = vmatpush1.msra.mxu0 0.0
  %2344 = vmatprep.subr.mxu0 0.0
  %2345 = vmatpush1.msra.mxu0 0.0
  %2346 = vmatprep.subr.mxu0 0.0
  %2347 = vmatpush1.msra.mxu0 0.0
  %2348 = vmatprep.mubr.f32.mxu0 0.0
  %2349 = vmatmul.mubr.f32.gmra.mrb[0].mxu0 %v2282
  %v2350 = vpop.f32.mrb[0].mxu0
  %v2351 = vadd.f32 %v81, %v2350
  %v2352 = vpop.f32.mrb[0].mxu0
  %2353 = vdwg.mxu0
  %v2354 = vmax.f32 %v2351, 0.0
  %2355 = vmatprep.subr.mxu0 0.0
  %2356 = vmatpush1.msra.mxu0 %v69
  %2357 = vmatprep.subr.mxu0 0.0
  %2358 = vmatpush1.msra.mxu0 %v70
  %2359 = vmatprep.subr.mxu0 0.0
  %2360 = vmatpush1.msra.mxu0 %v71
  %2361 = vmatprep.subr.mxu0 0.0
  %2362 = vmatpush1.msra.mxu0 %v72
  %2363 = vmatprep.subr.mxu0 0.0
  %2364 = vmatpush1.msra.mxu0 0.0
  %2365 = vmatprep.subr.mxu0 0.0
  %2366 = vmatpush1.msra.mxu0 0.0
  %2367 = vmatprep.subr.mxu0 0.0
  %2368 = vmatpush1.msra.mxu0 0.0
  %2369 = vmatprep.subr.mxu0 0.0
  %2370 = vmatpush1.msra.mxu0 0.0
  %2371 = vmatprep.subr.mxu0 0.0
  %2372 = vmatpush1.msra.mxu0 0.0
  %2373 = vmatprep.subr.mxu0 0.0
  %2374 = vmatpush1.msra.mxu0 0.0
  %2375 = vmatprep.subr.mxu0 0.0
  %2376 = vmatpush1.msra.mxu0 0.0
  %2377 = vmatprep.subr.mxu0 0.0
  %2378 = vmatpush1.msra.mxu0 0.0
  %2379 = vmatprep.subr.mxu0 0.0
  %2380 = vmatpush1.msra.mxu0 0.0
  %2381 = vmatprep.subr.mxu0 0.0
  %2382 = vmatpush1.msra.mxu0 0.0
  %2383 = vmatprep.subr.mxu0 0.0
  %2384 = vmatpush1.msra.mxu0 0.0
  %2385 = vmatprep.subr.mxu0 0.0
  %2386 = vmatpush1.msra.mxu0 0.0
  %2387 = vmatprep.subr.mxu0 0.0
  %2388 = vmatpush1.msra.mxu0 0.0
  %2389 = vmatprep.subr.mxu0 0.0
  %2390 = vmatpush1.msra.mxu0 0.0
  %2391 = vmatprep.subr.mxu0 0.0
  %2392 = vmatpush1.msra.mxu0 0.0
  %2393 = vmatprep.subr.mxu0 0.0
  %2394 = vmatpush1.msra.mxu0 0.0
  %2395 = vmatprep.subr.mxu0 0.0
  %2396 = vmatpush1.msra.mxu0 0.0
  %2397 = vmatprep.subr.mxu0 0.0
  %2398 = vmatpush1.msra.mxu0 0.0
  %2399 = vmatprep.subr.mxu0 0.0
  %2400 = vmatpush1.msra.mxu0 0.0
  %2401 = vmatprep.subr.mxu0 0.0
  %2402 = vmatpush1.msra.mxu0 0.0
  %2403 = vmatprep.subr.mxu0 0.0
  %2404 = vmatpush1.msra.mxu0 0.0
  %2405 = vmatprep.subr.mxu0 0.0
  %2406 = vmatpush1.msra.mxu0 0.0
  %2407 = vmatprep.subr.mxu0 0.0
  %2408 = vmatpush1.msra.mxu0 0.0
  %2409 = vmatprep.subr.mxu0 0.0
  %2410 = vmatpush1.msra.mxu0 0.0
  %2411 = vmatprep.subr.mxu0 0.0
  %2412 = vmatpush1.msra.mxu0 0.0
  %2413 = vmatprep.subr.mxu0 0.0
  %2414 = vmatpush1.msra.mxu0 0.0
  %2415 = vmatprep.subr.mxu0 0.0
  %2416 = vmatpush1.msra.mxu0 0.0
  %2417 = vmatprep.subr.mxu0 0.0
  %2418 = vmatpush1.msra.mxu0 0.0
  %2419 = vmatprep.mubr.f32.mxu0 0.0
  %2420 = vmatmul.mubr.f32.gmra.mrb[0].mxu0 %v2282
  %v2421 = vpop.f32.mrb[0].mxu0
  %v2422 = vadd.f32 %v82, %v2421
  %v2423 = vpop.f32.mrb[0].mxu0
  %2424 = vdwg.mxu0
  %v2425 = vmax.f32 %v2422, 0.0
  %v2427 = vsel %vm94, %v2425, 0
  %2429 = vmatprep.subr.mxu0 0.0
  %2430 = vmatpush1.msra.mxu0 %v77
  %2431 = vmatprep.subr.mxu0 0.0
  %2432 = vmatpush1.msra.mxu0 %v78
  %2433 = vmatprep.subr.mxu0 0.0
  %2434 = vmatpush1.msra.mxu0 %v79
  %2435 = vmatprep.subr.mxu0 0.0
  %2436 = vmatpush1.msra.mxu0 %v80
  %2437 = vmatprep.subr.mxu0 0.0
  %2438 = vmatpush1.msra.mxu0 0.0
  %2439 = vmatprep.subr.mxu0 0.0
  %2440 = vmatpush1.msra.mxu0 0.0
  %2441 = vmatprep.subr.mxu0 0.0
  %2442 = vmatpush1.msra.mxu0 0.0
  %2443 = vmatprep.subr.mxu0 0.0
  %2444 = vmatpush1.msra.mxu0 0.0
  %2445 = vmatprep.subr.mxu0 0.0
  %2446 = vmatpush1.msra.mxu0 0.0
  %2447 = vmatprep.subr.mxu0 0.0
  %2448 = vmatpush1.msra.mxu0 0.0
  %2449 = vmatprep.subr.mxu0 0.0
  %2450 = vmatpush1.msra.mxu0 0.0
  %2451 = vmatprep.subr.mxu0 0.0
  %2452 = vmatpush1.msra.mxu0 0.0
  %2453 = vmatprep.subr.mxu0 0.0
  %2454 = vmatpush1.msra.mxu0 0.0
  %2455 = vmatprep.subr.mxu0 0.0
  %2456 = vmatpush1.msra.mxu0 0.0
  %2457 = vmatprep.subr.mxu0 0.0
  %2458 = vmatpush1.msra.mxu0 0.0
  %2459 = vmatprep.subr.mxu0 0.0
  %2460 = vmatpush1.msra.mxu0 0.0
  %2461 = vmatprep.subr.mxu0 0.0
  %2462 = vmatpush1.msra.mxu0 0.0
  %2463 = vmatprep.subr.mxu0 0.0
  %2464 = vmatpush1.msra.mxu0 0.0
  %2465 = vmatprep.subr.mxu0 0.0
  %2466 = vmatpush1.msra.mxu0 0.0
  %2467 = vmatprep.subr.mxu0 0.0
  %2468 = vmatpush1.msra.mxu0 0.0
  %2469 = vmatprep.subr.mxu0 0.0
  %2470 = vmatpush1.msra.mxu0 0.0
  %2471 = vmatprep.subr.mxu0 0.0
  %2472 = vmatpush1.msra.mxu0 0.0
  %2473 = vmatprep.subr.mxu0 0.0
  %2474 = vmatpush1.msra.mxu0 0.0
  %2475 = vmatprep.subr.mxu0 0.0
  %2476 = vmatpush1.msra.mxu0 0.0
  %2477 = vmatprep.subr.mxu0 0.0
  %2478 = vmatpush1.msra.mxu0 0.0
  %2479 = vmatprep.subr.mxu0 0.0
  %2480 = vmatpush1.msra.mxu0 0.0
  %2481 = vmatprep.subr.mxu0 0.0
  %2482 = vmatpush1.msra.mxu0 0.0
  %2483 = vmatprep.subr.mxu0 0.0
  %2484 = vmatpush1.msra.mxu0 0.0
  %2485 = vmatprep.subr.mxu0 0.0
  %2486 = vmatpush1.msra.mxu0 0.0
  %2487 = vmatprep.subr.mxu0 0.0
  %2488 = vmatpush1.msra.mxu0 0.0
  %2489 = vmatprep.subr.mxu0 0.0
  %2490 = vmatpush1.msra.mxu0 0.0
  %2491 = vmatprep.subr.mxu0 0.0
  %2492 = vmatpush1.msra.mxu0 0.0
  %2493 = vmatprep.mubr.f32.mxu0 0.0
  %2494 = vmatmul.mubr.f32.gmra.mrb[0].mxu0 %v2427
  %v2495 = vpop.f32.mrb[0].mxu0
  %v2496 = vadd.f32 0.0, %v2495
  %v2497 = vpop.f32.mrb[0].mxu0
  %2498 = vdwg.mxu0
  %v2500 = vsel %vm94, %v2354, 0
  %2502 = vmatprep.subr.mxu0 0.0
  %2503 = vmatpush1.msra.mxu0 %v73
  %2504 = vmatprep.subr.mxu0 0.0
  %2505 = vmatpush1.msra.mxu0 %v74
  %2506 = vmatprep.subr.mxu0 0.0
  %2507 = vmatpush1.msra.mxu0 %v75
  %2508 = vmatprep.subr.mxu0 0.0
  %2509 = vmatpush1.msra.mxu0 %v76
  %2510 = vmatprep.subr.mxu0 0.0
  %2511 = vmatpush1.msra.mxu0 0.0
  %2512 = vmatprep.subr.mxu0 0.0
  %2513 = vmatpush1.msra.mxu0 0.0
  %2514 = vmatprep.subr.mxu0 0.0
  %2515 = vmatpush1.msra.mxu0 0.0
  %2516 = vmatprep.subr.mxu0 0.0
  %2517 = vmatpush1.msra.mxu0 0.0
  %2518 = vmatprep.subr.mxu0 0.0
  %2519 = vmatpush1.msra.mxu0 0.0
  %2520 = vmatprep.subr.mxu0 0.0
  %2521 = vmatpush1.msra.mxu0 0.0
  %2522 = vmatprep.subr.mxu0 0.0
  %2523 = vmatpush1.msra.mxu0 0.0
  %2524 = vmatprep.subr.mxu0 0.0
  %2525 = vmatpush1.msra.mxu0 0.0
  %2526 = vmatprep.subr.mxu0 0.0
  %2527 = vmatpush1.msra.mxu0 0.0
  %2528 = vmatprep.subr.mxu0 0.0
  %2529 = vmatpush1.msra.mxu0 0.0
  %2530 = vmatprep.subr.mxu0 0.0
  %2531 = vmatpush1.msra.mxu0 0.0
  %2532 = vmatprep.subr.mxu0 0.0
  %2533 = vmatpush1.msra.mxu0 0.0
  %2534 = vmatprep.subr.mxu0 0.0
  %2535 = vmatpush1.msra.mxu0 0.0
  %2536 = vmatprep.subr.mxu0 0.0
  %2537 = vmatpush1.msra.mxu0 0.0
  %2538 = vmatprep.subr.mxu0 0.0
  %2539 = vmatpush1.msra.mxu0 0.0
  %2540 = vmatprep.subr.mxu0 0.0
  %2541 = vmatpush1.msra.mxu0 0.0
  %2542 = vmatprep.subr.mxu0 0.0
  %2543 = vmatpush1.msra.mxu0 0.0
  %2544 = vmatprep.subr.mxu0 0.0
  %2545 = vmatpush1.msra.mxu0 0.0
  %2546 = vmatprep.subr.mxu0 0.0
  %2547 = vmatpush1.msra.mxu0 0.0
  %2548 = vmatprep.subr.mxu0 0.0
  %2549 = vmatpush1.msra.mxu0 0.0
  %2550 = vmatprep.subr.mxu0 0.0
  %2551 = vmatpush1.msra.mxu0 0.0
  %2552 = vmatprep.subr.mxu0 0.0
  %2553 = vmatpush1.msra.mxu0 0.0
  %2554 = vmatprep.subr.mxu0 0.0
  %2555 = vmatpush1.msra.mxu0 0.0
  %2556 = vmatprep.subr.mxu0 0.0
  %2557 = vmatpush1.msra.mxu0 0.0
  %2558 = vmatprep.subr.mxu0 0.0
  %2559 = vmatpush1.msra.mxu0 0.0
  %2560 = vmatprep.subr.mxu0 0.0
  %2561 = vmatpush1.msra.mxu0 0.0
  %2562 = vmatprep.subr.mxu0 0.0
  %2563 = vmatpush1.msra.mxu0 0.0
  %2564 = vmatprep.subr.mxu0 0.0
  %2565 = vmatpush1.msra.mxu0 0.0
  %2566 = vmatprep.mubr.f32.mxu0 0.0
  %2567 = vmatmul.mubr.f32.gmra.mrb[0].mxu0 %v2500
  %v2568 = vpop.f32.mrb[0].mxu0
  %v2569 = vadd.f32 %v2496, %v2568
  %v2570 = vpop.f32.mrb[0].mxu0
  %2571 = vdwg.mxu0
  %v2572 = vadd.f32 %v2569, %v83
  %v2573 = vadd.f32 %v2280, %v2572
  %v2574 = vsel %vm94, %v2573, 0.0
  %2575 = vadd.xlane.f32.xlu0 %v2574
  %v2576 = vpop.xlane.xlu0 %2575
  %v2577 = vmul.f32 %v2576, %v1173
  %v2578 = vsub.f32 %v2573, %v2577
  %v2579 = vmul.f32 %v2578, %v2578
  %v2580 = vsel %vm94, %v2579, 0.0
  %2581 = vadd.xlane.f32.xlu0 %v2580
  %v2582 = vpop.xlane.xlu0 %2581
  %v2583 = vmul.f32 %v2582, %v1173
  %v2584 = vadd.f32 %v2583, 1e-05
  %v2585 = vrsqrt.pop %v2584
  %v2586 = vmul.f32 %v2578, %v2585
  %v2587 = vmul.f32 %v2586, %v86
  %v2588 = vadd.f32 %v2587, %v89
  %v2589 = vmul.f32 %v2264, 0.25
  %s2590 = scalar_lea.vmem %s0, 32
  %v2591 = vld [vmem:[%s2590] sm:$0xff]
  %v2592 = vld [vmem:[%s2590 + $0x8] sm:$0xff]
  %v2593 = vld [vmem:[%s2590 + $0x10] sm:$0xff]
  %v2594 = vld [vmem:[%s2590 + $0x18] sm:$0xff]
  %v2596 = vsel %vm94, %v2591, 0
  %2598 = vmatprep.subr.mxu0 0.0
  %2599 = vmatpush1.msra.mxu0 %v11
  %2600 = vmatprep.subr.mxu0 0.0
  %2601 = vmatpush1.msra.mxu0 %v12
  %2602 = vmatprep.subr.mxu0 0.0
  %2603 = vmatpush1.msra.mxu0 %v13
  %2604 = vmatprep.subr.mxu0 0.0
  %2605 = vmatpush1.msra.mxu0 %v14
  %2606 = vmatprep.subr.mxu0 0.0
  %2607 = vmatpush1.msra.mxu0 0.0
  %2608 = vmatprep.subr.mxu0 0.0
  %2609 = vmatpush1.msra.mxu0 0.0
  %2610 = vmatprep.subr.mxu0 0.0
  %2611 = vmatpush1.msra.mxu0 0.0
  %2612 = vmatprep.subr.mxu0 0.0
  %2613 = vmatpush1.msra.mxu0 0.0
  %2614 = vmatprep.subr.mxu0 0.0
  %2615 = vmatpush1.msra.mxu0 0.0
  %2616 = vmatprep.subr.mxu0 0.0
  %2617 = vmatpush1.msra.mxu0 0.0
  %2618 = vmatprep.subr.mxu0 0.0
  %2619 = vmatpush1.msra.mxu0 0.0
  %2620 = vmatprep.subr.mxu0 0.0
  %2621 = vmatpush1.msra.mxu0 0.0
  %2622 = vmatprep.subr.mxu0 0.0
  %2623 = vmatpush1.msra.mxu0 0.0
  %2624 = vmatprep.subr.mxu0 0.0
  %2625 = vmatpush1.msra.mxu0 0.0
  %2626 = vmatprep.subr.mxu0 0.0
  %2627 = vmatpush1.msra.mxu0 0.0
  %2628 = vmatprep.subr.mxu0 0.0
  %2629 = vmatpush1.msra.mxu0 0.0
  %2630 = vmatprep.subr.mxu0 0.0
  %2631 = vmatpush1.msra.mxu0 0.0
  %2632 = vmatprep.subr.mxu0 0.0
  %2633 = vmatpush1.msra.mxu0 0.0
  %2634 = vmatprep.subr.mxu0 0.0
  %2635 = vmatpush1.msra.mxu0 0.0
  %2636 = vmatprep.subr.mxu0 0.0
  %2637 = vmatpush1.msra.mxu0 0.0
  %2638 = vmatprep.subr.mxu0 0.0
  %2639 = vmatpush1.msra.mxu0 0.0
  %2640 = vmatprep.subr.mxu0 0.0
  %2641 = vmatpush1.msra.mxu0 0.0
  %2642 = vmatprep.subr.mxu0 0.0
  %2643 = vmatpush1.msra.mxu0 0.0
  %2644 = vmatprep.subr.mxu0 0.0
  %2645 = vmatpush1.msra.mxu0 0.0
  %2646 = vmatprep.subr.mxu0 0.0
  %2647 = vmatpush1.msra.mxu0 0.0
  %2648 = vmatprep.subr.mxu0 0.0
  %2649 = vmatpush1.msra.mxu0 0.0
  %2650 = vmatprep.subr.mxu0 0.0
  %2651 = vmatpush1.msra.mxu0 0.0
  %2652 = vmatprep.subr.mxu0 0.0
  %2653 = vmatpush1.msra.mxu0 0.0
  %2654 = vmatprep.subr.mxu0 0.0
  %2655 = vmatpush1.msra.mxu0 0.0
  %2656 = vmatprep.subr.mxu0 0.0
  %2657 = vmatpush1.msra.mxu0 0.0
  %2658 = vmatprep.subr.mxu0 0.0
  %2659 = vmatpush1.msra.mxu0 0.0
  %2660 = vmatprep.subr.mxu0 0.0
  %2661 = vmatpush1.msra.mxu0 0.0
  %2662 = vmatprep.mubr.f32.mxu0 0.0
  %2663 = vmatmul.mubr.f32.gmra.mrb[0].mxu0 %v2596
  %v2664 = vpop.f32.mrb[0].mxu0
  %v2665 = vadd.f32 %v15, %v2664
  %v2666 = vpop.f32.mrb[0].mxu0
  %2667 = vdwg.mxu0
  %2668 = vmatprep.subr.mxu0 0.0
  %2669 = vmatpush1.msra.mxu0 %v16
  %2670 = vmatprep.subr.mxu0 0.0
  %2671 = vmatpush1.msra.mxu0 %v17
  %2672 = vmatprep.subr.mxu0 0.0
  %2673 = vmatpush1.msra.mxu0 %v18
  %2674 = vmatprep.subr.mxu0 0.0
  %2675 = vmatpush1.msra.mxu0 %v19
  %2676 = vmatprep.subr.mxu0 0.0
  %2677 = vmatpush1.msra.mxu0 0.0
  %2678 = vmatprep.subr.mxu0 0.0
  %2679 = vmatpush1.msra.mxu0 0.0
  %2680 = vmatprep.subr.mxu0 0.0
  %2681 = vmatpush1.msra.mxu0 0.0
  %2682 = vmatprep.subr.mxu0 0.0
  %2683 = vmatpush1.msra.mxu0 0.0
  %2684 = vmatprep.subr.mxu0 0.0
  %2685 = vmatpush1.msra.mxu0 0.0
  %2686 = vmatprep.subr.mxu0 0.0
  %2687 = vmatpush1.msra.mxu0 0.0
  %2688 = vmatprep.subr.mxu0 0.0
  %2689 = vmatpush1.msra.mxu0 0.0
  %2690 = vmatprep.subr.mxu0 0.0
  %2691 = vmatpush1.msra.mxu0 0.0
  %2692 = vmatprep.subr.mxu0 0.0
  %2693 = vmatpush1.msra.mxu0 0.0
  %2694 = vmatprep.subr.mxu0 0.0
  %2695 = vmatpush1.msra.mxu0 0.0
  %2696 = vmatprep.subr.mxu0 0.0
  %2697 = vmatpush1.msra.mxu0 0.0
  %2698 = vmatprep.subr.mxu0 0.0
  %2699 = vmatpush1.msra.mxu0 0.0
  %2700 = vmatprep.subr.mxu0 0.0
  %2701 = vmatpush1.msra.mxu0 0.0
  %2702 = vmatprep.subr.mxu0 0.0
  %2703 = vmatpush1.msra.mxu0 0.0
  %2704 = vmatprep.subr.mxu0 0.0
  %2705 = vmatpush1.msra.mxu0 0.0
  %2706 = vmatprep.subr.mxu0 0.0
  %2707 = vmatpush1.msra.mxu0 0.0
  %2708 = vmatprep.subr.mxu0 0.0
  %2709 = vmatpush1.msra.mxu0 0.0
  %2710 = vmatprep.subr.mxu0 0.0
  %2711 = vmatpush1.msra.mxu0 0.0
  %2712 = vmatprep.subr.mxu0 0.0
  %2713 = vmatpush1.msra.mxu0 0.0
  %2714 = vmatprep.subr.mxu0 0.0
  %2715 = vmatpush1.msra.mxu0 0.0
  %2716 = vmatprep.subr.mxu0 0.0
  %2717 = vmatpush1.msra.mxu0 0.0
  %2718 = vmatprep.subr.mxu0 0.0
  %2719 = vmatpush1.msra.mxu0 0.0
  %2720 = vmatprep.subr.mxu0 0.0
  %2721 = vmatpush1.msra.mxu0 0.0
  %2722 = vmatprep.subr.mxu0 0.0
  %2723 = vmatpush1.msra.mxu0 0.0
  %2724 = vmatprep.subr.mxu0 0.0
  %2725 = vmatpush1.msra.mxu0 0.0
  %2726 = vmatprep.subr.mxu0 0.0
  %2727 = vmatpush1.msra.mxu0 0.0
  %2728 = vmatprep.subr.mxu0 0.0
  %2729 = vmatpush1.msra.mxu0 0.0
  %2730 = vmatprep.subr.mxu0 0.0
  %2731 = vmatpush1.msra.mxu0 0.0
  %2732 = vmatprep.mubr.f32.mxu0 0.0
  %2733 = vmatmul.mubr.f32.gmra.mrb[0].mxu0 %v2596
  %v2734 = vpop.f32.mrb[0].mxu0
  %v2735 = vadd.f32 %v20, %v2734
  %v2736 = vpop.f32.mrb[0].mxu0
  %2737 = vdwg.mxu0
  %v2739 = vsel %vm238, %v2665, 0
  %v2742 = vsel %vm238, %v2735, 0
  %2744 = vmatprep.subr.mxu0 0.0
  %2745 = vmatpush1.xpose.msra.mxu0 %v2742
  %2746 = vmatprep.subr.mxu0 0.0
  %2747 = vmatpush1.xpose.msra.mxu0 0.0
  %2748 = vmatprep.subr.mxu0 0.0
  %2749 = vmatpush1.xpose.msra.mxu0 0.0
  %2750 = vmatprep.subr.mxu0 0.0
  %2751 = vmatpush1.xpose.msra.mxu0 0.0
  %2752 = vmatprep.subr.mxu0 0.0
  %2753 = vmatpush1.xpose.msra.mxu0 0.0
  %2754 = vmatprep.subr.mxu0 0.0
  %2755 = vmatpush1.xpose.msra.mxu0 0.0
  %2756 = vmatprep.subr.mxu0 0.0
  %2757 = vmatpush1.xpose.msra.mxu0 0.0
  %2758 = vmatprep.subr.mxu0 0.0
  %2759 = vmatpush1.xpose.msra.mxu0 0.0
  %2760 = vmatprep.subr.mxu0 0.0
  %2761 = vmatpush1.xpose.msra.mxu0 0.0
  %2762 = vmatprep.subr.mxu0 0.0
  %2763 = vmatpush1.xpose.msra.mxu0 0.0
  %2764 = vmatprep.subr.mxu0 0.0
  %2765 = vmatpush1.xpose.msra.mxu0 0.0
  %2766 = vmatprep.subr.mxu0 0.0
  %2767 = vmatpush1.xpose.msra.mxu0 0.0
  %2768 = vmatprep.subr.mxu0 0.0
  %2769 = vmatpush1.xpose.msra.mxu0 0.0
  %2770 = vmatprep.subr.mxu0 0.0
  %2771 = vmatpush1.xpose.msra.mxu0 0.0
  %2772 = vmatprep.subr.mxu0 0.0
  %2773 = vmatpush1.xpose.msra.mxu0 0.0
  %2774 = vmatprep.subr.mxu0 0.0
  %2775 = vmatpush1.xpose.msra.mxu0 0.0
  %2776 = vmatprep.subr.mxu0 0.0
  %2777 = vmatpush1.xpose.msra.mxu0 0.0
  %2778 = vmatprep.subr.mxu0 0.0
  %2779 = vmatpush1.xpose.msra.mxu0 0.0
  %2780 = vmatprep.subr.mxu0 0.0
  %2781 = vmatpush1.xpose.msra.mxu0 0.0
  %2782 = vmatprep.subr.mxu0 0.0
  %2783 = vmatpush1.xpose.msra.mxu0 0.0
  %2784 = vmatprep.subr.mxu0 0.0
  %2785 = vmatpush1.xpose.msra.mxu0 0.0
  %2786 = vmatprep.subr.mxu0 0.0
  %2787 = vmatpush1.xpose.msra.mxu0 0.0
  %2788 = vmatprep.subr.mxu0 0.0
  %2789 = vmatpush1.xpose.msra.mxu0 0.0
  %2790 = vmatprep.subr.mxu0 0.0
  %2791 = vmatpush1.xpose.msra.mxu0 0.0
  %2792 = vmatprep.subr.mxu0 0.0
  %2793 = vmatpush1.xpose.msra.mxu0 0.0
  %2794 = vmatprep.subr.mxu0 0.0
  %2795 = vmatpush1.xpose.msra.mxu0 0.0
  %2796 = vmatprep.subr.mxu0 0.0
  %2797 = vmatpush1.xpose.msra.mxu0 0.0
  %2798 = vmatprep.subr.mxu0 0.0
  %2799 = vmatpush1.xpose.msra.mxu0 0.0
  %2800 = vmatprep.subr.mxu0 0.0
  %2801 = vmatpush1.xpose.msra.mxu0 0.0
  %2802 = vmatprep.subr.mxu0 0.0
  %2803 = vmatpush1.xpose.msra.mxu0 0.0
  %2804 = vmatprep.subr.mxu0 0.0
  %2805 = vmatpush1.xpose.msra.mxu0 0.0
  %2806 = vmatprep.subr.mxu0 0.0
  %2807 = vmatpush1.xpose.msra.mxu0 0.0
  %2808 = vmatprep.mubr.f32.mxu0 0.0
  %2809 = vmatmul.mubr.f32.gmra.mrb[0].mxu0 %v2739
  %v2810 = vpop.f32.mrb[0].mxu0
  %v2811 = vadd.f32 %v2593, %v2810
  %v2812 = vpop.f32.mrb[0].mxu0
  %2813 = vdwg.mxu0
  %v2814 = vsel %vm238, %v2811, -inf
  %2815 = vmax.xlane.f32.xlu0 %v2814
  %v2816 = vpop.xlane.xlu0 %2815
  %v2817 = vsub.f32 %v2811, %v2816
  %v2818 = vmul.f32 %v2817, 1.442695
  %v2819 = vpow.pop %v2818
  %v2820 = vsel %vm238, %v2819, 0.0
  %2821 = vadd.xlane.f32.xlu0 %v2820
  %v2822 = vpop.xlane.xlu0 %2821
  %v2823 = vrcp.pop %v2822
  %v2824 = vmul.f32 %v2819, %v2823
  %2825 = vmatprep.subr.mxu0 0.0
  %2826 = vmatpush1.msra.mxu0 %v33
  %2827 = vmatprep.subr.mxu0 0.0
  %2828 = vmatpush1.msra.mxu0 %v34
  %2829 = vmatprep.subr.mxu0 0.0
  %2830 = vmatpush1.msra.mxu0 %v35
  %2831 = vmatprep.subr.mxu0 0.0
  %2832 = vmatpush1.msra.mxu0 %v36
  %2833 = vmatprep.subr.mxu0 0.0
  %2834 = vmatpush1.msra.mxu0 0.0
  %2835 = vmatprep.subr.mxu0 0.0
  %2836 = vmatpush1.msra.mxu0 0.0
  %2837 = vmatprep.subr.mxu0 0.0
  %2838 = vmatpush1.msra.mxu0 0.0
  %2839 = vmatprep.subr.mxu0 0.0
  %2840 = vmatpush1.msra.mxu0 0.0
  %2841 = vmatprep.subr.mxu0 0.0
  %2842 = vmatpush1.msra.mxu0 0.0
  %2843 = vmatprep.subr.mxu0 0.0
  %2844 = vmatpush1.msra.mxu0 0.0
  %2845 = vmatprep.subr.mxu0 0.0
  %2846 = vmatpush1.msra.mxu0 0.0
  %2847 = vmatprep.subr.mxu0 0.0
  %2848 = vmatpush1.msra.mxu0 0.0
  %2849 = vmatprep.subr.mxu0 0.0
  %2850 = vmatpush1.msra.mxu0 0.0
  %2851 = vmatprep.subr.mxu0 0.0
  %2852 = vmatpush1.msra.mxu0 0.0
  %2853 = vmatprep.subr.mxu0 0.0
  %2854 = vmatpush1.msra.mxu0 0.0
  %2855 = vmatprep.subr.mxu0 0.0
  %2856 = vmatpush1.msra.mxu0 0.0
  %2857 = vmatprep.subr.mxu0 0.0
  %2858 = vmatpush1.msra.mxu0 0.0
  %2859 = vmatprep.subr.mxu0 0.0
  %2860 = vmatpush1.msra.mxu0 0.0
  %2861 = vmatprep.subr.mxu0 0.0
  %2862 = vmatpush1.msra.mxu0 0.0
  %2863 = vmatprep.subr.mxu0 0.0
  %2864 = vmatpush1.msra.mxu0 0.0
  %2865 = vmatprep.subr.mxu0 0.0
  %2866 = vmatpush1.msra.mxu0 0.0
  %2867 = vmatprep.subr.mxu0 0.0
  %2868 = vmatpush1.msra.mxu0 0.0
  %2869 = vmatprep.subr.mxu0 0.0
  %2870 = vmatpush1.msra.mxu0 0.0
  %2871 = vmatprep.subr.mxu0 0.0
  %2872 = vmatpush1.msra.mxu0 0.0
  %2873 = vmatprep.subr.mxu0 0.0
  %2874 = vmatpush1.msra.mxu0 0.0
  %2875 = vmatprep.subr.mxu0 0.0
  %2876 = vmatpush1.msra.mxu0 0.0
  %2877 = vmatprep.subr.mxu0 0.0
  %2878 = vmatpush1.msra.mxu0 0.0
  %2879 = vmatprep.subr.mxu0 0.0
  %2880 = vmatpush1.msra.mxu0 0.0
  %2881 = vmatprep.subr.mxu0 0.0
  %2882 = vmatpush1.msra.mxu0 0.0
  %2883 = vmatprep.subr.mxu0 0.0
  %2884 = vmatpush1.msra.mxu0 0.0
  %2885 = vmatprep.subr.mxu0 0.0
  %2886 = vmatpush1.msra.mxu0 0.0
  %2887 = vmatprep.subr.mxu0 0.0
  %2888 = vmatpush1.msra.mxu0 0.0
  %2889 = vmatprep.mubr.f32.mxu0 0.0
  %2890 = vmatmul.mubr.f32.gmra.mrb[0].mxu0 %v2596
  %v2891 = vpop.f32.mrb[0].mxu0
  %v2892 = vadd.f32 0.0, %v2891
  %v2893 = vpop.f32.mrb[0].mxu0
  %2894 = vdwg.mxu0
  %v2896 = vsel %vm238, %v2824, 0
  %2898 = vmatprep.subr.mxu0 0.0
  %2899 = vmatpush1.msra.mxu0 %v2892
  %2900 = vmatprep.subr.mxu0 0.0
  %2901 = vmatpush1.msra.mxu0 0.0
  %2902 = vmatprep.subr.mxu0 0.0
  %2903 = vmatpush1.msra.mxu0 0.0
  %2904 = vmatprep.subr.mxu0 0.0
  %2905 = vmatpush1.msra.mxu0 0.0
  %2906 = vmatprep.subr.mxu0 0.0
  %2907 = vmatpush1.msra.mxu0 0.0
  %2908 = vmatprep.subr.mxu0 0.0
  %2909 = vmatpush1.msra.mxu0 0.0
  %2910 = vmatprep.subr.mxu0 0.0
  %2911 = vmatpush1.msra.mxu0 0.0
  %2912 = vmatprep.subr.mxu0 0.0
  %2913 = vmatpush1.msra.mxu0 0.0
  %2914 = vmatprep.subr.mxu0 0.0
  %2915 = vmatpush1.msra.mxu0 0.0
  %2916 = vmatprep.subr.mxu0 0.0
  %2917 = vmatpush1.msra.mxu0 0.0
  %2918 = vmatprep.subr.mxu0 0.0
  %2919 = vmatpush1.msra.mxu0 0.0
  %2920 = vmatprep.subr.mxu0 0.0
  %2921 = vmatpush1.msra.mxu0 0.0
  %2922 = vmatprep.subr.mxu0 0.0
  %2923 = vmatpush1.msra.mxu0 0.0
  %2924 = vmatprep.subr.mxu0 0.0
  %2925 = vmatpush1.msra.mxu0 0.0
  %2926 = vmatprep.subr.mxu0 0.0
  %2927 = vmatpush1.msra.mxu0 0.0
  %2928 = vmatprep.subr.mxu0 0.0
  %2929 = vmatpush1.msra.mxu0 0.0
  %2930 = vmatprep.subr.mxu0 0.0
  %2931 = vmatpush1.msra.mxu0 0.0
  %2932 = vmatprep.subr.mxu0 0.0
  %2933 = vmatpush1.msra.mxu0 0.0
  %2934 = vmatprep.subr.mxu0 0.0
  %2935 = vmatpush1.msra.mxu0 0.0
  %2936 = vmatprep.subr.mxu0 0.0
  %2937 = vmatpush1.msra.mxu0 0.0
  %2938 = vmatprep.subr.mxu0 0.0
  %2939 = vmatpush1.msra.mxu0 0.0
  %2940 = vmatprep.subr.mxu0 0.0
  %2941 = vmatpush1.msra.mxu0 0.0
  %2942 = vmatprep.subr.mxu0 0.0
  %2943 = vmatpush1.msra.mxu0 0.0
  %2944 = vmatprep.subr.mxu0 0.0
  %2945 = vmatpush1.msra.mxu0 0.0
  %2946 = vmatprep.subr.mxu0 0.0
  %2947 = vmatpush1.msra.mxu0 0.0
  %2948 = vmatprep.subr.mxu0 0.0
  %2949 = vmatpush1.msra.mxu0 0.0
  %2950 = vmatprep.subr.mxu0 0.0
  %2951 = vmatpush1.msra.mxu0 0.0
  %2952 = vmatprep.subr.mxu0 0.0
  %2953 = vmatpush1.msra.mxu0 0.0
  %2954 = vmatprep.subr.mxu0 0.0
  %2955 = vmatpush1.msra.mxu0 0.0
  %2956 = vmatprep.subr.mxu0 0.0
  %2957 = vmatpush1.msra.mxu0 0.0
  %2958 = vmatprep.subr.mxu0 0.0
  %2959 = vmatpush1.msra.mxu0 0.0
  %2960 = vmatprep.subr.mxu0 0.0
  %2961 = vmatpush1.msra.mxu0 0.0
  %2962 = vmatprep.mubr.f32.mxu0 0.0
  %2963 = vmatmul.mubr.f32.gmra.mrb[0].mxu0 %v2896
  %v2964 = vpop.f32.mrb[0].mxu0
  %v2965 = vadd.f32 0.0, %v2964
  %v2966 = vpop.f32.mrb[0].mxu0
  %2967 = vdwg.mxu0
  %v2968 = vadd.f32 %v21, %v2965
  %2969 = vrot.lane.b32.xlu0 %v2665, 120
  %v2970 = vpop.permute.xlu0 %2969
  %2971 = vrot.lane.b32.xlu0 %v2735, 120
  %v2972 = vpop.permute.xlu0 %2971
  %v2973 = vsel %vm238, %v2970, 0
  %v2975 = vsel %vm238, %v2972, 0
  %2977 = vmatprep.subr.mxu0 0.0
  %2978 = vmatpush1.xpose.msra.mxu0 %v2975
  %2979 = vmatprep.subr.mxu0 0.0
  %2980 = vmatpush1.xpose.msra.mxu0 0.0
  %2981 = vmatprep.subr.mxu0 0.0
  %2982 = vmatpush1.xpose.msra.mxu0 0.0
  %2983 = vmatprep.subr.mxu0 0.0
  %2984 = vmatpush1.xpose.msra.mxu0 0.0
  %2985 = vmatprep.subr.mxu0 0.0
  %2986 = vmatpush1.xpose.msra.mxu0 0.0
  %2987 = vmatprep.subr.mxu0 0.0
  %2988 = vmatpush1.xpose.msra.mxu0 0.0
  %2989 = vmatprep.subr.mxu0 0.0
  %2990 = vmatpush1.xpose.msra.mxu0 0.0
  %2991 = vmatprep.subr.mxu0 0.0
  %2992 = vmatpush1.xpose.msra.mxu0 0.0
  %2993 = vmatprep.subr.mxu0 0.0
  %2994 = vmatpush1.xpose.msra.mxu0 0.0
  %2995 = vmatprep.subr.mxu0 0.0
  %2996 = vmatpush1.xpose.msra.mxu0 0.0
  %2997 = vmatprep.subr.mxu0 0.0
  %2998 = vmatpush1.xpose.msra.mxu0 0.0
  %2999 = vmatprep.subr.mxu0 0.0
  %3000 = vmatpush1.xpose.msra.mxu0 0.0
  %3001 = vmatprep.subr.mxu0 0.0
  %3002 = vmatpush1.xpose.msra.mxu0 0.0
  %3003 = vmatprep.subr.mxu0 0.0
  %3004 = vmatpush1.xpose.msra.mxu0 0.0
  %3005 = vmatprep.subr.mxu0 0.0
  %3006 = vmatpush1.xpose.msra.mxu0 0.0
  %3007 = vmatprep.subr.mxu0 0.0
  %3008 = vmatpush1.xpose.msra.mxu0 0.0
  %3009 = vmatprep.subr.mxu0 0.0
  %3010 = vmatpush1.xpose.msra.mxu0 0.0
  %3011 = vmatprep.subr.mxu0 0.0
  %3012 = vmatpush1.xpose.msra.mxu0 0.0
  %3013 = vmatprep.subr.mxu0 0.0
  %3014 = vmatpush1.xpose.msra.mxu0 0.0
  %3015 = vmatprep.subr.mxu0 0.0
  %3016 = vmatpush1.xpose.msra.mxu0 0.0
  %3017 = vmatprep.subr.mxu0 0.0
  %3018 = vmatpush1.xpose.msra.mxu0 0.0
  %3019 = vmatprep.subr.mxu0 0.0
  %3020 = vmatpush1.xpose.msra.mxu0 0.0
  %3021 = vmatprep.subr.mxu0 0.0
  %3022 = vmatpush1.xpose.msra.mxu0 0.0
  %3023 = vmatprep.subr.mxu0 0.0
  %3024 = vmatpush1.xpose.msra.mxu0 0.0
  %3025 = vmatprep.subr.mxu0 0.0
  %3026 = vmatpush1.xpose.msra.mxu0 0.0
  %3027 = vmatprep.subr.mxu0 0.0
  %3028 = vmatpush1.xpose.msra.mxu0 0.0
  %3029 = vmatprep.subr.mxu0 0.0
  %3030 = vmatpush1.xpose.msra.mxu0 0.0
  %3031 = vmatprep.subr.mxu0 0.0
  %3032 = vmatpush1.xpose.msra.mxu0 0.0
  %3033 = vmatprep.subr.mxu0 0.0
  %3034 = vmatpush1.xpose.msra.mxu0 0.0
  %3035 = vmatprep.subr.mxu0 0.0
  %3036 = vmatpush1.xpose.msra.mxu0 0.0
  %3037 = vmatprep.subr.mxu0 0.0
  %3038 = vmatpush1.xpose.msra.mxu0 0.0
  %3039 = vmatprep.subr.mxu0 0.0
  %3040 = vmatpush1.xpose.msra.mxu0 0.0
  %3041 = vmatprep.mubr.f32.mxu0 0.0
  %3042 = vmatmul.mubr.f32.gmra.mrb[0].mxu0 %v2973
  %v3043 = vpop.f32.mrb[0].mxu0
  %v3044 = vadd.f32 %v2593, %v3043
  %v3045 = vpop.f32.mrb[0].mxu0
  %3046 = vdwg.mxu0
  %v3047 = vsel %vm238, %v3044, -inf
  %3048 = vmax.xlane.f32.xlu0 %v3047
  %v3049 = vpop.xlane.xlu0 %3048
  %v3050 = vsub.f32 %v3044, %v3049
  %v3051 = vmul.f32 %v3050, 1.442695
  %v3052 = vpow.pop %v3051
  %v3053 = vsel %vm238, %v3052, 0.0
  %3054 = vadd.xlane.f32.xlu0 %v3053
  %v3055 = vpop.xlane.xlu0 %3054
  %v3056 = vrcp.pop %v3055
  %v3057 = vmul.f32 %v3052, %v3056
  %3058 = vmatprep.subr.mxu0 0.0
  %3059 = vmatpush1.msra.mxu0 %v37
  %3060 = vmatprep.subr.mxu0 0.0
  %3061 = vmatpush1.msra.mxu0 %v38
  %3062 = vmatprep.subr.mxu0 0.0
  %3063 = vmatpush1.msra.mxu0 %v39
  %3064 = vmatprep.subr.mxu0 0.0
  %3065 = vmatpush1.msra.mxu0 %v40
  %3066 = vmatprep.subr.mxu0 0.0
  %3067 = vmatpush1.msra.mxu0 0.0
  %3068 = vmatprep.subr.mxu0 0.0
  %3069 = vmatpush1.msra.mxu0 0.0
  %3070 = vmatprep.subr.mxu0 0.0
  %3071 = vmatpush1.msra.mxu0 0.0
  %3072 = vmatprep.subr.mxu0 0.0
  %3073 = vmatpush1.msra.mxu0 0.0
  %3074 = vmatprep.subr.mxu0 0.0
  %3075 = vmatpush1.msra.mxu0 0.0
  %3076 = vmatprep.subr.mxu0 0.0
  %3077 = vmatpush1.msra.mxu0 0.0
  %3078 = vmatprep.subr.mxu0 0.0
  %3079 = vmatpush1.msra.mxu0 0.0
  %3080 = vmatprep.subr.mxu0 0.0
  %3081 = vmatpush1.msra.mxu0 0.0
  %3082 = vmatprep.subr.mxu0 0.0
  %3083 = vmatpush1.msra.mxu0 0.0
  %3084 = vmatprep.subr.mxu0 0.0
  %3085 = vmatpush1.msra.mxu0 0.0
  %3086 = vmatprep.subr.mxu0 0.0
  %3087 = vmatpush1.msra.mxu0 0.0
  %3088 = vmatprep.subr.mxu0 0.0
  %3089 = vmatpush1.msra.mxu0 0.0
  %3090 = vmatprep.subr.mxu0 0.0
  %3091 = vmatpush1.msra.mxu0 0.0
  %3092 = vmatprep.subr.mxu0 0.0
  %3093 = vmatpush1.msra.mxu0 0.0
  %3094 = vmatprep.subr.mxu0 0.0
  %3095 = vmatpush1.msra.mxu0 0.0
  %3096 = vmatprep.subr.mxu0 0.0
  %3097 = vmatpush1.msra.mxu0 0.0
  %3098 = vmatprep.subr.mxu0 0.0
  %3099 = vmatpush1.msra.mxu0 0.0
  %3100 = vmatprep.subr.mxu0 0.0
  %3101 = vmatpush1.msra.mxu0 0.0
  %3102 = vmatprep.subr.mxu0 0.0
  %3103 = vmatpush1.msra.mxu0 0.0
  %3104 = vmatprep.subr.mxu0 0.0
  %3105 = vmatpush1.msra.mxu0 0.0
  %3106 = vmatprep.subr.mxu0 0.0
  %3107 = vmatpush1.msra.mxu0 0.0
  %3108 = vmatprep.subr.mxu0 0.0
  %3109 = vmatpush1.msra.mxu0 0.0
  %3110 = vmatprep.subr.mxu0 0.0
  %3111 = vmatpush1.msra.mxu0 0.0
  %3112 = vmatprep.subr.mxu0 0.0
  %3113 = vmatpush1.msra.mxu0 0.0
  %3114 = vmatprep.subr.mxu0 0.0
  %3115 = vmatpush1.msra.mxu0 0.0
  %3116 = vmatprep.subr.mxu0 0.0
  %3117 = vmatpush1.msra.mxu0 0.0
  %3118 = vmatprep.subr.mxu0 0.0
  %3119 = vmatpush1.msra.mxu0 0.0
  %3120 = vmatprep.subr.mxu0 0.0
  %3121 = vmatpush1.msra.mxu0 0.0
  %3122 = vmatprep.mubr.f32.mxu0 0.0
  %3123 = vmatmul.mubr.f32.gmra.mrb[0].mxu0 %v2596
  %v3124 = vpop.f32.mrb[0].mxu0
  %v3125 = vadd.f32 0.0, %v3124
  %v3126 = vpop.f32.mrb[0].mxu0
  %3127 = vdwg.mxu0
  %v3129 = vsel %vm238, %v3057, 0
  %3131 = vmatprep.subr.mxu0 0.0
  %3132 = vmatpush1.msra.mxu0 %v3125
  %3133 = vmatprep.subr.mxu0 0.0
  %3134 = vmatpush1.msra.mxu0 0.0
  %3135 = vmatprep.subr.mxu0 0.0
  %3136 = vmatpush1.msra.mxu0 0.0
  %3137 = vmatprep.subr.mxu0 0.0
  %3138 = vmatpush1.msra.mxu0 0.0
  %3139 = vmatprep.subr.mxu0 0.0
  %3140 = vmatpush1.msra.mxu0 0.0
  %3141 = vmatprep.subr.mxu0 0.0
  %3142 = vmatpush1.msra.mxu0 0.0
  %3143 = vmatprep.subr.mxu0 0.0
  %3144 = vmatpush1.msra.mxu0 0.0
  %3145 = vmatprep.subr.mxu0 0.0
  %3146 = vmatpush1.msra.mxu0 0.0
  %3147 = vmatprep.subr.mxu0 0.0
  %3148 = vmatpush1.msra.mxu0 0.0
  %3149 = vmatprep.subr.mxu0 0.0
  %3150 = vmatpush1.msra.mxu0 0.0
  %3151 = vmatprep.subr.mxu0 0.0
  %3152 = vmatpush1.msra.mxu0 0.0
  %3153 = vmatprep.subr.mxu0 0.0
  %3154 = vmatpush1.msra.mxu0 0.0
  %3155 = vmatprep.subr.mxu0 0.0
  %3156 = vmatpush1.msra.mxu0 0.0
  %3157 = vmatprep.subr.mxu0 0.0
  %3158 = vmatpush1.msra.mxu0 0.0
  %3159 = vmatprep.subr.mxu0 0.0
  %3160 = vmatpush1.msra.mxu0 0.0
  %3161 = vmatprep.subr.mxu0 0.0
  %3162 = vmatpush1.msra.mxu0 0.0
  %3163 = vmatprep.subr.mxu0 0.0
  %3164 = vmatpush1.msra.mxu0 0.0
  %3165 = vmatprep.subr.mxu0 0.0
  %3166 = vmatpush1.msra.mxu0 0.0
  %3167 = vmatprep.subr.mxu0 0.0
  %3168 = vmatpush1.msra.mxu0 0.0
  %3169 = vmatprep.subr.mxu0 0.0
  %3170 = vmatpush1.msra.mxu0 0.0
  %3171 = vmatprep.subr.mxu0 0.0
  %3172 = vmatpush1.msra.mxu0 0.0
  %3173 = vmatprep.subr.mxu0 0.0
  %3174 = vmatpush1.msra.mxu0 0.0
  %3175 = vmatprep.subr.mxu0 0.0
  %3176 = vmatpush1.msra.mxu0 0.0
  %3177 = vmatprep.subr.mxu0 0.0
  %3178 = vmatpush1.msra.mxu0 0.0
  %3179 = vmatprep.subr.mxu0 0.0
  %3180 = vmatpush1.msra.mxu0 0.0
  %3181 = vmatprep.subr.mxu0 0.0
  %3182 = vmatpush1.msra.mxu0 0.0
  %3183 = vmatprep.subr.mxu0 0.0
  %3184 = vmatpush1.msra.mxu0 0.0
  %3185 = vmatprep.subr.mxu0 0.0
  %3186 = vmatpush1.msra.mxu0 0.0
  %3187 = vmatprep.subr.mxu0 0.0
  %3188 = vmatpush1.msra.mxu0 0.0
  %3189 = vmatprep.subr.mxu0 0.0
  %3190 = vmatpush1.msra.mxu0 0.0
  %3191 = vmatprep.subr.mxu0 0.0
  %3192 = vmatpush1.msra.mxu0 0.0
  %3193 = vmatprep.subr.mxu0 0.0
  %3194 = vmatpush1.msra.mxu0 0.0
  %3195 = vmatprep.mubr.f32.mxu0 0.0
  %3196 = vmatmul.mubr.f32.gmra.mrb[0].mxu0 %v3129
  %v3197 = vpop.f32.mrb[0].mxu0
  %v3198 = vadd.f32 0.0, %v3197
  %v3199 = vpop.f32.mrb[0].mxu0
  %3200 = vdwg.mxu0
  %v3201 = vadd.f32 %v2968, %v3198
  %3202 = vrot.lane.b32.xlu0 %v2665, 112
  %v3203 = vpop.permute.xlu0 %3202
  %3204 = vrot.lane.b32.xlu0 %v2735, 112
  %v3205 = vpop.permute.xlu0 %3204
  %v3206 = vsel %vm238, %v3203, 0
  %v3208 = vsel %vm238, %v3205, 0
  %3210 = vmatprep.subr.mxu0 0.0
  %3211 = vmatpush1.xpose.msra.mxu0 %v3208
  %3212 = vmatprep.subr.mxu0 0.0
  %3213 = vmatpush1.xpose.msra.mxu0 0.0
  %3214 = vmatprep.subr.mxu0 0.0
  %3215 = vmatpush1.xpose.msra.mxu0 0.0
  %3216 = vmatprep.subr.mxu0 0.0
  %3217 = vmatpush1.xpose.msra.mxu0 0.0
  %3218 = vmatprep.subr.mxu0 0.0
  %3219 = vmatpush1.xpose.msra.mxu0 0.0
  %3220 = vmatprep.subr.mxu0 0.0
  %3221 = vmatpush1.xpose.msra.mxu0 0.0
  %3222 = vmatprep.subr.mxu0 0.0
  %3223 = vmatpush1.xpose.msra.mxu0 0.0
  %3224 = vmatprep.subr.mxu0 0.0
  %3225 = vmatpush1.xpose.msra.mxu0 0.0
  %3226 = vmatprep.subr.mxu0 0.0
  %3227 = vmatpush1.xpose.msra.mxu0 0.0
  %3228 = vmatprep.subr.mxu0 0.0
  %3229 = vmatpush1.xpose.msra.mxu0 0.0
  %3230 = vmatprep.subr.mxu0 0.0
  %3231 = vmatpush1.xpose.msra.mxu0 0.0
  %3232 = vmatprep.subr.mxu0 0.0
  %3233 = vmatpush1.xpose.msra.mxu0 0.0
  %3234 = vmatprep.subr.mxu0 0.0
  %3235 = vmatpush1.xpose.msra.mxu0 0.0
  %3236 = vmatprep.subr.mxu0 0.0
  %3237 = vmatpush1.xpose.msra.mxu0 0.0
  %3238 = vmatprep.subr.mxu0 0.0
  %3239 = vmatpush1.xpose.msra.mxu0 0.0
  %3240 = vmatprep.subr.mxu0 0.0
  %3241 = vmatpush1.xpose.msra.mxu0 0.0
  %3242 = vmatprep.subr.mxu0 0.0
  %3243 = vmatpush1.xpose.msra.mxu0 0.0
  %3244 = vmatprep.subr.mxu0 0.0
  %3245 = vmatpush1.xpose.msra.mxu0 0.0
  %3246 = vmatprep.subr.mxu0 0.0
  %3247 = vmatpush1.xpose.msra.mxu0 0.0
  %3248 = vmatprep.subr.mxu0 0.0
  %3249 = vmatpush1.xpose.msra.mxu0 0.0
  %3250 = vmatprep.subr.mxu0 0.0
  %3251 = vmatpush1.xpose.msra.mxu0 0.0
  %3252 = vmatprep.subr.mxu0 0.0
  %3253 = vmatpush1.xpose.msra.mxu0 0.0
  %3254 = vmatprep.subr.mxu0 0.0
  %3255 = vmatpush1.xpose.msra.mxu0 0.0
  %3256 = vmatprep.subr.mxu0 0.0
  %3257 = vmatpush1.xpose.msra.mxu0 0.0
  %3258 = vmatprep.subr.mxu0 0.0
  %3259 = vmatpush1.xpose.msra.mxu0 0.0
  %3260 = vmatprep.subr.mxu0 0.0
  %3261 = vmatpush1.xpose.msra.mxu0 0.0
  %3262 = vmatprep.subr.mxu0 0.0
  %3263 = vmatpush1.xpose.msra.mxu0 0.0
  %3264 = vmatprep.subr.mxu0 0.0
  %3265 = vmatpush1.xpose.msra.mxu0 0.0
  %3266 = vmatprep.subr.mxu0 0.0
  %3267 = vmatpush1.xpose.msra.mxu0 0.0
  %3268 = vmatprep.subr.mxu0 0.0
  %3269 = vmatpush1.xpose.msra.mxu0 0.0
  %3270 = vmatprep.subr.mxu0 0.0
  %3271 = vmatpush1.xpose.msra.mxu0 0.0
  %3272 = vmatprep.subr.mxu0 0.0
  %3273 = vmatpush1.xpose.msra.mxu0 0.0
  %3274 = vmatprep.mubr.f32.mxu0 0.0
  %3275 = vmatmul.mubr.f32.gmra.mrb[0].mxu0 %v3206
  %v3276 = vpop.f32.mrb[0].mxu0
  %v3277 = vadd.f32 %v2593, %v3276
  %v3278 = vpop.f32.mrb[0].mxu0
  %3279 = vdwg.mxu0
  %v3280 = vsel %vm238, %v3277, -inf
  %3281 = vmax.xlane.f32.xlu0 %v3280
  %v3282 = vpop.xlane.xlu0 %3281
  %v3283 = vsub.f32 %v3277, %v3282
  %v3284 = vmul.f32 %v3283, 1.442695
  %v3285 = vpow.pop %v3284
  %v3286 = vsel %vm238, %v3285, 0.0
  %3287 = vadd.xlane.f32.xlu0 %v3286
  %v3288 = vpop.xlane.xlu0 %3287
  %v3289 = vrcp.pop %v3288
  %v3290 = vmul.f32 %v3285, %v3289
  %3291 = vmatprep.subr.mxu0 0.0
  %3292 = vmatpush1.msra.mxu0 %v41
  %3293 = vmatprep.subr.mxu0 0.0
  %3294 = vmatpush1.msra.mxu0 %v42
  %3295 = vmatprep.subr.mxu0 0.0
  %3296 = vmatpush1.msra.mxu0 %v43
  %3297 = vmatprep.subr.mxu0 0.0
  %3298 = vmatpush1.msra.mxu0 %v44
  %3299 = vmatprep.subr.mxu0 0.0
  %3300 = vmatpush1.msra.mxu0 0.0
  %3301 = vmatprep.subr.mxu0 0.0
  %3302 = vmatpush1.msra.mxu0 0.0
  %3303 = vmatprep.subr.mxu0 0.0
  %3304 = vmatpush1.msra.mxu0 0.0
  %3305 = vmatprep.subr.mxu0 0.0
  %3306 = vmatpush1.msra.mxu0 0.0
  %3307 = vmatprep.subr.mxu0 0.0
  %3308 = vmatpush1.msra.mxu0 0.0
  %3309 = vmatprep.subr.mxu0 0.0
  %3310 = vmatpush1.msra.mxu0 0.0
  %3311 = vmatprep.subr.mxu0 0.0
  %3312 = vmatpush1.msra.mxu0 0.0
  %3313 = vmatprep.subr.mxu0 0.0
  %3314 = vmatpush1.msra.mxu0 0.0
  %3315 = vmatprep.subr.mxu0 0.0
  %3316 = vmatpush1.msra.mxu0 0.0
  %3317 = vmatprep.subr.mxu0 0.0
  %3318 = vmatpush1.msra.mxu0 0.0
  %3319 = vmatprep.subr.mxu0 0.0
  %3320 = vmatpush1.msra.mxu0 0.0
  %3321 = vmatprep.subr.mxu0 0.0
  %3322 = vmatpush1.msra.mxu0 0.0
  %3323 = vmatprep.subr.mxu0 0.0
  %3324 = vmatpush1.msra.mxu0 0.0
  %3325 = vmatprep.subr.mxu0 0.0
  %3326 = vmatpush1.msra.mxu0 0.0
  %3327 = vmatprep.subr.mxu0 0.0
  %3328 = vmatpush1.msra.mxu0 0.0
  %3329 = vmatprep.subr.mxu0 0.0
  %3330 = vmatpush1.msra.mxu0 0.0
  %3331 = vmatprep.subr.mxu0 0.0
  %3332 = vmatpush1.msra.mxu0 0.0
  %3333 = vmatprep.subr.mxu0 0.0
  %3334 = vmatpush1.msra.mxu0 0.0
  %3335 = vmatprep.subr.mxu0 0.0
  %3336 = vmatpush1.msra.mxu0 0.0
  %3337 = vmatprep.subr.mxu0 0.0
  %3338 = vmatpush1.msra.mxu0 0.0
  %3339 = vmatprep.subr.mxu0 0.0
  %3340 = vmatpush1.msra.mxu0 0.0
  %3341 = vmatprep.subr.mxu0 0.0
  %3342 = vmatpush1.msra.mxu0 0.0
  %3343 = vmatprep.subr.mxu0 0.0
  %3344 = vmatpush1.msra.mxu0 0.0
  %3345 = vmatprep.subr.mxu0 0.0
  %3346 = vmatpush1.msra.mxu0 0.0
  %3347 = vmatprep.subr.mxu0 0.0
  %3348 = vmatpush1.msra.mxu0 0.0
  %3349 = vmatprep.subr.mxu0 0.0
  %3350 = vmatpush1.msra.mxu0 0.0
  %3351 = vmatprep.subr.mxu0 0.0
  %3352 = vmatpush1.msra.mxu0 0.0
  %3353 = vmatprep.subr.mxu0 0.0
  %3354 = vmatpush1.msra.mxu0 0.0
  %3355 = vmatprep.mubr.f32.mxu0 0.0
  %3356 = vmatmul.mubr.f32.gmra.mrb[0].mxu0 %v2596
  %v3357 = vpop.f32.mrb[0].mxu0
  %v3358 = vadd.f32 0.0, %v3357
  %v3359 = vpop.f32.mrb[0].mxu0
  %3360 = vdwg.mxu0
  %v3362 = vsel %vm238, %v3290, 0
  %3364 = vmatprep.subr.mxu0 0.0
  %3365 = vmatpush1.msra.mxu0 %v3358
  %3366 = vmatprep.subr.mxu0 0.0
  %3367 = vmatpush1.msra.mxu0 0.0
  %3368 = vmatprep.subr.mxu0 0.0
  %3369 = vmatpush1.msra.mxu0 0.0
  %3370 = vmatprep.subr.mxu0 0.0
  %3371 = vmatpush1.msra.mxu0 0.0
  %3372 = vmatprep.subr.mxu0 0.0
  %3373 = vmatpush1.msra.mxu0 0.0
  %3374 = vmatprep.subr.mxu0 0.0
  %3375 = vmatpush1.msra.mxu0 0.0
  %3376 = vmatprep.subr.mxu0 0.0
  %3377 = vmatpush1.msra.mxu0 0.0
  %3378 = vmatprep.subr.mxu0 0.0
  %3379 = vmatpush1.msra.mxu0 0.0
  %3380 = vmatprep.subr.mxu0 0.0
  %3381 = vmatpush1.msra.mxu0 0.0
  %3382 = vmatprep.subr.mxu0 0.0
  %3383 = vmatpush1.msra.mxu0 0.0
  %3384 = vmatprep.subr.mxu0 0.0
  %3385 = vmatpush1.msra.mxu0 0.0
  %3386 = vmatprep.subr.mxu0 0.0
  %3387 = vmatpush1.msra.mxu0 0.0
  %3388 = vmatprep.subr.mxu0 0.0
  %3389 = vmatpush1.msra.mxu0 0.0
  %3390 = vmatprep.subr.mxu0 0.0
  %3391 = vmatpush1.msra.mxu0 0.0
  %3392 = vmatprep.subr.mxu0 0.0
  %3393 = vmatpush1.msra.mxu0 0.0
  %3394 = vmatprep.subr.mxu0 0.0
  %3395 = vmatpush1.msra.mxu0 0.0
  %3396 = vmatprep.subr.mxu0 0.0
  %3397 = vmatpush1.msra.mxu0 0.0
  %3398 = vmatprep.subr.mxu0 0.0
  %3399 = vmatpush1.msra.mxu0 0.0
  %3400 = vmatprep.subr.mxu0 0.0
  %3401 = vmatpush1.msra.mxu0 0.0
  %3402 = vmatprep.subr.mxu0 0.0
  %3403 = vmatpush1.msra.mxu0 0.0
  %3404 = vmatprep.subr.mxu0 0.0
  %3405 = vmatpush1.msra.mxu0 0.0
  %3406 = vmatprep.subr.mxu0 0.0
  %3407 = vmatpush1.msra.mxu0 0.0
  %3408 = vmatprep.subr.mxu0 0.0
  %3409 = vmatpush1.msra.mxu0 0.0
  %3410 = vmatprep.subr.mxu0 0.0
  %3411 = vmatpush1.msra.mxu0 0.0
  %3412 = vmatprep.subr.mxu0 0.0
  %3413 = vmatpush1.msra.mxu0 0.0
  %3414 = vmatprep.subr.mxu0 0.0
  %3415 = vmatpush1.msra.mxu0 0.0
  %3416 = vmatprep.subr.mxu0 0.0
  %3417 = vmatpush1.msra.mxu0 0.0
  %3418 = vmatprep.subr.mxu0 0.0
  %3419 = vmatpush1.msra.mxu0 0.0
  %3420 = vmatprep.subr.mxu0 0.0
  %3421 = vmatpush1.msra.mxu0 0.0
  %3422 = vmatprep.subr.mxu0 0.0
  %3423 = vmatpush1.msra.mxu0 0.0
  %3424 = vmatprep.subr.mxu0 0.0
  %3425 = vmatpush1.msra.mxu0 0.0
  %3426 = vmatprep.subr.mxu0 0.0
  %3427 = vmatpush1.msra.mxu0 0.0
  %3428 = vmatprep.mubr.f32.mxu0 0.0
  %3429 = vmatmul.mubr.f32.gmra.mrb[0].mxu0 %v3362
  %v3430 = vpop.f32.mrb[0].mxu0
  %v3431 = vadd.f32 0.0, %v3430
  %v3432 = vpop.f32.mrb[0].mxu0
  %3433 = vdwg.mxu0
  %v3434 = vadd.f32 %v3201, %v3431
  %3435 = vrot.lane.b32.xlu0 %v2665, 104
  %v3436 = vpop.permute.xlu0 %3435
  %3437 = vrot.lane.b32.xlu0 %v2735, 104
  %v3438 = vpop.permute.xlu0 %3437
  %v3439 = vsel %vm238, %v3436, 0
  %v3441 = vsel %vm238, %v3438, 0
  %3443 = vmatprep.subr.mxu0 0.0
  %3444 = vmatpush1.xpose.msra.mxu0 %v3441
  %3445 = vmatprep.subr.mxu0 0.0
  %3446 = vmatpush1.xpose.msra.mxu0 0.0
  %3447 = vmatprep.subr.mxu0 0.0
  %3448 = vmatpush1.xpose.msra.mxu0 0.0
  %3449 = vmatprep.subr.mxu0 0.0
  %3450 = vmatpush1.xpose.msra.mxu0 0.0
  %3451 = vmatprep.subr.mxu0 0.0
  %3452 = vmatpush1.xpose.msra.mxu0 0.0
  %3453 = vmatprep.subr.mxu0 0.0
  %3454 = vmatpush1.xpose.msra.mxu0 0.0
  %3455 = vmatprep.subr.mxu0 0.0
  %3456 = vmatpush1.xpose.msra.mxu0 0.0
  %3457 = vmatprep.subr.mxu0 0.0
  %3458 = vmatpush1.xpose.msra.mxu0 0.0
  %3459 = vmatprep.subr.mxu0 0.0
  %3460 = vmatpush1.xpose.msra.mxu0 0.0
  %3461 = vmatprep.subr.mxu0 0.0
  %3462 = vmatpush1.xpose.msra.mxu0 0.0
  %3463 = vmatprep.subr.mxu0 0.0
  %3464 = vmatpush1.xpose.msra.mxu0 0.0
  %3465 = vmatprep.subr.mxu0 0.0
  %3466 = vmatpush1.xpose.msra.mxu0 0.0
  %3467 = vmatprep.subr.mxu0 0.0
  %3468 = vmatpush1.xpose.msra.mxu0 0.0
  %3469 = vmatprep.subr.mxu0 0.0
  %3470 = vmatpush1.xpose.msra.mxu0 0.0
  %3471 = vmatprep.subr.mxu0 0.0
  %3472 = vmatpush1.xpose.msra.mxu0 0.0
  %3473 = vmatprep.subr.mxu0 0.0
  %3474 = vmatpush1.xpose.msra.mxu0 0.0
  %3475 = vmatprep.subr.mxu0 0.0
  %3476 = vmatpush1.xpose.msra.mxu0 0.0
  %3477 = vmatprep.subr.mxu0 0.0
  %3478 = vmatpush1.xpose.msra.mxu0 0.0
  %3479 = vmatprep.subr.mxu0 0.0
  %3480 = vmatpush1.xpose.msra.mxu0 0.0
  %3481 = vmatprep.subr.mxu0 0.0
  %3482 = vmatpush1.xpose.msra.mxu0 0.0
  %3483 = vmatprep.subr.mxu0 0.0
  %3484 = vmatpush1.xpose.msra.mxu0 0.0
  %3485 = vmatprep.subr.mxu0 0.0
  %3486 = vmatpush1.xpose.msra.mxu0 0.0
  %3487 = vmatprep.subr.mxu0 0.0
  %3488 = vmatpush1.xpose.msra.mxu0 0.0
  %3489 = vmatprep.subr.mxu0 0.0
  %3490 = vmatpush1.xpose.msra.mxu0 0.0
  %3491 = vmatprep.subr.mxu0 0.0
  %3492 = vmatpush1.xpose.msra.mxu0 0.0
  %3493 = vmatprep.subr.mxu0 0.0
  %3494 = vmatpush1.xpose.msra.mxu0 0.0
  %3495 = vmatprep.subr.mxu0 0.0
  %3496 = vmatpush1.xpose.msra.mxu0 0.0
  %3497 = vmatprep.subr.mxu0 0.0
  %3498 = vmatpush1.xpose.msra.mxu0 0.0
  %3499 = vmatprep.subr.mxu0 0.0
  %3500 = vmatpush1.xpose.msra.mxu0 0.0
  %3501 = vmatprep.subr.mxu0 0.0
  %3502 = vmatpush1.xpose.msra.mxu0 0.0
  %3503 = vmatprep.subr.mxu0 0.0
  %3504 = vmatpush1.xpose.msra.mxu0 0.0
  %3505 = vmatprep.subr.mxu0 0.0
  %3506 = vmatpush1.xpose.msra.mxu0 0.0
  %3507 = vmatprep.mubr.f32.mxu0 0.0
  %3508 = vmatmul.mubr.f32.gmra.mrb[0].mxu0 %v3439
  %v3509 = vpop.f32.mrb[0].mxu0
  %v3510 = vadd.f32 %v2593, %v3509
  %v3511 = vpop.f32.mrb[0].mxu0
  %3512 = vdwg.mxu0
  %v3513 = vsel %vm238, %v3510, -inf
  %3514 = vmax.xlane.f32.xlu0 %v3513
  %v3515 = vpop.xlane.xlu0 %3514
  %v3516 = vsub.f32 %v3510, %v3515
  %v3517 = vmul.f32 %v3516, 1.442695
  %v3518 = vpow.pop %v3517
  %v3519 = vsel %vm238, %v3518, 0.0
  %3520 = vadd.xlane.f32.xlu0 %v3519
  %v3521 = vpop.xlane.xlu0 %3520
  %v3522 = vrcp.pop %v3521
  %v3523 = vmul.f32 %v3518, %v3522
  %3524 = vmatprep.subr.mxu0 0.0
  %3525 = vmatpush1.msra.mxu0 %v45
  %3526 = vmatprep.subr.mxu0 0.0
  %3527 = vmatpush1.msra.mxu0 %v46
  %3528 = vmatprep.subr.mxu0 0.0
  %3529 = vmatpush1.msra.mxu0 %v47
  %3530 = vmatprep.subr.mxu0 0.0
  %3531 = vmatpush1.msra.mxu0 %v48
  %3532 = vmatprep.subr.mxu0 0.0
  %3533 = vmatpush1.msra.mxu0 0.0
  %3534 = vmatprep.subr.mxu0 0.0
  %3535 = vmatpush1.msra.mxu0 0.0
  %3536 = vmatprep.subr.mxu0 0.0
  %3537 = vmatpush1.msra.mxu0 0.0
  %3538 = vmatprep.subr.mxu0 0.0
  %3539 = vmatpush1.msra.mxu0 0.0
  %3540 = vmatprep.subr.mxu0 0.0
  %3541 = vmatpush1.msra.mxu0 0.0
  %3542 = vmatprep.subr.mxu0 0.0
  %3543 = vmatpush1.msra.mxu0 0.0
  %3544 = vmatprep.subr.mxu0 0.0
  %3545 = vmatpush1.msra.mxu0 0.0
  %3546 = vmatprep.subr.mxu0 0.0
  %3547 = vmatpush1.msra.mxu0 0.0
  %3548 = vmatprep.subr.mxu0 0.0
  %3549 = vmatpush1.msra.mxu0 0.0
  %3550 = vmatprep.subr.mxu0 0.0
  %3551 = vmatpush1.msra.mxu0 0.0
  %3552 = vmatprep.subr.mxu0 0.0
  %3553 = vmatpush1.msra.mxu0 0.0
  %3554 = vmatprep.subr.mxu0 0.0
  %3555 = vmatpush1.msra.mxu0 0.0
  %3556 = vmatprep.subr.mxu0 0.0
  %3557 = vmatpush1.msra.mxu0 0.0
  %3558 = vmatprep.subr.mxu0 0.0
  %3559 = vmatpush1.msra.mxu0 0.0
  %3560 = vmatprep.subr.mxu0 0.0
  %3561 = vmatpush1.msra.mxu0 0.0
  %3562 = vmatprep.subr.mxu0 0.0
  %3563 = vmatpush1.msra.mxu0 0.0
  %3564 = vmatprep.subr.mxu0 0.0
  %3565 = vmatpush1.msra.mxu0 0.0
  %3566 = vmatprep.subr.mxu0 0.0
  %3567 = vmatpush1.msra.mxu0 0.0
  %3568 = vmatprep.subr.mxu0 0.0
  %3569 = vmatpush1.msra.mxu0 0.0
  %3570 = vmatprep.subr.mxu0 0.0
  %3571 = vmatpush1.msra.mxu0 0.0
  %3572 = vmatprep.subr.mxu0 0.0
  %3573 = vmatpush1.msra.mxu0 0.0
  %3574 = vmatprep.subr.mxu0 0.0
  %3575 = vmatpush1.msra.mxu0 0.0
  %3576 = vmatprep.subr.mxu0 0.0
  %3577 = vmatpush1.msra.mxu0 0.0
  %3578 = vmatprep.subr.mxu0 0.0
  %3579 = vmatpush1.msra.mxu0 0.0
  %3580 = vmatprep.subr.mxu0 0.0
  %3581 = vmatpush1.msra.mxu0 0.0
  %3582 = vmatprep.subr.mxu0 0.0
  %3583 = vmatpush1.msra.mxu0 0.0
  %3584 = vmatprep.subr.mxu0 0.0
  %3585 = vmatpush1.msra.mxu0 0.0
  %3586 = vmatprep.subr.mxu0 0.0
  %3587 = vmatpush1.msra.mxu0 0.0
  %3588 = vmatprep.mubr.f32.mxu0 0.0
  %3589 = vmatmul.mubr.f32.gmra.mrb[0].mxu0 %v2596
  %v3590 = vpop.f32.mrb[0].mxu0
  %v3591 = vadd.f32 0.0, %v3590
  %v3592 = vpop.f32.mrb[0].mxu0
  %3593 = vdwg.mxu0
  %v3595 = vsel %vm238, %v3523, 0
  %3597 = vmatprep.subr.mxu0 0.0
  %3598 = vmatpush1.msra.mxu0 %v3591
  %3599 = vmatprep.subr.mxu0 0.0
  %3600 = vmatpush1.msra.mxu0 0.0
  %3601 = vmatprep.subr.mxu0 0.0
  %3602 = vmatpush1.msra.mxu0 0.0
  %3603 = vmatprep.subr.mxu0 0.0
  %3604 = vmatpush1.msra.mxu0 0.0
  %3605 = vmatprep.subr.mxu0 0.0
  %3606 = vmatpush1.msra.mxu0 0.0
  %3607 = vmatprep.subr.mxu0 0.0
  %3608 = vmatpush1.msra.mxu0 0.0
  %3609 = vmatprep.subr.mxu0 0.0
  %3610 = vmatpush1.msra.mxu0 0.0
  %3611 = vmatprep.subr.mxu0 0.0
  %3612 = vmatpush1.msra.mxu0 0.0
  %3613 = vmatprep.subr.mxu0 0.0
  %3614 = vmatpush1.msra.mxu0 0.0
  %3615 = vmatprep.subr.mxu0 0.0
  %3616 = vmatpush1.msra.mxu0 0.0
  %3617 = vmatprep.subr.mxu0 0.0
  %3618 = vmatpush1.msra.mxu0 0.0
  %3619 = vmatprep.subr.mxu0 0.0
  %3620 = vmatpush1.msra.mxu0 0.0
  %3621 = vmatprep.subr.mxu0 0.0
  %3622 = vmatpush1.msra.mxu0 0.0
  %3623 = vmatprep.subr.mxu0 0.0
  %3624 = vmatpush1.msra.mxu0 0.0
  %3625 = vmatprep.subr.mxu0 0.0
  %3626 = vmatpush1.msra.mxu0 0.0
  %3627 = vmatprep.subr.mxu0 0.0
  %3628 = vmatpush1.msra.mxu0 0.0
  %3629 = vmatprep.subr.mxu0 0.0
  %3630 = vmatpush1.msra.mxu0 0.0
  %3631 = vmatprep.subr.mxu0 0.0
  %3632 = vmatpush1.msra.mxu0 0.0
  %3633 = vmatprep.subr.mxu0 0.0
  %3634 = vmatpush1.msra.mxu0 0.0
  %3635 = vmatprep.subr.mxu0 0.0
  %3636 = vmatpush1.msra.mxu0 0.0
  %3637 = vmatprep.subr.mxu0 0.0
  %3638 = vmatpush1.msra.mxu0 0.0
  %3639 = vmatprep.subr.mxu0 0.0
  %3640 = vmatpush1.msra.mxu0 0.0
  %3641 = vmatprep.subr.mxu0 0.0
  %3642 = vmatpush1.msra.mxu0 0.0
  %3643 = vmatprep.subr.mxu0 0.0
  %3644 = vmatpush1.msra.mxu0 0.0
  %3645 = vmatprep.subr.mxu0 0.0
  %3646 = vmatpush1.msra.mxu0 0.0
  %3647 = vmatprep.subr.mxu0 0.0
  %3648 = vmatpush1.msra.mxu0 0.0
  %3649 = vmatprep.subr.mxu0 0.0
  %3650 = vmatpush1.msra.mxu0 0.0
  %3651 = vmatprep.subr.mxu0 0.0
  %3652 = vmatpush1.msra.mxu0 0.0
  %3653 = vmatprep.subr.mxu0 0.0
  %3654 = vmatpush1.msra.mxu0 0.0
  %3655 = vmatprep.subr.mxu0 0.0
  %3656 = vmatpush1.msra.mxu0 0.0
  %3657 = vmatprep.subr.mxu0 0.0
  %3658 = vmatpush1.msra.mxu0 0.0
  %3659 = vmatprep.subr.mxu0 0.0
  %3660 = vmatpush1.msra.mxu0 0.0
  %3661 = vmatprep.mubr.f32.mxu0 0.0
  %3662 = vmatmul.mubr.f32.gmra.mrb[0].mxu0 %v3595
  %v3663 = vpop.f32.mrb[0].mxu0
  %v3664 = vadd.f32 0.0, %v3663
  %v3665 = vpop.f32.mrb[0].mxu0
  %3666 = vdwg.mxu0
  %v3667 = vadd.f32 %v3434, %v3664
  %v3668 = vadd.f32 %v2591, %v3667
  %v3669 = vsel %vm94, %v3668, 0.0
  %3670 = vadd.xlane.f32.xlu0 %v3669
  %v3671 = vpop.xlane.xlu0 %3670
  %v3672 = vmul.f32 %v3671, %v1173
  %v3673 = vsub.f32 %v3668, %v3672
  %v3674 = vmul.f32 %v3673, %v3673
  %v3675 = vsel %vm94, %v3674, 0.0
  %3676 = vadd.xlane.f32.xlu0 %v3675
  %v3677 = vpop.xlane.xlu0 %3676
  %v3678 = vmul.f32 %v3677, %v1173
  %v3679 = vadd.f32 %v3678, 1e-05
  %v3680 = vrsqrt.pop %v3679
  %v3681 = vmul.f32 %v3673, %v3680
  %v3682 = vmul.f32 %v3681, %v84
  %v3683 = vadd.f32 %v3682, %v87
  %v3685 = vsel %vm94, %v3683, 0
  %3687 = vmatprep.subr.mxu0 0.0
  %3688 = vmatpush1.msra.mxu0 %v22
  %3689 = vmatprep.subr.mxu0 0.0
  %3690 = vmatpush1.msra.mxu0 %v23
  %3691 = vmatprep.subr.mxu0 0.0
  %3692 = vmatpush1.msra.mxu0 %v24
  %3693 = vmatprep.subr.mxu0 0.0
  %3694 = vmatpush1.msra.mxu0 %v25
  %3695 = vmatprep.subr.mxu0 0.0
  %3696 = vmatpush1.msra.mxu0 0.0
  %3697 = vmatprep.subr.mxu0 0.0
  %3698 = vmatpush1.msra.mxu0 0.0
  %3699 = vmatprep.subr.mxu0 0.0
  %3700 = vmatpush1.msra.mxu0 0.0
  %3701 = vmatprep.subr.mxu0 0.0
  %3702 = vmatpush1.msra.mxu0 0.0
  %3703 = vmatprep.subr.mxu0 0.0
  %3704 = vmatpush1.msra.mxu0 0.0
  %3705 = vmatprep.subr.mxu0 0.0
  %3706 = vmatpush1.msra.mxu0 0.0
  %3707 = vmatprep.subr.mxu0 0.0
  %3708 = vmatpush1.msra.mxu0 0.0
  %3709 = vmatprep.subr.mxu0 0.0
  %3710 = vmatpush1.msra.mxu0 0.0
  %3711 = vmatprep.subr.mxu0 0.0
  %3712 = vmatpush1.msra.mxu0 0.0
  %3713 = vmatprep.subr.mxu0 0.0
  %3714 = vmatpush1.msra.mxu0 0.0
  %3715 = vmatprep.subr.mxu0 0.0
  %3716 = vmatpush1.msra.mxu0 0.0
  %3717 = vmatprep.subr.mxu0 0.0
  %3718 = vmatpush1.msra.mxu0 0.0
  %3719 = vmatprep.subr.mxu0 0.0
  %3720 = vmatpush1.msra.mxu0 0.0
  %3721 = vmatprep.subr.mxu0 0.0
  %3722 = vmatpush1.msra.mxu0 0.0
  %3723 = vmatprep.subr.mxu0 0.0
  %3724 = vmatpush1.msra.mxu0 0.0
  %3725 = vmatprep.subr.mxu0 0.0
  %3726 = vmatpush1.msra.mxu0 0.0
  %3727 = vmatprep.subr.mxu0 0.0
  %3728 = vmatpush1.msra.mxu0 0.0
  %3729 = vmatprep.subr.mxu0 0.0
  %3730 = vmatpush1.msra.mxu0 0.0
  %3731 = vmatprep.subr.mxu0 0.0
  %3732 = vmatpush1.msra.mxu0 0.0
  %3733 = vmatprep.subr.mxu0 0.0
  %3734 = vmatpush1.msra.mxu0 0.0
  %3735 = vmatprep.subr.mxu0 0.0
  %3736 = vmatpush1.msra.mxu0 0.0
  %3737 = vmatprep.subr.mxu0 0.0
  %3738 = vmatpush1.msra.mxu0 0.0
  %3739 = vmatprep.subr.mxu0 0.0
  %3740 = vmatpush1.msra.mxu0 0.0
  %3741 = vmatprep.subr.mxu0 0.0
  %3742 = vmatpush1.msra.mxu0 0.0
  %3743 = vmatprep.subr.mxu0 0.0
  %3744 = vmatpush1.msra.mxu0 0.0
  %3745 = vmatprep.subr.mxu0 0.0
  %3746 = vmatpush1.msra.mxu0 0.0
  %3747 = vmatprep.subr.mxu0 0.0
  %3748 = vmatpush1.msra.mxu0 0.0
  %3749 = vmatprep.subr.mxu0 0.0
  %3750 = vmatpush1.msra.mxu0 0.0
  %3751 = vmatprep.mubr.f32.mxu0 0.0
  %3752 = vmatmul.mubr.f32.gmra.mrb[0].mxu0 %v3685
  %v3753 = vpop.f32.mrb[0].mxu0
  %v3754 = vadd.f32 %v26, %v3753
  %v3755 = vpop.f32.mrb[0].mxu0
  %3756 = vdwg.mxu0
  %v3758 = vsel %vm94, %v2592, 0
  %3760 = vmatprep.subr.mxu0 0.0
  %3761 = vmatpush1.msra.mxu0 %v27
  %3762 = vmatprep.subr.mxu0 0.0
  %3763 = vmatpush1.msra.mxu0 %v28
  %3764 = vmatprep.subr.mxu0 0.0
  %3765 = vmatpush1.msra.mxu0 %v29
  %3766 = vmatprep.subr.mxu0 0.0
  %3767 = vmatpush1.msra.mxu0 %v30
  %3768 = vmatprep.subr.mxu0 0.0
  %3769 = vmatpush1.msra.mxu0 0.0
  %3770 = vmatprep.subr.mxu0 0.0
  %3771 = vmatpush1.msra.mxu0 0.0
  %3772 = vmatprep.subr.mxu0 0.0
  %3773 = vmatpush1.msra.mxu0 0.0
  %3774 = vmatprep.subr.mxu0 0.0
  %3775 = vmatpush1.msra.mxu0 0.0
  %3776 = vmatprep.subr.mxu0 0.0
  %3777 = vmatpush1.msra.mxu0 0.0
  %3778 = vmatprep.subr.mxu0 0.0
  %3779 = vmatpush1.msra.mxu0 0.0
  %3780 = vmatprep.subr.mxu0 0.0
  %3781 = vmatpush1.msra.mxu0 0.0
  %3782 = vmatprep.subr.mxu0 0.0
  %3783 = vmatpush1.msra.mxu0 0.0
  %3784 = vmatprep.subr.mxu0 0.0
  %3785 = vmatpush1.msra.mxu0 0.0
  %3786 = vmatprep.subr.mxu0 0.0
  %3787 = vmatpush1.msra.mxu0 0.0
  %3788 = vmatprep.subr.mxu0 0.0
  %3789 = vmatpush1.msra.mxu0 0.0
  %3790 = vmatprep.subr.mxu0 0.0
  %3791 = vmatpush1.msra.mxu0 0.0
  %3792 = vmatprep.subr.mxu0 0.0
  %3793 = vmatpush1.msra.mxu0 0.0
  %3794 = vmatprep.subr.mxu0 0.0
  %3795 = vmatpush1.msra.mxu0 0.0
  %3796 = vmatprep.subr.mxu0 0.0
  %3797 = vmatpush1.msra.mxu0 0.0
  %3798 = vmatprep.subr.mxu0 0.0
  %3799 = vmatpush1.msra.mxu0 0.0
  %3800 = vmatprep.subr.mxu0 0.0
  %3801 = vmatpush1.msra.mxu0 0.0
  %3802 = vmatprep.subr.mxu0 0.0
  %3803 = vmatpush1.msra.mxu0 0.0
  %3804 = vmatprep.subr.mxu0 0.0
  %3805 = vmatpush1.msra.mxu0 0.0
  %3806 = vmatprep.subr.mxu0 0.0
  %3807 = vmatpush1.msra.mxu0 0.0
  %3808 = vmatprep.subr.mxu0 0.0
  %3809 = vmatpush1.msra.mxu0 0.0
  %3810 = vmatprep.subr.mxu0 0.0
  %3811 = vmatpush1.msra.mxu0 0.0
  %3812 = vmatprep.subr.mxu0 0.0
  %3813 = vmatpush1.msra.mxu0 0.0
  %3814 = vmatprep.subr.mxu0 0.0
  %3815 = vmatpush1.msra.mxu0 0.0
  %3816 = vmatprep.subr.mxu0 0.0
  %3817 = vmatpush1.msra.mxu0 0.0
  %3818 = vmatprep.subr.mxu0 0.0
  %3819 = vmatpush1.msra.mxu0 0.0
  %3820 = vmatprep.subr.mxu0 0.0
  %3821 = vmatpush1.msra.mxu0 0.0
  %3822 = vmatprep.subr.mxu0 0.0
  %3823 = vmatpush1.msra.mxu0 0.0
  %3824 = vmatprep.mubr.f32.mxu0 0.0
  %3825 = vmatmul.mubr.f32.gmra.mrb[0].mxu0 %v3758
  %v3826 = vpop.f32.mrb[0].mxu0
  %v3827 = vadd.f32 %v31, %v3826
  %v3828 = vpop.f32.mrb[0].mxu0
  %3829 = vdwg.mxu0
  %v3831 = vsel %vm238, %v3754, 0
  %v3834 = vsel %vm238, %v3827, 0
  %3836 = vmatprep.subr.mxu0 0.0
  %3837 = vmatpush1.xpose.msra.mxu0 %v3834
  %3838 = vmatprep.subr.mxu0 0.0
  %3839 = vmatpush1.xpose.msra.mxu0 0.0
  %3840 = vmatprep.subr.mxu0 0.0
  %3841 = vmatpush1.xpose.msra.mxu0 0.0
  %3842 = vmatprep.subr.mxu0 0.0
  %3843 = vmatpush1.xpose.msra.mxu0 0.0
  %3844 = vmatprep.subr.mxu0 0.0
  %3845 = vmatpush1.xpose.msra.mxu0 0.0
  %3846 = vmatprep.subr.mxu0 0.0
  %3847 = vmatpush1.xpose.msra.mxu0 0.0
  %3848 = vmatprep.subr.mxu0 0.0
  %3849 = vmatpush1.xpose.msra.mxu0 0.0
  %3850 = vmatprep.subr.mxu0 0.0
  %3851 = vmatpush1.xpose.msra.mxu0 0.0
  %3852 = vmatprep.subr.mxu0 0.0
  %3853 = vmatpush1.xpose.msra.mxu0 0.0
  %3854 = vmatprep.subr.mxu0 0.0
  %3855 = vmatpush1.xpose.msra.mxu0 0.0
  %3856 = vmatprep.subr.mxu0 0.0
  %3857 = vmatpush1.xpose.msra.mxu0 0.0
  %3858 = vmatprep.subr.mxu0 0.0
  %3859 = vmatpush1.xpose.msra.mxu0 0.0
  %3860 = vmatprep.subr.mxu0 0.0
  %3861 = vmatpush1.xpose.msra.mxu0 0.0
  %3862 = vmatprep.subr.mxu0 0.0
  %3863 = vmatpush1.xpose.msra.mxu0 0.0
  %3864 = vmatprep.subr.mxu0 0.0
  %3865 = vmatpush1.xpose.msra.mxu0 0.0
  %3866 = vmatprep.subr.mxu0 0.0
  %3867 = vmatpush1.xpose.msra.mxu0 0.0
  %3868 = vmatprep.subr.mxu0 0.0
  %3869 = vmatpush1.xpose.msra.mxu0 0.0
  %3870 = vmatprep.subr.mxu0 0.0
  %3871 = vmatpush1.xpose.msra.mxu0 0.0
  %3872 = vmatprep.subr.mxu0 0.0
  %3873 = vmatpush1.xpose.msra.mxu0 0.0
  %3874 = vmatprep.subr.mxu0 0.0
  %3875 = vmatpush1.xpose.msra.mxu0 0.0
  %3876 = vmatprep.subr.mxu0 0.0
  %3877 = vmatpush1.xpose.msra.mxu0 0.0
  %3878 = vmatprep.subr.mxu0 0.0
  %3879 = vmatpush1.xpose.msra.mxu0 0.0
  %3880 = vmatprep.subr.mxu0 0.0
  %3881 = vmatpush1.xpose.msra.mxu0 0.0
  %3882 = vmatprep.subr.mxu0 0.0
  %3883 = vmatpush1.xpose.msra.mxu0 0.0
  %3884 = vmatprep.subr.mxu0 0.0
  %3885 = vmatpush1.xpose.msra.mxu0 0.0
  %3886 = vmatprep.subr.mxu0 0.0
  %3887 = vmatpush1.xpose.msra.mxu0 0.0
  %3888 = vmatprep.subr.mxu0 0.0
  %3889 = vmatpush1.xpose.msra.mxu0 0.0
  %3890 = vmatprep.subr.mxu0 0.0
  %3891 = vmatpush1.xpose.msra.mxu0 0.0
  %3892 = vmatprep.subr.mxu0 0.0
  %3893 = vmatpush1.xpose.msra.mxu0 0.0
  %3894 = vmatprep.subr.mxu0 0.0
  %3895 = vmatpush1.xpose.msra.mxu0 0.0
  %3896 = vmatprep.subr.mxu0 0.0
  %3897 = vmatpush1.xpose.msra.mxu0 0.0
  %3898 = vmatprep.subr.mxu0 0.0
  %3899 = vmatpush1.xpose.msra.mxu0 0.0
  %3900 = vmatprep.mubr.f32.mxu0 0.0
  %3901 = vmatmul.mubr.f32.gmra.mrb[0].mxu0 %v3831
  %v3902 = vpop.f32.mrb[0].mxu0
  %v3903 = vadd.f32 %v2594, %v3902
  %v3904 = vpop.f32.mrb[0].mxu0
  %3905 = vdwg.mxu0
  %v3906 = vsel %vm238, %v3903, -inf
  %3907 = vmax.xlane.f32.xlu0 %v3906
  %v3908 = vpop.xlane.xlu0 %3907
  %v3909 = vsub.f32 %v3903, %v3908
  %v3910 = vmul.f32 %v3909, 1.442695
  %v3911 = vpow.pop %v3910
  %v3912 = vsel %vm238, %v3911, 0.0
  %3913 = vadd.xlane.f32.xlu0 %v3912
  %v3914 = vpop.xlane.xlu0 %3913
  %v3915 = vrcp.pop %v3914
  %v3916 = vmul.f32 %v3911, %v3915
  %3917 = vmatprep.subr.mxu0 0.0
  %3918 = vmatpush1.msra.mxu0 %v49
  %3919 = vmatprep.subr.mxu0 0.0
  %3920 = vmatpush1.msra.mxu0 %v50
  %3921 = vmatprep.subr.mxu0 0.0
  %3922 = vmatpush1.msra.mxu0 %v51
  %3923 = vmatprep.subr.mxu0 0.0
  %3924 = vmatpush1.msra.mxu0 %v52
  %3925 = vmatprep.subr.mxu0 0.0
  %3926 = vmatpush1.msra.mxu0 0.0
  %3927 = vmatprep.subr.mxu0 0.0
  %3928 = vmatpush1.msra.mxu0 0.0
  %3929 = vmatprep.subr.mxu0 0.0
  %3930 = vmatpush1.msra.mxu0 0.0
  %3931 = vmatprep.subr.mxu0 0.0
  %3932 = vmatpush1.msra.mxu0 0.0
  %3933 = vmatprep.subr.mxu0 0.0
  %3934 = vmatpush1.msra.mxu0 0.0
  %3935 = vmatprep.subr.mxu0 0.0
  %3936 = vmatpush1.msra.mxu0 0.0
  %3937 = vmatprep.subr.mxu0 0.0
  %3938 = vmatpush1.msra.mxu0 0.0
  %3939 = vmatprep.subr.mxu0 0.0
  %3940 = vmatpush1.msra.mxu0 0.0
  %3941 = vmatprep.subr.mxu0 0.0
  %3942 = vmatpush1.msra.mxu0 0.0
  %3943 = vmatprep.subr.mxu0 0.0
  %3944 = vmatpush1.msra.mxu0 0.0
  %3945 = vmatprep.subr.mxu0 0.0
  %3946 = vmatpush1.msra.mxu0 0.0
  %3947 = vmatprep.subr.mxu0 0.0
  %3948 = vmatpush1.msra.mxu0 0.0
  %3949 = vmatprep.subr.mxu0 0.0
  %3950 = vmatpush1.msra.mxu0 0.0
  %3951 = vmatprep.subr.mxu0 0.0
  %3952 = vmatpush1.msra.mxu0 0.0
  %3953 = vmatprep.subr.mxu0 0.0
  %3954 = vmatpush1.msra.mxu0 0.0
  %3955 = vmatprep.subr.mxu0 0.0
  %3956 = vmatpush1.msra.mxu0 0.0
  %3957 = vmatprep.subr.mxu0 0.0
  %3958 = vmatpush1.msra.mxu0 0.0
  %3959 = vmatprep.subr.mxu0 0.0
  %3960 = vmatpush1.msra.mxu0 0.0
  %3961 = vmatprep.subr.mxu0 0.0
  %3962 = vmatpush1.msra.mxu0 0.0
  %3963 = vmatprep.subr.mxu0 0.0
  %3964 = vmatpush1.msra.mxu0 0.0
  %3965 = vmatprep.subr.mxu0 0.0
  %3966 = vmatpush1.msra.mxu0 0.0
  %3967 = vmatprep.subr.mxu0 0.0
  %3968 = vmatpush1.msra.mxu0 0.0
  %3969 = vmatprep.subr.mxu0 0.0
  %3970 = vmatpush1.msra.mxu0 0.0
  %3971 = vmatprep.subr.mxu0 0.0
  %3972 = vmatpush1.msra.mxu0 0.0
  %3973 = vmatprep.subr.mxu0 0.0
  %3974 = vmatpush1.msra.mxu0 0.0
  %3975 = vmatprep.subr.mxu0 0.0
  %3976 = vmatpush1.msra.mxu0 0.0
  %3977 = vmatprep.subr.mxu0 0.0
  %3978 = vmatpush1.msra.mxu0 0.0
  %3979 = vmatprep.subr.mxu0 0.0
  %3980 = vmatpush1.msra.mxu0 0.0
  %3981 = vmatprep.mubr.f32.mxu0 0.0
  %3982 = vmatmul.mubr.f32.gmra.mrb[0].mxu0 %v3758
  %v3983 = vpop.f32.mrb[0].mxu0
  %v3984 = vadd.f32 0.0, %v3983
  %v3985 = vpop.f32.mrb[0].mxu0
  %3986 = vdwg.mxu0
  %v3988 = vsel %vm238, %v3916, 0
  %3990 = vmatprep.subr.mxu0 0.0
  %3991 = vmatpush1.msra.mxu0 %v3984
  %3992 = vmatprep.subr.mxu0 0.0
  %3993 = vmatpush1.msra.mxu0 0.0
  %3994 = vmatprep.subr.mxu0 0.0
  %3995 = vmatpush1.msra.mxu0 0.0
  %3996 = vmatprep.subr.mxu0 0.0
  %3997 = vmatpush1.msra.mxu0 0.0
  %3998 = vmatprep.subr.mxu0 0.0
  %3999 = vmatpush1.msra.mxu0 0.0
  %4000 = vmatprep.subr.mxu0 0.0
  %4001 = vmatpush1.msra.mxu0 0.0
  %4002 = vmatprep.subr.mxu0 0.0
  %4003 = vmatpush1.msra.mxu0 0.0
  %4004 = vmatprep.subr.mxu0 0.0
  %4005 = vmatpush1.msra.mxu0 0.0
  %4006 = vmatprep.subr.mxu0 0.0
  %4007 = vmatpush1.msra.mxu0 0.0
  %4008 = vmatprep.subr.mxu0 0.0
  %4009 = vmatpush1.msra.mxu0 0.0
  %4010 = vmatprep.subr.mxu0 0.0
  %4011 = vmatpush1.msra.mxu0 0.0
  %4012 = vmatprep.subr.mxu0 0.0
  %4013 = vmatpush1.msra.mxu0 0.0
  %4014 = vmatprep.subr.mxu0 0.0
  %4015 = vmatpush1.msra.mxu0 0.0
  %4016 = vmatprep.subr.mxu0 0.0
  %4017 = vmatpush1.msra.mxu0 0.0
  %4018 = vmatprep.subr.mxu0 0.0
  %4019 = vmatpush1.msra.mxu0 0.0
  %4020 = vmatprep.subr.mxu0 0.0
  %4021 = vmatpush1.msra.mxu0 0.0
  %4022 = vmatprep.subr.mxu0 0.0
  %4023 = vmatpush1.msra.mxu0 0.0
  %4024 = vmatprep.subr.mxu0 0.0
  %4025 = vmatpush1.msra.mxu0 0.0
  %4026 = vmatprep.subr.mxu0 0.0
  %4027 = vmatpush1.msra.mxu0 0.0
  %4028 = vmatprep.subr.mxu0 0.0
  %4029 = vmatpush1.msra.mxu0 0.0
  %4030 = vmatprep.subr.mxu0 0.0
  %4031 = vmatpush1.msra.mxu0 0.0
  %4032 = vmatprep.subr.mxu0 0.0
  %4033 = vmatpush1.msra.mxu0 0.0
  %4034 = vmatprep.subr.mxu0 0.0
  %4035 = vmatpush1.msra.mxu0 0.0
  %4036 = vmatprep.subr.mxu0 0.0
  %4037 = vmatpush1.msra.mxu0 0.0
  %4038 = vmatprep.subr.mxu0 0.0
  %4039 = vmatpush1.msra.mxu0 0.0
  %4040 = vmatprep.subr.mxu0 0.0
  %4041 = vmatpush1.msra.mxu0 0.0
  %4042 = vmatprep.subr.mxu0 0.0
  %4043 = vmatpush1.msra.mxu0 0.0
  %4044 = vmatprep.subr.mxu0 0.0
  %4045 = vmatpush1.msra.mxu0 0.0
  %4046 = vmatprep.subr.mxu0 0.0
  %4047 = vmatpush1.msra.mxu0 0.0
  %4048 = vmatprep.subr.mxu0 0.0
  %4049 = vmatpush1.msra.mxu0 0.0
  %4050 = vmatprep.subr.mxu0 0.0
  %4051 = vmatpush1.msra.mxu0 0.0
  %4052 = vmatprep.subr.mxu0 0.0
  %4053 = vmatpush1.msra.mxu0 0.0
  %4054 = vmatprep.mubr.f32.mxu0 0.0
  %4055 = vmatmul.mubr.f32.gmra.mrb[0].mxu0 %v3988
  %v4056 = vpop.f32.mrb[0].mxu0
  %v4057 = vadd.f32 0.0, %v4056
  %v4058 = vpop.f32.mrb[0].mxu0
  %4059 = vdwg.mxu0
  %v4060 = vadd.f32 %v32, %v4057
  %4061 = vrot.lane.b32.xlu0 %v3754, 120
  %v4062 = vpop.permute.xlu0 %4061
  %4063 = vrot.lane.b32.xlu0 %v3827, 120
  %v4064 = vpop.permute.xlu0 %4063
  %v4065 = vsel %vm238, %v4062, 0
  %v4067 = vsel %vm238, %v4064, 0
  %4069 = vmatprep.subr.mxu0 0.0
  %4070 = vmatpush1.xpose.msra.mxu0 %v4067
  %4071 = vmatprep.subr.mxu0 0.0
  %4072 = vmatpush1.xpose.msra.mxu0 0.0
  %4073 = vmatprep.subr.mxu0 0.0
  %4074 = vmatpush1.xpose.msra.mxu0 0.0
  %4075 = vmatprep.subr.mxu0 0.0
  %4076 = vmatpush1.xpose.msra.mxu0 0.0
  %4077 = vmatprep.subr.mxu0 0.0
  %4078 = vmatpush1.xpose.msra.mxu0 0.0
  %4079 = vmatprep.subr.mxu0 0.0
  %4080 = vmatpush1.xpose.msra.mxu0 0.0
  %4081 = vmatprep.subr.mxu0 0.0
  %4082 = vmatpush1.xpose.msra.mxu0 0.0
  %4083 = vmatprep.subr.mxu0 0.0
  %4084 = vmatpush1.xpose.msra.mxu0 0.0
  %4085 = vmatprep.subr.mxu0 0.0
  %4086 = vmatpush1.xpose.msra.mxu0 0.0
  %4087 = vmatprep.subr.mxu0 0.0
  %4088 = vmatpush1.xpose.msra.mxu0 0.0
  %4089 = vmatprep.subr.mxu0 0.0
  %4090 = vmatpush1.xpose.msra.mxu0 0.0
  %4091 = vmatprep.subr.mxu0 0.0
  %4092 = vmatpush1.xpose.msra.mxu0 0.0
  %4093 = vmatprep.subr.mxu0 0.0
  %4094 = vmatpush1.xpose.msra.mxu0 0.0
  %4095 = vmatprep.subr.mxu0 0.0
  %4096 = vmatpush1.xpose.msra.mxu0 0.0
  %4097 = vmatprep.subr.mxu0 0.0
  %4098 = vmatpush1.xpose.msra.mxu0 0.0
  %4099 = vmatprep.subr.mxu0 0.0
  %4100 = vmatpush1.xpose.msra.mxu0 0.0
  %4101 = vmatprep.subr.mxu0 0.0
  %4102 = vmatpush1.xpose.msra.mxu0 0.0
  %4103 = vmatprep.subr.mxu0 0.0
  %4104 = vmatpush1.xpose.msra.mxu0 0.0
  %4105 = vmatprep.subr.mxu0 0.0
  %4106 = vmatpush1.xpose.msra.mxu0 0.0
  %4107 = vmatprep.subr.mxu0 0.0
  %4108 = vmatpush1.xpose.msra.mxu0 0.0
  %4109 = vmatprep.subr.mxu0 0.0
  %4110 = vmatpush1.xpose.msra.mxu0 0.0
  %4111 = vmatprep.subr.mxu0 0.0
  %4112 = vmatpush1.xpose.msra.mxu0 0.0
  %4113 = vmatprep.subr.mxu0 0.0
  %4114 = vmatpush1.xpose.msra.mxu0 0.0
  %4115 = vmatprep.subr.mxu0 0.0
  %4116 = vmatpush1.xpose.msra.mxu0 0.0
  %4117 = vmatprep.subr.mxu0 0.0
  %4118 = vmatpush1.xpose.msra.mxu0 0.0
  %4119 = vmatprep.subr.mxu0 0.0
  %4120 = vmatpush1.xpose.msra.mxu0 0.0
  %4121 = vmatprep.subr.mxu0 0.0
  %4122 = vmatpush1.xpose.msra.mxu0 0.0
  %4123 = vmatprep.subr.mxu0 0.0
  %4124 = vmatpush1.xpose.msra.mxu0 0.0
  %4125 = vmatprep.subr.mxu0 0.0
  %4126 = vmatpush1.xpose.msra.mxu0 0.0
  %4127 = vmatprep.subr.mxu0 0.0
  %4128 = vmatpush1.xpose.msra.mxu0 0.0
  %4129 = vmatprep.subr.mxu0 0.0
  %4130 = vmatpush1.xpose.msra.mxu0 0.0
  %4131 = vmatprep.subr.mxu0 0.0
  %4132 = vmatpush1.xpose.msra.mxu0 0.0
  %4133 = vmatprep.mubr.f32.mxu0 0.0
  %4134 = vmatmul.mubr.f32.gmra.mrb[0].mxu0 %v4065
  %v4135 = vpop.f32.mrb[0].mxu0
  %v4136 = vadd.f32 %v2594, %v4135
  %v4137 = vpop.f32.mrb[0].mxu0
  %4138 = vdwg.mxu0
  %v4139 = vsel %vm238, %v4136, -inf
  %4140 = vmax.xlane.f32.xlu0 %v4139
  %v4141 = vpop.xlane.xlu0 %4140
  %v4142 = vsub.f32 %v4136, %v4141
  %v4143 = vmul.f32 %v4142, 1.442695
  %v4144 = vpow.pop %v4143
  %v4145 = vsel %vm238, %v4144, 0.0
  %4146 = vadd.xlane.f32.xlu0 %v4145
  %v4147 = vpop.xlane.xlu0 %4146
  %v4148 = vrcp.pop %v4147
  %v4149 = vmul.f32 %v4144, %v4148
  %4150 = vmatprep.subr.mxu0 0.0
  %4151 = vmatpush1.msra.mxu0 %v53
  %4152 = vmatprep.subr.mxu0 0.0
  %4153 = vmatpush1.msra.mxu0 %v54
  %4154 = vmatprep.subr.mxu0 0.0
  %4155 = vmatpush1.msra.mxu0 %v55
  %4156 = vmatprep.subr.mxu0 0.0
  %4157 = vmatpush1.msra.mxu0 %v56
  %4158 = vmatprep.subr.mxu0 0.0
  %4159 = vmatpush1.msra.mxu0 0.0
  %4160 = vmatprep.subr.mxu0 0.0
  %4161 = vmatpush1.msra.mxu0 0.0
  %4162 = vmatprep.subr.mxu0 0.0
  %4163 = vmatpush1.msra.mxu0 0.0
  %4164 = vmatprep.subr.mxu0 0.0
  %4165 = vmatpush1.msra.mxu0 0.0
  %4166 = vmatprep.subr.mxu0 0.0
  %4167 = vmatpush1.msra.mxu0 0.0
  %4168 = vmatprep.subr.mxu0 0.0
  %4169 = vmatpush1.msra.mxu0 0.0
  %4170 = vmatprep.subr.mxu0 0.0
  %4171 = vmatpush1.msra.mxu0 0.0
  %4172 = vmatprep.subr.mxu0 0.0
  %4173 = vmatpush1.msra.mxu0 0.0
  %4174 = vmatprep.subr.mxu0 0.0
  %4175 = vmatpush1.msra.mxu0 0.0
  %4176 = vmatprep.subr.mxu0 0.0
  %4177 = vmatpush1.msra.mxu0 0.0
  %4178 = vmatprep.subr.mxu0 0.0
  %4179 = vmatpush1.msra.mxu0 0.0
  %4180 = vmatprep.subr.mxu0 0.0
  %4181 = vmatpush1.msra.mxu0 0.0
  %4182 = vmatprep.subr.mxu0 0.0
  %4183 = vmatpush1.msra.mxu0 0.0
  %4184 = vmatprep.subr.mxu0 0.0
  %4185 = vmatpush1.msra.mxu0 0.0
  %4186 = vmatprep.subr.mxu0 0.0
  %4187 = vmatpush1.msra.mxu0 0.0
  %4188 = vmatprep.subr.mxu0 0.0
  %4189 = vmatpush1.msra.mxu0 0.0
  %4190 = vmatprep.subr.mxu0 0.0
  %4191 = vmatpush1.msra.mxu0 0.0
  %4192 = vmatprep.subr.mxu0 0.0
  %4193 = vmatpush1.msra.mxu0 0.0
  %4194 = vmatprep.subr.mxu0 0.0
  %4195 = vmatpush1.msra.mxu0 0.0
  %4196 = vmatprep.subr.mxu0 0.0
  %4197 = vmatpush1.msra.mxu0 0.0
  %4198 = vmatprep.subr.mxu0 0.0
  %4199 = vmatpush1.msra.mxu0 0.0
  %4200 = vmatprep.subr.mxu0 0.0
  %4201 = vmatpush1.msra.mxu0 0.0
  %4202 = vmatprep.subr.mxu0 0.0
  %4203 = vmatpush1.msra.mxu0 0.0
  %4204 = vmatprep.subr.mxu0 0.0
  %4205 = vmatpush1.msra.mxu0 0.0
  %4206 = vmatprep.subr.mxu0 0.0
  %4207 = vmatpush1.msra.mxu0 0.0
  %4208 = vmatprep.subr.mxu0 0.0
  %4209 = vmatpush1.msra.mxu0 0.0
  %4210 = vmatprep.subr.mxu0 0.0
  %4211 = vmatpush1.msra.mxu0 0.0
  %4212 = vmatprep.subr.mxu0 0.0
  %4213 = vmatpush1.msra.mxu0 0.0
  %4214 = vmatprep.mubr.f32.mxu0 0.0
  %4215 = vmatmul.mubr.f32.gmra.mrb[0].mxu0 %v3758
  %v4216 = vpop.f32.mrb[0].mxu0
  %v4217 = vadd.f32 0.0, %v4216
  %v4218 = vpop.f32.mrb[0].mxu0
  %4219 = vdwg.mxu0
  %v4221 = vsel %vm238, %v4149, 0
  %4223 = vmatprep.subr.mxu0 0.0
  %4224 = vmatpush1.msra.mxu0 %v4217
  %4225 = vmatprep.subr.mxu0 0.0
  %4226 = vmatpush1.msra.mxu0 0.0
  %4227 = vmatprep.subr.mxu0 0.0
  %4228 = vmatpush1.msra.mxu0 0.0
  %4229 = vmatprep.subr.mxu0 0.0
  %4230 = vmatpush1.msra.mxu0 0.0
  %4231 = vmatprep.subr.mxu0 0.0
  %4232 = vmatpush1.msra.mxu0 0.0
  %4233 = vmatprep.subr.mxu0 0.0
  %4234 = vmatpush1.msra.mxu0 0.0
  %4235 = vmatprep.subr.mxu0 0.0
  %4236 = vmatpush1.msra.mxu0 0.0
  %4237 = vmatprep.subr.mxu0 0.0
  %4238 = vmatpush1.msra.mxu0 0.0
  %4239 = vmatprep.subr.mxu0 0.0
  %4240 = vmatpush1.msra.mxu0 0.0
  %4241 = vmatprep.subr.mxu0 0.0
  %4242 = vmatpush1.msra.mxu0 0.0
  %4243 = vmatprep.subr.mxu0 0.0
  %4244 = vmatpush1.msra.mxu0 0.0
  %4245 = vmatprep.subr.mxu0 0.0
  %4246 = vmatpush1.msra.mxu0 0.0
  %4247 = vmatprep.subr.mxu0 0.0
  %4248 = vmatpush1.msra.mxu0 0.0
  %4249 = vmatprep.subr.mxu0 0.0
  %4250 = vmatpush1.msra.mxu0 0.0
  %4251 = vmatprep.subr.mxu0 0.0
  %4252 = vmatpush1.msra.mxu0 0.0
  %4253 = vmatprep.subr.mxu0 0.0
  %4254 = vmatpush1.msra.mxu0 0.0
  %4255 = vmatprep.subr.mxu0 0.0
  %4256 = vmatpush1.msra.mxu0 0.0
  %4257 = vmatprep.subr.mxu0 0.0
  %4258 = vmatpush1.msra.mxu0 0.0
  %4259 = vmatprep.subr.mxu0 0.0
  %4260 = vmatpush1.msra.mxu0 0.0
  %4261 = vmatprep.subr.mxu0 0.0
  %4262 = vmatpush1.msra.mxu0 0.0
  %4263 = vmatprep.subr.mxu0 0.0
  %4264 = vmatpush1.msra.mxu0 0.0
  %4265 = vmatprep.subr.mxu0 0.0
  %4266 = vmatpush1.msra.mxu0 0.0
  %4267 = vmatprep.subr.mxu0 0.0
  %4268 = vmatpush1.msra.mxu0 0.0
  %4269 = vmatprep.subr.mxu0 0.0
  %4270 = vmatpush1.msra.mxu0 0.0
  %4271 = vmatprep.subr.mxu0 0.0
  %4272 = vmatpush1.msra.mxu0 0.0
  %4273 = vmatprep.subr.mxu0 0.0
  %4274 = vmatpush1.msra.mxu0 0.0
  %4275 = vmatprep.subr.mxu0 0.0
  %4276 = vmatpush1.msra.mxu0 0.0
  %4277 = vmatprep.subr.mxu0 0.0
  %4278 = vmatpush1.msra.mxu0 0.0
  %4279 = vmatprep.subr.mxu0 0.0
  %4280 = vmatpush1.msra.mxu0 0.0
  %4281 = vmatprep.subr.mxu0 0.0
  %4282 = vmatpush1.msra.mxu0 0.0
  %4283 = vmatprep.subr.mxu0 0.0
  %4284 = vmatpush1.msra.mxu0 0.0
  %4285 = vmatprep.subr.mxu0 0.0
  %4286 = vmatpush1.msra.mxu0 0.0
  %4287 = vmatprep.mubr.f32.mxu0 0.0
  %4288 = vmatmul.mubr.f32.gmra.mrb[0].mxu0 %v4221
  %v4289 = vpop.f32.mrb[0].mxu0
  %v4290 = vadd.f32 0.0, %v4289
  %v4291 = vpop.f32.mrb[0].mxu0
  %4292 = vdwg.mxu0
  %v4293 = vadd.f32 %v4060, %v4290
  %v4294 = vadd.f32 %v3916, %v4149
  %4295 = vrot.lane.b32.xlu0 %v3754, 112
  %v4296 = vpop.permute.xlu0 %4295
  %4297 = vrot.lane.b32.xlu0 %v3827, 112
  %v4298 = vpop.permute.xlu0 %4297
  %v4299 = vsel %vm238, %v4296, 0
  %v4301 = vsel %vm238, %v4298, 0
  %4303 = vmatprep.subr.mxu0 0.0
  %4304 = vmatpush1.xpose.msra.mxu0 %v4301
  %4305 = vmatprep.subr.mxu0 0.0
  %4306 = vmatpush1.xpose.msra.mxu0 0.0
  %4307 = vmatprep.subr.mxu0 0.0
  %4308 = vmatpush1.xpose.msra.mxu0 0.0
  %4309 = vmatprep.subr.mxu0 0.0
  %4310 = vmatpush1.xpose.msra.mxu0 0.0
  %4311 = vmatprep.subr.mxu0 0.0
  %4312 = vmatpush1.xpose.msra.mxu0 0.0
  %4313 = vmatprep.subr.mxu0 0.0
  %4314 = vmatpush1.xpose.msra.mxu0 0.0
  %4315 = vmatprep.subr.mxu0 0.0
  %4316 = vmatpush1.xpose.msra.mxu0 0.0
  %4317 = vmatprep.subr.mxu0 0.0
  %4318 = vmatpush1.xpose.msra.mxu0 0.0
  %4319 = vmatprep.subr.mxu0 0.0
  %4320 = vmatpush1.xpose.msra.mxu0 0.0
  %4321 = vmatprep.subr.mxu0 0.0
  %4322 = vmatpush1.xpose.msra.mxu0 0.0
  %4323 = vmatprep.subr.mxu0 0.0
  %4324 = vmatpush1.xpose.msra.mxu0 0.0
  %4325 = vmatprep.subr.mxu0 0.0
  %4326 = vmatpush1.xpose.msra.mxu0 0.0
  %4327 = vmatprep.subr.mxu0 0.0
  %4328 = vmatpush1.xpose.msra.mxu0 0.0
  %4329 = vmatprep.subr.mxu0 0.0
  %4330 = vmatpush1.xpose.msra.mxu0 0.0
  %4331 = vmatprep.subr.mxu0 0.0
  %4332 = vmatpush1.xpose.msra.mxu0 0.0
  %4333 = vmatprep.subr.mxu0 0.0
  %4334 = vmatpush1.xpose.msra.mxu0 0.0
  %4335 = vmatprep.subr.mxu0 0.0
  %4336 = vmatpush1.xpose.msra.mxu0 0.0
  %4337 = vmatprep.subr.mxu0 0.0
  %4338 = vmatpush1.xpose.msra.mxu0 0.0
  %4339 = vmatprep.subr.mxu0 0.0
  %4340 = vmatpush1.xpose.msra.mxu0 0.0
  %4341 = vmatprep.subr.mxu0 0.0
  %4342 = vmatpush1.xpose.msra.mxu0 0.0
  %4343 = vmatprep.subr.mxu0 0.0
  %4344 = vmatpush1.xpose.msra.mxu0 0.0
  %4345 = vmatprep.subr.mxu0 0.0
  %4346 = vmatpush1.xpose.msra.mxu0 0.0
  %4347 = vmatprep.subr.mxu0 0.0
  %4348 = vmatpush1.xpose.msra.mxu0 0.0
  %4349 = vmatprep.subr.mxu0 0.0
  %4350 = vmatpush1.xpose.msra.mxu0 0.0
  %4351 = vmatprep.subr.mxu0 0.0
  %4352 = vmatpush1.xpose.msra.mxu0 0.0
  %4353 = vmatprep.subr.mxu0 0.0
  %4354 = vmatpush1.xpose.msra.mxu0 0.0
  %4355 = vmatprep.subr.mxu0 0.0
  %4356 = vmatpush1.xpose.msra.mxu0 0.0
  %4357 = vmatprep.subr.mxu0 0.0
  %4358 = vmatpush1.xpose.msra.mxu0 0.0
  %4359 = vmatprep.subr.mxu0 0.0
  %4360 = vmatpush1.xpose.msra.mxu0 0.0
  %4361 = vmatprep.subr.mxu0 0.0
  %4362 = vmatpush1.xpose.msra.mxu0 0.0
  %4363 = vmatprep.subr.mxu0 0.0
  %4364 = vmatpush1.xpose.msra.mxu0 0.0
  %4365 = vmatprep.subr.mxu0 0.0
  %4366 = vmatpush1.xpose.msra.mxu0 0.0
  %4367 = vmatprep.mubr.f32.mxu0 0.0
  %4368 = vmatmul.mubr.f32.gmra.mrb[0].mxu0 %v4299
  %v4369 = vpop.f32.mrb[0].mxu0
  %v4370 = vadd.f32 %v2594, %v4369
  %v4371 = vpop.f32.mrb[0].mxu0
  %4372 = vdwg.mxu0
  %v4373 = vsel %vm238, %v4370, -inf
  %4374 = vmax.xlane.f32.xlu0 %v4373
  %v4375 = vpop.xlane.xlu0 %4374
  %v4376 = vsub.f32 %v4370, %v4375
  %v4377 = vmul.f32 %v4376, 1.442695
  %v4378 = vpow.pop %v4377
  %v4379 = vsel %vm238, %v4378, 0.0
  %4380 = vadd.xlane.f32.xlu0 %v4379
  %v4381 = vpop.xlane.xlu0 %4380
  %v4382 = vrcp.pop %v4381
  %v4383 = vmul.f32 %v4378, %v4382
  %4384 = vmatprep.subr.mxu0 0.0
  %4385 = vmatpush1.msra.mxu0 %v57
  %4386 = vmatprep.subr.mxu0 0.0
  %4387 = vmatpush1.msra.mxu0 %v58
  %4388 = vmatprep.subr.mxu0 0.0
  %4389 = vmatpush1.msra.mxu0 %v59
  %4390 = vmatprep.subr.mxu0 0.0
  %4391 = vmatpush1.msra.mxu0 %v60
  %4392 = vmatprep.subr.mxu0 0.0
  %4393 = vmatpush1.msra.mxu0 0.0
  %4394 = vmatprep.subr.mxu0 0.0
  %4395 = vmatpush1.msra.mxu0 0.0
  %4396 = vmatprep.subr.mxu0 0.0
  %4397 = vmatpush1.msra.mxu0 0.0
  %4398 = vmatprep.subr.mxu0 0.0
  %4399 = vmatpush1.msra.mxu0 0.0
  %4400 = vmatprep.subr.mxu0 0.0
  %4401 = vmatpush1.msra.mxu0 0.0
  %4402 = vmatprep.subr.mxu0 0.0
  %4403 = vmatpush1.msra.mxu0 0.0
  %4404 = vmatprep.subr.mxu0 0.0
  %4405 = vmatpush1.msra.mxu0 0.0
  %4406 = vmatprep.subr.mxu0 0.0
  %4407 = vmatpush1.msra.mxu0 0.0
  %4408 = vmatprep.subr.mxu0 0.0
  %4409 = vmatpush1.msra.mxu0 0.0
  %4410 = vmatprep.subr.mxu0 0.0
  %4411 = vmatpush1.msra.mxu0 0.0
  %4412 = vmatprep.subr.mxu0 0.0
  %4413 = vmatpush1.msra.mxu0 0.0
  %4414 = vmatprep.subr.mxu0 0.0
  %4415 = vmatpush1.msra.mxu0 0.0
  %4416 = vmatprep.subr.mxu0 0.0
  %4417 = vmatpush1.msra.mxu0 0.0
  %4418 = vmatprep.subr.mxu0 0.0
  %4419 = vmatpush1.msra.mxu0 0.0
  %4420 = vmatprep.subr.mxu0 0.0
  %4421 = vmatpush1.msra.mxu0 0.0
  %4422 = vmatprep.subr.mxu0 0.0
  %4423 = vmatpush1.msra.mxu0 0.0
  %4424 = vmatprep.subr.mxu0 0.0
  %4425 = vmatpush1.msra.mxu0 0.0
  %4426 = vmatprep.subr.mxu0 0.0
  %4427 = vmatpush1.msra.mxu0 0.0
  %4428 = vmatprep.subr.mxu0 0.0
  %4429 = vmatpush1.msra.mxu0 0.0
  %4430 = vmatprep.subr.mxu0 0.0
  %4431 = vmatpush1.msra.mxu0 0.0
  %4432 = vmatprep.subr.mxu0 0.0
  %4433 = vmatpush1.msra.mxu0 0.0
  %4434 = vmatprep.subr.mxu0 0.0
  %4435 = vmatpush1.msra.mxu0 0.0
  %4436 = vmatprep.subr.mxu0 0.0
  %4437 = vmatpush1.msra.mxu0 0.0
  %4438 = vmatprep.subr.mxu0 0.0
  %4439 = vmatpush1.msra.mxu0 0.0
  %4440 = vmatprep.subr.mxu0 0.0
  %4441 = vmatpush1.msra.mxu0 0.0
  %4442 = vmatprep.subr.mxu0 0.0
  %4443 = vmatpush1.msra.mxu0 0.0
  %4444 = vmatprep.subr.mxu0 0.0
  %4445 = vmatpush1.msra.mxu0 0.0
  %4446 = vmatprep.subr.mxu0 0.0
  %4447 = vmatpush1.msra.mxu0 0.0
  %4448 = vmatprep.mubr.f32.mxu0 0.0
  %4449 = vmatmul.mubr.f32.gmra.mrb[0].mxu0 %v3758
  %v4450 = vpop.f32.mrb[0].mxu0
  %v4451 = vadd.f32 0.0, %v4450
  %v4452 = vpop.f32.mrb[0].mxu0
  %4453 = vdwg.mxu0
  %v4455 = vsel %vm238, %v4383, 0
  %4457 = vmatprep.subr.mxu0 0.0
  %4458 = vmatpush1.msra.mxu0 %v4451
  %4459 = vmatprep.subr.mxu0 0.0
  %4460 = vmatpush1.msra.mxu0 0.0
  %4461 = vmatprep.subr.mxu0 0.0
  %4462 = vmatpush1.msra.mxu0 0.0
  %4463 = vmatprep.subr.mxu0 0.0
  %4464 = vmatpush1.msra.mxu0 0.0
  %4465 = vmatprep.subr.mxu0 0.0
  %4466 = vmatpush1.msra.mxu0 0.0
  %4467 = vmatprep.subr.mxu0 0.0
  %4468 = vmatpush1.msra.mxu0 0.0
  %4469 = vmatprep.subr.mxu0 0.0
  %4470 = vmatpush1.msra.mxu0 0.0
  %4471 = vmatprep.subr.mxu0 0.0
  %4472 = vmatpush1.msra.mxu0 0.0
  %4473 = vmatprep.subr.mxu0 0.0
  %4474 = vmatpush1.msra.mxu0 0.0
  %4475 = vmatprep.subr.mxu0 0.0
  %4476 = vmatpush1.msra.mxu0 0.0
  %4477 = vmatprep.subr.mxu0 0.0
  %4478 = vmatpush1.msra.mxu0 0.0
  %4479 = vmatprep.subr.mxu0 0.0
  %4480 = vmatpush1.msra.mxu0 0.0
  %4481 = vmatprep.subr.mxu0 0.0
  %4482 = vmatpush1.msra.mxu0 0.0
  %4483 = vmatprep.subr.mxu0 0.0
  %4484 = vmatpush1.msra.mxu0 0.0
  %4485 = vmatprep.subr.mxu0 0.0
  %4486 = vmatpush1.msra.mxu0 0.0
  %4487 = vmatprep.subr.mxu0 0.0
  %4488 = vmatpush1.msra.mxu0 0.0
  %4489 = vmatprep.subr.mxu0 0.0
  %4490 = vmatpush1.msra.mxu0 0.0
  %4491 = vmatprep.subr.mxu0 0.0
  %4492 = vmatpush1.msra.mxu0 0.0
  %4493 = vmatprep.subr.mxu0 0.0
  %4494 = vmatpush1.msra.mxu0 0.0
  %4495 = vmatprep.subr.mxu0 0.0
  %4496 = vmatpush1.msra.mxu0 0.0
  %4497 = vmatprep.subr.mxu0 0.0
  %4498 = vmatpush1.msra.mxu0 0.0
  %4499 = vmatprep.subr.mxu0 0.0
  %4500 = vmatpush1.msra.mxu0 0.0
  %4501 = vmatprep.subr.mxu0 0.0
  %4502 = vmatpush1.msra.mxu0 0.0
  %4503 = vmatprep.subr.mxu0 0.0
  %4504 = vmatpush1.msra.mxu0 0.0
  %4505 = vmatprep.subr.mxu0 0.0
  %4506 = vmatpush1.msra.mxu0 0.0
  %4507 = vmatprep.subr.mxu0 0.0
  %4508 = vmatpush1.msra.mxu0 0.0
  %4509 = vmatprep.subr.mxu0 0.0
  %4510 = vmatpush1.msra.mxu0 0.0
  %4511 = vmatprep.subr.mxu0 0.0
  %4512 = vmatpush1.msra.mxu0 0.0
  %4513 = vmatprep.subr.mxu0 0.0
  %4514 = vmatpush1.msra.mxu0 0.0
  %4515 = vmatprep.subr.mxu0 0.0
  %4516 = vmatpush1.msra.mxu0 0.0
  %4517 = vmatprep.subr.mxu0 0.0
  %4518 = vmatpush1.msra.mxu0 0.0
  %4519 = vmatprep.subr.mxu0 0.0
  %4520 = vmatpush1.msra.mxu0 0.0
  %4521 = vmatprep.mubr.f32.mxu0 0.0
  %4522 = vmatmul.mubr.f32.gmra.mrb[0].mxu0 %v4455
  %v4523 = vpop.f32.mrb[0].mxu0
  %v4524 = vadd.f32 0.0, %v4523
  %v4525 = vpop.f32.mrb[0].mxu0
  %4526 = vdwg.mxu0
  %v4527 = vadd.f32 %v4293, %v4524
  %v4528 = vadd.f32 %v4294, %v4383
  %4529 = vrot.lane.b32.xlu0 %v3754, 104
  %v4530 = vpop.permute.xlu0 %4529
  %4531 = vrot.lane.b32.xlu0 %v3827, 104
  %v4532 = vpop.permute.xlu0 %4531
  %v4533 = vsel %vm238, %v4530, 0
  %v4535 = vsel %vm238, %v4532, 0
  %4537 = vmatprep.subr.mxu0 0.0
  %4538 = vmatpush1.xpose.msra.mxu0 %v4535
  %4539 = vmatprep.subr.mxu0 0.0
  %4540 = vmatpush1.xpose.msra.mxu0 0.0
  %4541 = vmatprep.subr.mxu0 0.0
  %4542 = vmatpush1.xpose.msra.mxu0 0.0
  %4543 = vmatprep.subr.mxu0 0.0
  %4544 = vmatpush1.xpose.msra.mxu0 0.0
  %4545 = vmatprep.subr.mxu0 0.0
  %4546 = vmatpush1.xpose.msra.mxu0 0.0
  %4547 = vmatprep.subr.mxu0 0.0
  %4548 = vmatpush1.xpose.msra.mxu0 0.0
  %4549 = vmatprep.subr.mxu0 0.0
  %4550 = vmatpush1.xpose.msra.mxu0 0.0
  %4551 = vmatprep.subr.mxu0 0.0
  %4552 = vmatpush1.xpose.msra.mxu0 0.0
  %4553 = vmatprep.subr.mxu0 0.0
  %4554 = vmatpush1.xpose.msra.mxu0 0.0
  %4555 = vmatprep.subr.mxu0 0.0
  %4556 = vmatpush1.xpose.msra.mxu0 0.0
  %4557 = vmatprep.subr.mxu0 0.0
  %4558 = vmatpush1.xpose.msra.mxu0 0.0
  %4559 = vmatprep.subr.mxu0 0.0
  %4560 = vmatpush1.xpose.msra.mxu0 0.0
  %4561 = vmatprep.subr.mxu0 0.0
  %4562 = vmatpush1.xpose.msra.mxu0 0.0
  %4563 = vmatprep.subr.mxu0 0.0
  %4564 = vmatpush1.xpose.msra.mxu0 0.0
  %4565 = vmatprep.subr.mxu0 0.0
  %4566 = vmatpush1.xpose.msra.mxu0 0.0
  %4567 = vmatprep.subr.mxu0 0.0
  %4568 = vmatpush1.xpose.msra.mxu0 0.0
  %4569 = vmatprep.subr.mxu0 0.0
  %4570 = vmatpush1.xpose.msra.mxu0 0.0
  %4571 = vmatprep.subr.mxu0 0.0
  %4572 = vmatpush1.xpose.msra.mxu0 0.0
  %4573 = vmatprep.subr.mxu0 0.0
  %4574 = vmatpush1.xpose.msra.mxu0 0.0
  %4575 = vmatprep.subr.mxu0 0.0
  %4576 = vmatpush1.xpose.msra.mxu0 0.0
  %4577 = vmatprep.subr.mxu0 0.0
  %4578 = vmatpush1.xpose.msra.mxu0 0.0
  %4579 = vmatprep.subr.mxu0 0.0
  %4580 = vmatpush1.xpose.msra.mxu0 0.0
  %4581 = vmatprep.subr.mxu0 0.0
  %4582 = vmatpush1.xpose.msra.mxu0 0.0
  %4583 = vmatprep.subr.mxu0 0.0
  %4584 = vmatpush1.xpose.msra.mxu0 0.0
  %4585 = vmatprep.subr.mxu0 0.0
  %4586 = vmatpush1.xpose.msra.mxu0 0.0
  %4587 = vmatprep.subr.mxu0 0.0
  %4588 = vmatpush1.xpose.msra.mxu0 0.0
  %4589 = vmatprep.subr.mxu0 0.0
  %4590 = vmatpush1.xpose.msra.mxu0 0.0
  %4591 = vmatprep.subr.mxu0 0.0
  %4592 = vmatpush1.xpose.msra.mxu0 0.0
  %4593 = vmatprep.subr.mxu0 0.0
  %4594 = vmatpush1.xpose.msra.mxu0 0.0
  %4595 = vmatprep.subr.mxu0 0.0
  %4596 = vmatpush1.xpose.msra.mxu0 0.0
  %4597 = vmatprep.subr.mxu0 0.0
  %4598 = vmatpush1.xpose.msra.mxu0 0.0
  %4599 = vmatprep.subr.mxu0 0.0
  %4600 = vmatpush1.xpose.msra.mxu0 0.0
  %4601 = vmatprep.mubr.f32.mxu0 0.0
  %4602 = vmatmul.mubr.f32.gmra.mrb[0].mxu0 %v4533
  %v4603 = vpop.f32.mrb[0].mxu0
  %v4604 = vadd.f32 %v2594, %v4603
  %v4605 = vpop.f32.mrb[0].mxu0
  %4606 = vdwg.mxu0
  %v4607 = vsel %vm238, %v4604, -inf
  %4608 = vmax.xlane.f32.xlu0 %v4607
  %v4609 = vpop.xlane.xlu0 %4608
  %v4610 = vsub.f32 %v4604, %v4609
  %v4611 = vmul.f32 %v4610, 1.442695
  %v4612 = vpow.pop %v4611
  %v4613 = vsel %vm238, %v4612, 0.0
  %4614 = vadd.xlane.f32.xlu0 %v4613
  %v4615 = vpop.xlane.xlu0 %4614
  %v4616 = vrcp.pop %v4615
  %v4617 = vmul.f32 %v4612, %v4616
  %4618 = vmatprep.subr.mxu0 0.0
  %4619 = vmatpush1.msra.mxu0 %v61
  %4620 = vmatprep.subr.mxu0 0.0
  %4621 = vmatpush1.msra.mxu0 %v62
  %4622 = vmatprep.subr.mxu0 0.0
  %4623 = vmatpush1.msra.mxu0 %v63
  %4624 = vmatprep.subr.mxu0 0.0
  %4625 = vmatpush1.msra.mxu0 %v64
  %4626 = vmatprep.subr.mxu0 0.0
  %4627 = vmatpush1.msra.mxu0 0.0
  %4628 = vmatprep.subr.mxu0 0.0
  %4629 = vmatpush1.msra.mxu0 0.0
  %4630 = vmatprep.subr.mxu0 0.0
  %4631 = vmatpush1.msra.mxu0 0.0
  %4632 = vmatprep.subr.mxu0 0.0
  %4633 = vmatpush1.msra.mxu0 0.0
  %4634 = vmatprep.subr.mxu0 0.0
  %4635 = vmatpush1.msra.mxu0 0.0
  %4636 = vmatprep.subr.mxu0 0.0
  %4637 = vmatpush1.msra.mxu0 0.0
  %4638 = vmatprep.subr.mxu0 0.0
  %4639 = vmatpush1.msra.mxu0 0.0
  %4640 = vmatprep.subr.mxu0 0.0
  %4641 = vmatpush1.msra.mxu0 0.0
  %4642 = vmatprep.subr.mxu0 0.0
  %4643 = vmatpush1.msra.mxu0 0.0
  %4644 = vmatprep.subr.mxu0 0.0
  %4645 = vmatpush1.msra.mxu0 0.0
  %4646 = vmatprep.subr.mxu0 0.0
  %4647 = vmatpush1.msra.mxu0 0.0
  %4648 = vmatprep.subr.mxu0 0.0
  %4649 = vmatpush1.msra.mxu0 0.0
  %4650 = vmatprep.subr.mxu0 0.0
  %4651 = vmatpush1.msra.mxu0 0.0
  %4652 = vmatprep.subr.mxu0 0.0
  %4653 = vmatpush1.msra.mxu0 0.0
  %4654 = vmatprep.subr.mxu0 0.0
  %4655 = vmatpush1.msra.mxu0 0.0
  %4656 = vmatprep.subr.mxu0 0.0
  %4657 = vmatpush1.msra.mxu0 0.0
  %4658 = vmatprep.subr.mxu0 0.0
  %4659 = vmatpush1.msra.mxu0 0.0
  %4660 = vmatprep.subr.mxu0 0.0
  %4661 = vmatpush1.msra.mxu0 0.0
  %4662 = vmatprep.subr.mxu0 0.0
  %4663 = vmatpush1.msra.mxu0 0.0
  %4664 = vmatprep.subr.mxu0 0.0
  %4665 = vmatpush1.msra.mxu0 0.0
  %4666 = vmatprep.subr.mxu0 0.0
  %4667 = vmatpush1.msra.mxu0 0.0
  %4668 = vmatprep.subr.mxu0 0.0
  %4669 = vmatpush1.msra.mxu0 0.0
  %4670 = vmatprep.subr.mxu0 0.0
  %4671 = vmatpush1.msra.mxu0 0.0
  %4672 = vmatprep.subr.mxu0 0.0
  %4673 = vmatpush1.msra.mxu0 0.0
  %4674 = vmatprep.subr.mxu0 0.0
  %4675 = vmatpush1.msra.mxu0 0.0
  %4676 = vmatprep.subr.mxu0 0.0
  %4677 = vmatpush1.msra.mxu0 0.0
  %4678 = vmatprep.subr.mxu0 0.0
  %4679 = vmatpush1.msra.mxu0 0.0
  %4680 = vmatprep.subr.mxu0 0.0
  %4681 = vmatpush1.msra.mxu0 0.0
  %4682 = vmatprep.mubr.f32.mxu0 0.0
  %4683 = vmatmul.mubr.f32.gmra.mrb[0].mxu0 %v3758
  %v4684 = vpop.f32.mrb[0].mxu0
  %v4685 = vadd.f32 0.0, %v4684
  %v4686 = vpop.f32.mrb[0].mxu0
  %4687 = vdwg.mxu0
  %v4689 = vsel %vm238, %v4617, 0
  %4691 = vmatprep.subr.mxu0 0.0
  %4692 = vmatpush1.msra.mxu0 %v4685
  %4693 = vmatprep.subr.mxu0 0.0
  %4694 = vmatpush1.msra.mxu0 0.0
  %4695 = vmatprep.subr.mxu0 0.0
  %4696 = vmatpush1.msra.mxu0 0.0
  %4697 = vmatprep.subr.mxu0 0.0
  %4698 = vmatpush1.msra.mxu0 0.0
  %4699 = vmatprep.subr.mxu0 0.0
  %4700 = vmatpush1.msra.mxu0 0.0
  %4701 = vmatprep.subr.mxu0 0.0
  %4702 = vmatpush1.msra.mxu0 0.0
  %4703 = vmatprep.subr.mxu0 0.0
  %4704 = vmatpush1.msra.mxu0 0.0
  %4705 = vmatprep.subr.mxu0 0.0
  %4706 = vmatpush1.msra.mxu0 0.0
  %4707 = vmatprep.subr.mxu0 0.0
  %4708 = vmatpush1.msra.mxu0 0.0
  %4709 = vmatprep.subr.mxu0 0.0
  %4710 = vmatpush1.msra.mxu0 0.0
  %4711 = vmatprep.subr.mxu0 0.0
  %4712 = vmatpush1.msra.mxu0 0.0
  %4713 = vmatprep.subr.mxu0 0.0
  %4714 = vmatpush1.msra.mxu0 0.0
  %4715 = vmatprep.subr.mxu0 0.0
  %4716 = vmatpush1.msra.mxu0 0.0
  %4717 = vmatprep.subr.mxu0 0.0
  %4718 = vmatpush1.msra.mxu0 0.0
  %4719 = vmatprep.subr.mxu0 0.0
  %4720 = vmatpush1.msra.mxu0 0.0
  %4721 = vmatprep.subr.mxu0 0.0
  %4722 = vmatpush1.msra.mxu0 0.0
  %4723 = vmatprep.subr.mxu0 0.0
  %4724 = vmatpush1.msra.mxu0 0.0
  %4725 = vmatprep.subr.mxu0 0.0
  %4726 = vmatpush1.msra.mxu0 0.0
  %4727 = vmatprep.subr.mxu0 0.0
  %4728 = vmatpush1.msra.mxu0 0.0
  %4729 = vmatprep.subr.mxu0 0.0
  %4730 = vmatpush1.msra.mxu0 0.0
  %4731 = vmatprep.subr.mxu0 0.0
  %4732 = vmatpush1.msra.mxu0 0.0
  %4733 = vmatprep.subr.mxu0 0.0
  %4734 = vmatpush1.msra.mxu0 0.0
  %4735 = vmatprep.subr.mxu0 0.0
  %4736 = vmatpush1.msra.mxu0 0.0
  %4737 = vmatprep.subr.mxu0 0.0
  %4738 = vmatpush1.msra.mxu0 0.0
  %4739 = vmatprep.subr.mxu0 0.0
  %4740 = vmatpush1.msra.mxu0 0.0
  %4741 = vmatprep.subr.mxu0 0.0
  %4742 = vmatpush1.msra.mxu0 0.0
  %4743 = vmatprep.subr.mxu0 0.0
  %4744 = vmatpush1.msra.mxu0 0.0
  %4745 = vmatprep.subr.mxu0 0.0
  %4746 = vmatpush1.msra.mxu0 0.0
  %4747 = vmatprep.subr.mxu0 0.0
  %4748 = vmatpush1.msra.mxu0 0.0
  %4749 = vmatprep.subr.mxu0 0.0
  %4750 = vmatpush1.msra.mxu0 0.0
  %4751 = vmatprep.subr.mxu0 0.0
  %4752 = vmatpush1.msra.mxu0 0.0
  %4753 = vmatprep.subr.mxu0 0.0
  %4754 = vmatpush1.msra.mxu0 0.0
  %4755 = vmatprep.mubr.f32.mxu0 0.0
  %4756 = vmatmul.mubr.f32.gmra.mrb[0].mxu0 %v4689
  %v4757 = vpop.f32.mrb[0].mxu0
  %v4758 = vadd.f32 0.0, %v4757
  %v4759 = vpop.f32.mrb[0].mxu0
  %4760 = vdwg.mxu0
  %v4761 = vadd.f32 %v4527, %v4758
  %v4762 = vadd.f32 %v4528, %v4617
  %v4763 = vadd.f32 %v3683, %v4761
  %v4764 = vsel %vm94, %v4763, 0.0
  %4765 = vadd.xlane.f32.xlu0 %v4764
  %v4766 = vpop.xlane.xlu0 %4765
  %v4767 = vmul.f32 %v4766, %v1173
  %v4768 = vsub.f32 %v4763, %v4767
  %v4769 = vmul.f32 %v4768, %v4768
  %v4770 = vsel %vm94, %v4769, 0.0
  %4771 = vadd.xlane.f32.xlu0 %v4770
  %v4772 = vpop.xlane.xlu0 %4771
  %v4773 = vmul.f32 %v4772, %v1173
  %v4774 = vadd.f32 %v4773, 1e-05
  %v4775 = vrsqrt.pop %v4774
  %v4776 = vmul.f32 %v4768, %v4775
  %v4777 = vmul.f32 %v4776, %v85
  %v4778 = vadd.f32 %v4777, %v88
  %v4780 = vsel %vm94, %v4778, 0
  %4782 = vmatprep.subr.mxu0 0.0
  %4783 = vmatpush1.msra.mxu0 %v65
  %4784 = vmatprep.subr.mxu0 0.0
  %4785 = vmatpush1.msra.mxu0 %v66
  %4786 = vmatprep.subr.mxu0 0.0
  %4787 = vmatpush1.msra.mxu0 %v67
  %4788 = vmatprep.subr.mxu0 0.0
  %4789 = vmatpush1.msra.mxu0 %v68
  %4790 = vmatprep.subr.mxu0 0.0
  %4791 = vmatpush1.msra.mxu0 0.0
  %4792 = vmatprep.subr.mxu0 0.0
  %4793 = vmatpush1.msra.mxu0 0.0
  %4794 = vmatprep.subr.mxu0 0.0
  %4795 = vmatpush1.msra.mxu0 0.0
  %4796 = vmatprep.subr.mxu0 0.0
  %4797 = vmatpush1.msra.mxu0 0.0
  %4798 = vmatprep.subr.mxu0 0.0
  %4799 = vmatpush1.msra.mxu0 0.0
  %4800 = vmatprep.subr.mxu0 0.0
  %4801 = vmatpush1.msra.mxu0 0.0
  %4802 = vmatprep.subr.mxu0 0.0
  %4803 = vmatpush1.msra.mxu0 0.0
  %4804 = vmatprep.subr.mxu0 0.0
  %4805 = vmatpush1.msra.mxu0 0.0
  %4806 = vmatprep.subr.mxu0 0.0
  %4807 = vmatpush1.msra.mxu0 0.0
  %4808 = vmatprep.subr.mxu0 0.0
  %4809 = vmatpush1.msra.mxu0 0.0
  %4810 = vmatprep.subr.mxu0 0.0
  %4811 = vmatpush1.msra.mxu0 0.0
  %4812 = vmatprep.subr.mxu0 0.0
  %4813 = vmatpush1.msra.mxu0 0.0
  %4814 = vmatprep.subr.mxu0 0.0
  %4815 = vmatpush1.msra.mxu0 0.0
  %4816 = vmatprep.subr.mxu0 0.0
  %4817 = vmatpush1.msra.mxu0 0.0
  %4818 = vmatprep.subr.mxu0 0.0
  %4819 = vmatpush1.msra.mxu0 0.0
  %4820 = vmatprep.subr.mxu0 0.0
  %4821 = vmatpush1.msra.mxu0 0.0
  %4822 = vmatprep.subr.mxu0 0.0
  %4823 = vmatpush1.msra.mxu0 0.0
  %4824 = vmatprep.subr.mxu0 0.0
  %4825 = vmatpush1.msra.mxu0 0.0
  %4826 = vmatprep.subr.mxu0 0.0
  %4827 = vmatpush1.msra.mxu0 0.0
  %4828 = vmatprep.subr.mxu0 0.0
  %4829 = vmatpush1.msra.mxu0 0.0
  %4830 = vmatprep.subr.mxu0 0.0
  %4831 = vmatpush1.msra.mxu0 0.0
  %4832 = vmatprep.subr.mxu0 0.0
  %4833 = vmatpush1.msra.mxu0 0.0
  %4834 = vmatprep.subr.mxu0 0.0
  %4835 = vmatpush1.msra.mxu0 0.0
  %4836 = vmatprep.subr.mxu0 0.0
  %4837 = vmatpush1.msra.mxu0 0.0
  %4838 = vmatprep.subr.mxu0 0.0
  %4839 = vmatpush1.msra.mxu0 0.0
  %4840 = vmatprep.subr.mxu0 0.0
  %4841 = vmatpush1.msra.mxu0 0.0
  %4842 = vmatprep.subr.mxu0 0.0
  %4843 = vmatpush1.msra.mxu0 0.0
  %4844 = vmatprep.subr.mxu0 0.0
  %4845 = vmatpush1.msra.mxu0 0.0
  %4846 = vmatprep.mubr.f32.mxu0 0.0
  %4847 = vmatmul.mubr.f32.gmra.mrb[0].mxu0 %v4780
  %v4848 = vpop.f32.mrb[0].mxu0
  %v4849 = vadd.f32 %v81, %v4848
  %v4850 = vpop.f32.mrb[0].mxu0
  %4851 = vdwg.mxu0
  %v4852 = vmax.f32 %v4849, 0.0
  %4853 = vmatprep.subr.mxu0 0.0
  %4854 = vmatpush1.msra.mxu0 %v69
  %4855 = vmatprep.subr.mxu0 0.0
  %4856 = vmatpush1.msra.mxu0 %v70
  %4857 = vmatprep.subr.mxu0 0.0
  %4858 = vmatpush1.msra.mxu0 %v71
  %4859 = vmatprep.subr.mxu0 0.0
  %4860 = vmatpush1.msra.mxu0 %v72
  %4861 = vmatprep.subr.mxu0 0.0
  %4862 = vmatpush1.msra.mxu0 0.0
  %4863 = vmatprep.subr.mxu0 0.0
  %4864 = vmatpush1.msra.mxu0 0.0
  %4865 = vmatprep.subr.mxu0 0.0
  %4866 = vmatpush1.msra.mxu0 0.0
  %4867 = vmatprep.subr.mxu0 0.0
  %4868 = vmatpush1.msra.mxu0 0.0
  %4869 = vmatprep.subr.mxu0 0.0
  %4870 = vmatpush1.msra.mxu0 0.0
  %4871 = vmatprep.subr.mxu0 0.0
  %4872 = vmatpush1.msra.mxu0 0.0
  %4873 = vmatprep.subr.mxu0 0.0
  %4874 = vmatpush1.msra.mxu0 0.0
  %4875 = vmatprep.subr.mxu0 0.0
  %4876 = vmatpush1.msra.mxu0 0.0
  %4877 = vmatprep.subr.mxu0 0.0
  %4878 = vmatpush1.msra.mxu0 0.0
  %4879 = vmatprep.subr.mxu0 0.0
  %4880 = vmatpush1.msra.mxu0 0.0
  %4881 = vmatprep.subr.mxu0 0.0
  %4882 = vmatpush1.msra.mxu0 0.0
  %4883 = vmatprep.subr.mxu0 0.0
  %4884 = vmatpush1.msra.mxu0 0.0
  %4885 = vmatprep.subr.mxu0 0.0
  %4886 = vmatpush1.msra.mxu0 0.0
  %4887 = vmatprep.subr.mxu0 0.0
  %4888 = vmatpush1.msra.mxu0 0.0
  %4889 = vmatprep.subr.mxu0 0.0
  %4890 = vmatpush1.msra.mxu0 0.0
  %4891 = vmatprep.subr.mxu0 0.0
  %4892 = vmatpush1.msra.mxu0 0.0
  %4893 = vmatprep.subr.mxu0 0.0
  %4894 = vmatpush1.msra.mxu0 0.0
  %4895 = vmatprep.subr.mxu0 0.0
  %4896 = vmatpush1.msra.mxu0 0.0
  %4897 = vmatprep.subr.mxu0 0.0
  %4898 = vmatpush1.msra.mxu0 0.0
  %4899 = vmatprep.subr.mxu0 0.0
  %4900 = vmatpush1.msra.mxu0 0.0
  %4901 = vmatprep.subr.mxu0 0.0
  %4902 = vmatpush1.msra.mxu0 0.0
  %4903 = vmatprep.subr.mxu0 0.0
  %4904 = vmatpush1.msra.mxu0 0.0
  %4905 = vmatprep.subr.mxu0 0.0
  %4906 = vmatpush1.msra.mxu0 0.0
  %4907 = vmatprep.subr.mxu0 0.0
  %4908 = vmatpush1.msra.mxu0 0.0
  %4909 = vmatprep.subr.mxu0 0.0
  %4910 = vmatpush1.msra.mxu0 0.0
  %4911 = vmatprep.subr.mxu0 0.0
  %4912 = vmatpush1.msra.mxu0 0.0
  %4913 = vmatprep.subr.mxu0 0.0
  %4914 = vmatpush1.msra.mxu0 0.0
  %4915 = vmatprep.subr.mxu0 0.0
  %4916 = vmatpush1.msra.mxu0 0.0
  %4917 = vmatprep.mubr.f32.mxu0 0.0
  %4918 = vmatmul.mubr.f32.gmra.mrb[0].mxu0 %v4780
  %v4919 = vpop.f32.mrb[0].mxu0
  %v4920 = vadd.f32 %v82, %v4919
  %v4921 = vpop.f32.mrb[0].mxu0
  %4922 = vdwg.mxu0
  %v4923 = vmax.f32 %v4920, 0.0
  %v4925 = vsel %vm94, %v4923, 0
  %4927 = vmatprep.subr.mxu0 0.0
  %4928 = vmatpush1.msra.mxu0 %v77
  %4929 = vmatprep.subr.mxu0 0.0
  %4930 = vmatpush1.msra.mxu0 %v78
  %4931 = vmatprep.subr.mxu0 0.0
  %4932 = vmatpush1.msra.mxu0 %v79
  %4933 = vmatprep.subr.mxu0 0.0
  %4934 = vmatpush1.msra.mxu0 %v80
  %4935 = vmatprep.subr.mxu0 0.0
  %4936 = vmatpush1.msra.mxu0 0.0
  %4937 = vmatprep.subr.mxu0 0.0
  %4938 = vmatpush1.msra.mxu0 0.0
  %4939 = vmatprep.subr.mxu0 0.0
  %4940 = vmatpush1.msra.mxu0 0.0
  %4941 = vmatprep.subr.mxu0 0.0
  %4942 = vmatpush1.msra.mxu0 0.0
  %4943 = vmatprep.subr.mxu0 0.0
  %4944 = vmatpush1.msra.mxu0 0.0
  %4945 = vmatprep.subr.mxu0 0.0
  %4946 = vmatpush1.msra.mxu0 0.0
  %4947 = vmatprep.subr.mxu0 0.0
  %4948 = vmatpush1.msra.mxu0 0.0
  %4949 = vmatprep.subr.mxu0 0.0
  %4950 = vmatpush1.msra.mxu0 0.0
  %4951 = vmatprep.subr.mxu0 0.0
  %4952 = vmatpush1.msra.mxu0 0.0
  %4953 = vmatprep.subr.mxu0 0.0
  %4954 = vmatpush1.msra.mxu0 0.0
  %4955 = vmatprep.subr.mxu0 0.0
  %4956 = vmatpush1.msra.mxu0 0.0
  %4957 = vmatprep.subr.mxu0 0.0
  %4958 = vmatpush1.msra.mxu0 0.0
  %4959 = vmatprep.subr.mxu0 0.0
  %4960 = vmatpush1.msra.mxu0 0.0
  %4961 = vmatprep.subr.mxu0 0.0
  %4962 = vmatpush1.msra.mxu0 0.0
  %4963 = vmatprep.subr.mxu0 0.0
  %4964 = vmatpush1.msra.mxu0 0.0
  %4965 = vmatprep.subr.mxu0 0.0
  %4966 = vmatpush1.msra.mxu0 0.0
  %4967 = vmatprep.subr.mxu0 0.0
  %4968 = vmatpush1.msra.mxu0 0.0
  %4969 = vmatprep.subr.mxu0 0.0
  %4970 = vmatpush1.msra.mxu0 0.0
  %4971 = vmatprep.subr.mxu0 0.0
  %4972 = vmatpush1.msra.mxu0 0.0
  %4973 = vmatprep.subr.mxu0 0.0
  %4974 = vmatpush1.msra.mxu0 0.0
  %4975 = vmatprep.subr.mxu0 0.0
  %4976 = vmatpush1.msra.mxu0 0.0
  %4977 = vmatprep.subr.mxu0 0.0
  %4978 = vmatpush1.msra.mxu0 0.0
  %4979 = vmatprep.subr.mxu0 0.0
  %4980 = vmatpush1.msra.mxu0 0.0
  %4981 = vmatprep.subr.mxu0 0.0
  %4982 = vmatpush1.msra.mxu0 0.0
  %4983 = vmatprep.subr.mxu0 0.0
  %4984 = vmatpush1.msra.mxu0 0.0
  %4985 = vmatprep.subr.mxu0 0.0
  %4986 = vmatpush1.msra.mxu0 0.0
  %4987 = vmatprep.subr.mxu0 0.0
  %4988 = vmatpush1.msra.mxu0 0.0
  %4989 = vmatprep.subr.mxu0 0.0
  %4990 = vmatpush1.msra.mxu0 0.0
  %4991 = vmatprep.mubr.f32.mxu0 0.0
  %4992 = vmatmul.mubr.f32.gmra.mrb[0].mxu0 %v4925
  %v4993 = vpop.f32.mrb[0].mxu0
  %v4994 = vadd.f32 0.0, %v4993
  %v4995 = vpop.f32.mrb[0].mxu0
  %4996 = vdwg.mxu0
  %v4998 = vsel %vm94, %v4852, 0
  %5000 = vmatprep.subr.mxu0 0.0
  %5001 = vmatpush1.msra.mxu0 %v73
  %5002 = vmatprep.subr.mxu0 0.0
  %5003 = vmatpush1.msra.mxu0 %v74
  %5004 = vmatprep.subr.mxu0 0.0
  %5005 = vmatpush1.msra.mxu0 %v75
  %5006 = vmatprep.subr.mxu0 0.0
  %5007 = vmatpush1.msra.mxu0 %v76
  %5008 = vmatprep.subr.mxu0 0.0
  %5009 = vmatpush1.msra.mxu0 0.0
  %5010 = vmatprep.subr.mxu0 0.0
  %5011 = vmatpush1.msra.mxu0 0.0
  %5012 = vmatprep.subr.mxu0 0.0
  %5013 = vmatpush1.msra.mxu0 0.0
  %5014 = vmatprep.subr.mxu0 0.0
  %5015 = vmatpush1.msra.mxu0 0.0
  %5016 = vmatprep.subr.mxu0 0.0
  %5017 = vmatpush1.msra.mxu0 0.0
  %5018 = vmatprep.subr.mxu0 0.0
  %5019 = vmatpush1.msra.mxu0 0.0
  %5020 = vmatprep.subr.mxu0 0.0
  %5021 = vmatpush1.msra.mxu0 0.0
  %5022 = vmatprep.subr.mxu0 0.0
  %5023 = vmatpush1.msra.mxu0 0.0
  %5024 = vmatprep.subr.mxu0 0.0
  %5025 = vmatpush1.msra.mxu0 0.0
  %5026 = vmatprep.subr.mxu0 0.0
  %5027 = vmatpush1.msra.mxu0 0.0
  %5028 = vmatprep.subr.mxu0 0.0
  %5029 = vmatpush1.msra.mxu0 0.0
  %5030 = vmatprep.subr.mxu0 0.0
  %5031 = vmatpush1.msra.mxu0 0.0
  %5032 = vmatprep.subr.mxu0 0.0
  %5033 = vmatpush1.msra.mxu0 0.0
  %5034 = vmatprep.subr.mxu0 0.0
  %5035 = vmatpush1.msra.mxu0 0.0
  %5036 = vmatprep.subr.mxu0 0.0
  %5037 = vmatpush1.msra.mxu0 0.0
  %5038 = vmatprep.subr.mxu0 0.0
  %5039 = vmatpush1.msra.mxu0 0.0
  %5040 = vmatprep.subr.mxu0 0.0
  %5041 = vmatpush1.msra.mxu0 0.0
  %5042 = vmatprep.subr.mxu0 0.0
  %5043 = vmatpush1.msra.mxu0 0.0
  %5044 = vmatprep.subr.mxu0 0.0
  %5045 = vmatpush1.msra.mxu0 0.0
  %5046 = vmatprep.subr.mxu0 0.0
  %5047 = vmatpush1.msra.mxu0 0.0
  %5048 = vmatprep.subr.mxu0 0.0
  %5049 = vmatpush1.msra.mxu0 0.0
  %5050 = vmatprep.subr.mxu0 0.0
  %5051 = vmatpush1.msra.mxu0 0.0
  %5052 = vmatprep.subr.mxu0 0.0
  %5053 = vmatpush1.msra.mxu0 0.0
  %5054 = vmatprep.subr.mxu0 0.0
  %5055 = vmatpush1.msra.mxu0 0.0
  %5056 = vmatprep.subr.mxu0 0.0
  %5057 = vmatpush1.msra.mxu0 0.0
  %5058 = vmatprep.subr.mxu0 0.0
  %5059 = vmatpush1.msra.mxu0 0.0
  %5060 = vmatprep.subr.mxu0 0.0
  %5061 = vmatpush1.msra.mxu0 0.0
  %5062 = vmatprep.subr.mxu0 0.0
  %5063 = vmatpush1.msra.mxu0 0.0
  %5064 = vmatprep.mubr.f32.mxu0 0.0
  %5065 = vmatmul.mubr.f32.gmra.mrb[0].mxu0 %v4998
  %v5066 = vpop.f32.mrb[0].mxu0
  %v5067 = vadd.f32 %v4994, %v5066
  %v5068 = vpop.f32.mrb[0].mxu0
  %5069 = vdwg.mxu0
  %v5070 = vadd.f32 %v5067, %v83
  %v5071 = vadd.f32 %v4778, %v5070
  %v5072 = vsel %vm94, %v5071, 0.0
  %5073 = vadd.xlane.f32.xlu0 %v5072
  %v5074 = vpop.xlane.xlu0 %5073
  %v5075 = vmul.f32 %v5074, %v1173
  %v5076 = vsub.f32 %v5071, %v5075
  %v5077 = vmul.f32 %v5076, %v5076
  %v5078 = vsel %vm94, %v5077, 0.0
  %5079 = vadd.xlane.f32.xlu0 %v5078
  %v5080 = vpop.xlane.xlu0 %5079
  %v5081 = vmul.f32 %v5080, %v1173
  %v5082 = vadd.f32 %v5081, 1e-05
  %v5083 = vrsqrt.pop %v5082
  %v5084 = vmul.f32 %v5076, %v5083
  %v5085 = vmul.f32 %v5084, %v86
  %v5086 = vadd.f32 %v5085, %v89
  %v5087 = vmul.f32 %v4762, 0.25
  %5089 = vrot.lane.b32.xlu0 %v5086, 32
  %v5090 = vpop.permute.xlu0 %5089
  %5093 = vrot.lane.b32.xlu0 %v2589, 64
  %v5094 = vpop.permute.xlu0 %5093
  %5097 = vrot.lane.b32.xlu0 %v5087, 72
  %v5098 = vpop.permute.xlu0 %5097
  %v5100 = vsel %vm94, %v2588, %v5090
  %vm5101 = vcmask 523264
  %v5102 = vsel %vm5101, %v5100, %v5094
  %vm5103 = vcmask 588800
  %v5104 = vsel %vm5103, %v5102, %v5098
  %vm5105 = vcmask 654336
  %v5106 = vsel %vm5105, %v5104, 0.0
  %5107 = vst [vmem:[%s2] sm:$0xff] %v5106
  // Predicated region
  $region10: #{decoder_layer_forward.1} parent=0 // pred_check
    _
  $region11: #{decoder_layer_forward.1} parent=0 // pred_check_branch
    %5109 = sbr.rel (0) target = $region13
  $region12: #{decoder_layer_forward.1} parent=0 // pred_region
    _
  $region13: #{decoder_layer_forward.1} parent=0 // pred_fallthru
    _
  // Predicated region
  $region14: #{decoder_layer_forward.1} parent=0 // pred_check
    _
  $region15: #{decoder_layer_forward.1} parent=0 // pred_check_branch
    %5111 = sbr.rel (0) target = $region17
  $region16: #{decoder_layer_forward.1} parent=0 // pred_region
    _
  $region17: #{decoder_layer_forward.1} parent=0 // pred_fallthru
    _

</llo_original>
